<compile_context>
chip_gen: v6e
topology: v6e:2x2x1
jax: 0.10.0
libtpu: 0.0.40
codegen_flags: <defaults>
</compile_context>

<pallas_src>
import jax
import jax.numpy as jnp
from jax.experimental import pallas as pl
from jax.experimental.pallas import tpu as pltpu

KSIZES = (5, 3, 1)          # low / mid / high frequency-kernel sizes
KMAX = max(KSIZES)
PAD = KMAX // 2             # unified wrapper-side zero padding along band freq
N_BANDS = len(KSIZES)


def _freq_conv_kernel(w_smem, b_smem, x_ref, o_ref):
    """One grid step == one time (W) tile, all three bands.

    w_smem : SMEM f32 (N_BANDS, Cout3*Cin*KMAX)  per-band taps (zero-pad layout)
    b_smem : SMEM f32 (N_BANDS, Cout3)
    x_ref  : VMEM (B, Cin, N_BANDS, Hb + 2*PAD, Wt)  wrapper-padded band input
    o_ref  : VMEM (B, N_BANDS*Cout3, Hb, Wt)         concatenated output chans
    """
    B, Cin, _, Hp, Wt = x_ref.shape
    Hb = Hp - 2 * PAD
    Cout3 = o_ref.shape[1] // N_BANDS

    for band, K in enumerate(KSIZES):                 # static unroll: 3 bands
        off = PAD - K // 2                            # this band's taps/rows
        # Accumulators initialized directly with the bias splat.
        accs = [jnp.full((B, Hb, Wt), b_smem[band, co], jnp.float32)
                for co in range(Cout3)]
        for ci in range(Cin):
            xcb = x_ref[:, ci, band, :, :].astype(jnp.float32)   # (B, Hp, Wt)
            # Hoist the K shifted frequency views once per (band, ci).
            taps = [xcb[:, off + k: off + k + Hb, :] for k in range(K)]
            for co in range(Cout3):
                base = (co * Cin + ci) * KMAX + off
                for k in range(K):
                    accs[co] = accs[co] + w_smem[band, base + k] * taps[k]
        for co in range(Cout3):
            o_ref[:, band * Cout3 + co, :, :] = accs[co].astype(o_ref.dtype)


def _pick_time_tile(W):
    """Lane-dense W tile; prefer >=2 tiles so a v7x megacore can split them."""
    if W % 128 == 0:
        for wt in (1024, 512, 256, 128):
            if W % wt == 0 and W // wt >= 2:
                return wt
    return W                                  # single full-extent tile


def freq_conv_block(x, w_packed, b_packed):
    """x: (B, Cin, H, W) with H divisible by 3.
       w_packed: (3, Cout3*Cin*KMAX), b_packed: (3, Cout3).
       Returns (B, 3*Cout3, H//3, W) == torch.cat([low, mid, high], dim=1)."""
    B, Cin, H, W = x.shape
    n_bands, Cout3 = b_packed.shape
    assert n_bands == N_BANDS and H % N_BANDS == 0
    Hb = H // N_BANDS
    Hp = Hb + 2 * PAD

    # Split freq into bands and zero-pad each band's freq axis ONCE in the
    # wrapper (PyTorch slices before the conv, so bands pad with zeros, not
    # with neighbouring-band rows).
    xb = x.reshape(B, Cin, N_BANDS, Hb, W)
    xp = jnp.pad(xb, ((0, 0), (0, 0), (0, 0), (PAD, PAD), (0, 0)))

    Wt = _pick_time_tile(W)
    grid = (W // Wt,)

    grid_spec = pltpu.PrefetchScalarGridSpec(
        num_scalar_prefetch=2,                       # taps + biases -> SMEM
        grid=grid,
        in_specs=[
            pl.BlockSpec((B, Cin, N_BANDS, Hp, Wt),
                         lambda i, w_s, b_s: (0, 0, 0, 0, i)),
        ],
        out_specs=pl.BlockSpec((B, N_BANDS * Cout3, Hb, Wt),
                               lambda i, w_s, b_s: (0, 0, 0, i)),
    )
    return pl.pallas_call(
        _freq_conv_kernel,
        out_shape=jax.ShapeDtypeStruct((B, N_BANDS * Cout3, Hb, W), x.dtype),
        grid_spec=grid_spec,
        compiler_params=pltpu.CompilerParams(
            dimension_semantics=("parallel",)),      # W tiles are independent
    )(w_packed, b_packed, xp)


# ----------------------- parameter setup (plain JAX glue) -----------------------

def init_params(key, in_channels, out_channels):
    """Deterministic init mimicking nn.Conv2d defaults (uniform +/-1/sqrt(fan_in))."""
    c3 = out_channels // 3
    keys = jax.random.split(key, 6)

    def u(k, shape, fan_in):
        bound = 1.0 / (fan_in ** 0.5)
        return jax.random.uniform(k, shape, jnp.float32, -bound, bound)

    return dict(
        low_w=u(keys[0], (c3, in_channels, 5, 1), in_channels * 5),
        low_b=u(keys[1], (c3,), in_channels * 5),
        mid_w=u(keys[2], (c3, in_channels, 3, 1), in_channels * 3),
        mid_b=u(keys[3], (c3,), in_channels * 3),
        high_w=u(keys[4], (c3, in_channels, 1, 1), in_channels * 1),
        high_b=u(keys[5], (c3,), in_channels * 1),
    )


def pack_params(p):
    """Embed the 5/3/1-tap kernels into a unified (3, Cout3, Cin, 5) tap table.
    (The kernel only ever reads each band's real taps, so the zeros are inert.)"""
    c3, cin = p["low_w"].shape[:2]
    w_all = jnp.zeros((3, c3, cin, KMAX), jnp.float32)
    w_all = w_all.at[0].set(p["low_w"][:, :, :, 0])               # taps 0..4
    w_all = w_all.at[1, :, :, 1:4].set(p["mid_w"][:, :, :, 0])    # taps 1..3
    w_all = w_all.at[2, :, :, 2].set(p["high_w"][:, :, 0, 0])     # tap 2
    b_all = jnp.stack([p["low_b"], p["mid_b"], p["high_b"]], axis=0)
    return w_all.reshape(3, c3 * cin * KMAX), b_all


def reference(x, p, low_bin, mid_bin):
    """Pure-JAX reference matching the PyTorch forward."""
    dn = ("NCHW", "OIHW", "NCHW")

    def conv(xs, w, b, pad_h):
        y = jax.lax.conv_general_dilated(
            xs, w, window_strides=(1, 1),
            padding=((pad_h, pad_h), (0, 0)),
            dimension_numbers=dn)
        return y + b[None, :, None, None]

    low = conv(x[:, :, :low_bin, :], p["low_w"], p["low_b"], 2)
    mid = conv(x[:, :, low_bin:mid_bin, :], p["mid_w"], p["mid_b"], 1)
    high = conv(x[:, :, mid_bin:, :], p["high_w"], p["high_b"], 0)
    return jnp.concatenate([low, mid, high], axis=1)


if __name__ == "__main__":
    key = jax.random.PRNGKey(0)
    B, Cin, H, W = 2, 4, 24, 128
    out_channels = 12
    # TODO(synk): low_bin / mid_bin are never defined in the PyTorch __init__;
    # torch.cat(dim=1) is only shape-valid if the three bands have equal height,
    # so the frequency axis is split evenly into thirds.
    low_bin, mid_bin = H // 3, 2 * H // 3

    kx, kp = jax.random.split(key)
    x = jax.random.normal(kx, (B, Cin, H, W), jnp.float32)
    params = init_params(kp, Cin, out_channels)
    w_packed, b_packed = pack_params(params)

    out = freq_conv_block(x, w_packed, b_packed)
    out = jax.block_until_ready(out)

    ref = reference(x, params, low_bin, mid_bin)
    assert out.shape == ref.shape == (B, out_channels, H // 3, W)
    max_err = float(jnp.max(jnp.abs(out - ref)))
    assert jnp.allclose(out, ref, atol=1e-4, rtol=1e-4), f"max abs err {max_err}"
    print("KERNEL_OK")
</pallas_src>

<mosaic_0001>
module attributes {stable_mosaic.version = 11 : i64} {
  func.func @_freq_conv_kernel(%arg0: i32, %arg1: memref<3x80xf32, #tpu.memory_space<smem>>, %arg2: memref<3x4xf32, #tpu.memory_space<smem>>, %arg3: memref<2x4x3x12x128xf32, #tpu.memory_space<vmem>>, %arg4: memref<2x12x8x128xf32, #tpu.memory_space<vmem>>) attributes {dimension_semantics = [#tpu.dimension_semantics<parallel>], iteration_bounds = array<i64: 1>, scalar_prefetch = 2 : i64, scratch_operands = 0 : i64, tpu.core_type = #tpu.core_type<tc>, window_params = [{transform_indices = @transform_0, window_bounds = array<i64: 2, 4, 3, 12, 128>}, {transform_indices = @transform_1, window_bounds = array<i64: 2, 12, 8, 128>}]} {
    %c0 = arith.constant 0 : index
    %c0_0 = arith.constant 0 : index
    %0 = memref.load %arg2[%c0, %c0_0] : memref<3x4xf32, #tpu.memory_space<smem>>
    %1 = vector.broadcast %0 : f32 to vector<2x8x128xf32>
    %c0_1 = arith.constant 0 : index
    %c1 = arith.constant 1 : index
    %2 = memref.load %arg2[%c0_1, %c1] : memref<3x4xf32, #tpu.memory_space<smem>>
    %3 = vector.broadcast %2 : f32 to vector<2x8x128xf32>
    %c0_2 = arith.constant 0 : index
    %c2 = arith.constant 2 : index
    %4 = memref.load %arg2[%c0_2, %c2] : memref<3x4xf32, #tpu.memory_space<smem>>
    %5 = vector.broadcast %4 : f32 to vector<2x8x128xf32>
    %c0_3 = arith.constant 0 : index
    %c3 = arith.constant 3 : index
    %6 = memref.load %arg2[%c0_3, %c3] : memref<3x4xf32, #tpu.memory_space<smem>>
    %7 = vector.broadcast %6 : f32 to vector<2x8x128xf32>
    %c0_4 = arith.constant 0 : index
    %c0_5 = arith.constant 0 : index
    %c0_6 = arith.constant 0 : index
    %c0_7 = arith.constant 0 : index
    %c0_8 = arith.constant 0 : index
    %8 = vector.load %arg3[%c0_4, %c0_5, %c0_6, %c0_7, %c0_8] : memref<2x4x3x12x128xf32, #tpu.memory_space<vmem>>, vector<2x1x1x12x128xf32>
    %9 = vector.shape_cast %8 : vector<2x1x1x12x128xf32> to vector<2x12x128xf32>
    %10 = vector.extract_strided_slice %9 {offsets = [0, 0, 0], sizes = [2, 8, 128], strides = [1, 1, 1]} : vector<2x12x128xf32> to vector<2x8x128xf32>
    %11 = vector.extract_strided_slice %9 {offsets = [0, 1, 0], sizes = [2, 8, 128], strides = [1, 1, 1]} : vector<2x12x128xf32> to vector<2x8x128xf32>
    %12 = vector.extract_strided_slice %9 {offsets = [0, 2, 0], sizes = [2, 8, 128], strides = [1, 1, 1]} : vector<2x12x128xf32> to vector<2x8x128xf32>
    %13 = vector.extract_strided_slice %9 {offsets = [0, 3, 0], sizes = [2, 8, 128], strides = [1, 1, 1]} : vector<2x12x128xf32> to vector<2x8x128xf32>
    %14 = vector.extract_strided_slice %9 {offsets = [0, 4, 0], sizes = [2, 8, 128], strides = [1, 1, 1]} : vector<2x12x128xf32> to vector<2x8x128xf32>
    %c0_9 = arith.constant 0 : index
    %c0_10 = arith.constant 0 : index
    %15 = memref.load %arg1[%c0_9, %c0_10] : memref<3x80xf32, #tpu.memory_space<smem>>
    %16 = vector.broadcast %15 : f32 to vector<2x8x128xf32>
    %17 = arith.mulf %16, %10 : vector<2x8x128xf32>
    %18 = arith.addf %1, %17 : vector<2x8x128xf32>
    %c0_11 = arith.constant 0 : index
    %c1_12 = arith.constant 1 : index
    %19 = memref.load %arg1[%c0_11, %c1_12] : memref<3x80xf32, #tpu.memory_space<smem>>
    %20 = vector.broadcast %19 : f32 to vector<2x8x128xf32>
    %21 = arith.mulf %20, %11 : vector<2x8x128xf32>
    %22 = arith.addf %18, %21 : vector<2x8x128xf32>
    %c0_13 = arith.constant 0 : index
    %c2_14 = arith.constant 2 : index
    %23 = memref.load %arg1[%c0_13, %c2_14] : memref<3x80xf32, #tpu.memory_space<smem>>
    %24 = vector.broadcast %23 : f32 to vector<2x8x128xf32>
    %25 = arith.mulf %24, %12 : vector<2x8x128xf32>
    %26 = arith.addf %22, %25 : vector<2x8x128xf32>
    %c0_15 = arith.constant 0 : index
    %c3_16 = arith.constant 3 : index
    %27 = memref.load %arg1[%c0_15, %c3_16] : memref<3x80xf32, #tpu.memory_space<smem>>
    %28 = vector.broadcast %27 : f32 to vector<2x8x128xf32>
    %29 = arith.mulf %28, %13 : vector<2x8x128xf32>
    %30 = arith.addf %26, %29 : vector<2x8x128xf32>
    %c0_17 = arith.constant 0 : index
    %c4 = arith.constant 4 : index
    %31 = memref.load %arg1[%c0_17, %c4] : memref<3x80xf32, #tpu.memory_space<smem>>
    %32 = vector.broadcast %31 : f32 to vector<2x8x128xf32>
    %33 = arith.mulf %32, %14 : vector<2x8x128xf32>
    %34 = arith.addf %30, %33 : vector<2x8x128xf32>
    %c0_18 = arith.constant 0 : index
    %c20 = arith.constant 20 : index
    %35 = memref.load %arg1[%c0_18, %c20] : memref<3x80xf32, #tpu.memory_space<smem>>
    %36 = vector.broadcast %35 : f32 to vector<2x8x128xf32>
    %37 = arith.mulf %36, %10 : vector<2x8x128xf32>
    %38 = arith.addf %3, %37 : vector<2x8x128xf32>
    %c0_19 = arith.constant 0 : index
    %c21 = arith.constant 21 : index
    %39 = memref.load %arg1[%c0_19, %c21] : memref<3x80xf32, #tpu.memory_space<smem>>
    %40 = vector.broadcast %39 : f32 to vector<2x8x128xf32>
    %41 = arith.mulf %40, %11 : vector<2x8x128xf32>
    %42 = arith.addf %38, %41 : vector<2x8x128xf32>
    %c0_20 = arith.constant 0 : index
    %c22 = arith.constant 22 : index
    %43 = memref.load %arg1[%c0_20, %c22] : memref<3x80xf32, #tpu.memory_space<smem>>
    %44 = vector.broadcast %43 : f32 to vector<2x8x128xf32>
    %45 = arith.mulf %44, %12 : vector<2x8x128xf32>
    %46 = arith.addf %42, %45 : vector<2x8x128xf32>
    %c0_21 = arith.constant 0 : index
    %c23 = arith.constant 23 : index
    %47 = memref.load %arg1[%c0_21, %c23] : memref<3x80xf32, #tpu.memory_space<smem>>
    %48 = vector.broadcast %47 : f32 to vector<2x8x128xf32>
    %49 = arith.mulf %48, %13 : vector<2x8x128xf32>
    %50 = arith.addf %46, %49 : vector<2x8x128xf32>
    %c0_22 = arith.constant 0 : index
    %c24 = arith.constant 24 : index
    %51 = memref.load %arg1[%c0_22, %c24] : memref<3x80xf32, #tpu.memory_space<smem>>
    %52 = vector.broadcast %51 : f32 to vector<2x8x128xf32>
    %53 = arith.mulf %52, %14 : vector<2x8x128xf32>
    %54 = arith.addf %50, %53 : vector<2x8x128xf32>
    %c0_23 = arith.constant 0 : index
    %c40 = arith.constant 40 : index
    %55 = memref.load %arg1[%c0_23, %c40] : memref<3x80xf32, #tpu.memory_space<smem>>
    %56 = vector.broadcast %55 : f32 to vector<2x8x128xf32>
    %57 = arith.mulf %56, %10 : vector<2x8x128xf32>
    %58 = arith.addf %5, %57 : vector<2x8x128xf32>
    %c0_24 = arith.constant 0 : index
    %c41 = arith.constant 41 : index
    %59 = memref.load %arg1[%c0_24, %c41] : memref<3x80xf32, #tpu.memory_space<smem>>
    %60 = vector.broadcast %59 : f32 to vector<2x8x128xf32>
    %61 = arith.mulf %60, %11 : vector<2x8x128xf32>
    %62 = arith.addf %58, %61 : vector<2x8x128xf32>
    %c0_25 = arith.constant 0 : index
    %c42 = arith.constant 42 : index
    %63 = memref.load %arg1[%c0_25, %c42] : memref<3x80xf32, #tpu.memory_space<smem>>
    %64 = vector.broadcast %63 : f32 to vector<2x8x128xf32>
    %65 = arith.mulf %64, %12 : vector<2x8x128xf32>
    %66 = arith.addf %62, %65 : vector<2x8x128xf32>
    %c0_26 = arith.constant 0 : index
    %c43 = arith.constant 43 : index
    %67 = memref.load %arg1[%c0_26, %c43] : memref<3x80xf32, #tpu.memory_space<smem>>
    %68 = vector.broadcast %67 : f32 to vector<2x8x128xf32>
    %69 = arith.mulf %68, %13 : vector<2x8x128xf32>
    %70 = arith.addf %66, %69 : vector<2x8x128xf32>
    %c0_27 = arith.constant 0 : index
    %c44 = arith.constant 44 : index
    %71 = memref.load %arg1[%c0_27, %c44] : memref<3x80xf32, #tpu.memory_space<smem>>
    %72 = vector.broadcast %71 : f32 to vector<2x8x128xf32>
    %73 = arith.mulf %72, %14 : vector<2x8x128xf32>
    %74 = arith.addf %70, %73 : vector<2x8x128xf32>
    %c0_28 = arith.constant 0 : index
    %c60 = arith.constant 60 : index
    %75 = memref.load %arg1[%c0_28, %c60] : memref<3x80xf32, #tpu.memory_space<smem>>
    %76 = vector.broadcast %75 : f32 to vector<2x8x128xf32>
    %77 = arith.mulf %76, %10 : vector<2x8x128xf32>
    %78 = arith.addf %7, %77 : vector<2x8x128xf32>
    %c0_29 = arith.constant 0 : index
    %c61 = arith.constant 61 : index
    %79 = memref.load %arg1[%c0_29, %c61] : memref<3x80xf32, #tpu.memory_space<smem>>
    %80 = vector.broadcast %79 : f32 to vector<2x8x128xf32>
    %81 = arith.mulf %80, %11 : vector<2x8x128xf32>
    %82 = arith.addf %78, %81 : vector<2x8x128xf32>
    %c0_30 = arith.constant 0 : index
    %c62 = arith.constant 62 : index
    %83 = memref.load %arg1[%c0_30, %c62] : memref<3x80xf32, #tpu.memory_space<smem>>
    %84 = vector.broadcast %83 : f32 to vector<2x8x128xf32>
    %85 = arith.mulf %84, %12 : vector<2x8x128xf32>
    %86 = arith.addf %82, %85 : vector<2x8x128xf32>
    %c0_31 = arith.constant 0 : index
    %c63 = arith.constant 63 : index
    %87 = memref.load %arg1[%c0_31, %c63] : memref<3x80xf32, #tpu.memory_space<smem>>
    %88 = vector.broadcast %87 : f32 to vector<2x8x128xf32>
    %89 = arith.mulf %88, %13 : vector<2x8x128xf32>
    %90 = arith.addf %86, %89 : vector<2x8x128xf32>
    %c0_32 = arith.constant 0 : index
    %c64 = arith.constant 64 : index
    %91 = memref.load %arg1[%c0_32, %c64] : memref<3x80xf32, #tpu.memory_space<smem>>
    %92 = vector.broadcast %91 : f32 to vector<2x8x128xf32>
    %93 = arith.mulf %92, %14 : vector<2x8x128xf32>
    %94 = arith.addf %90, %93 : vector<2x8x128xf32>
    %c0_33 = arith.constant 0 : index
    %c1_34 = arith.constant 1 : index
    %c0_35 = arith.constant 0 : index
    %c0_36 = arith.constant 0 : index
    %c0_37 = arith.constant 0 : index
    %95 = vector.load %arg3[%c0_33, %c1_34, %c0_35, %c0_36, %c0_37] : memref<2x4x3x12x128xf32, #tpu.memory_space<vmem>>, vector<2x1x1x12x128xf32>
    %96 = vector.shape_cast %95 : vector<2x1x1x12x128xf32> to vector<2x12x128xf32>
    %97 = vector.extract_strided_slice %96 {offsets = [0, 0, 0], sizes = [2, 8, 128], strides = [1, 1, 1]} : vector<2x12x128xf32> to vector<2x8x128xf32>
    %98 = vector.extract_strided_slice %96 {offsets = [0, 1, 0], sizes = [2, 8, 128], strides = [1, 1, 1]} : vector<2x12x128xf32> to vector<2x8x128xf32>
    %99 = vector.extract_strided_slice %96 {offsets = [0, 2, 0], sizes = [2, 8, 128], strides = [1, 1, 1]} : vector<2x12x128xf32> to vector<2x8x128xf32>
    %100 = vector.extract_strided_slice %96 {offsets = [0, 3, 0], sizes = [2, 8, 128], strides = [1, 1, 1]} : vector<2x12x128xf32> to vector<2x8x128xf32>
    %101 = vector.extract_strided_slice %96 {offsets = [0, 4, 0], sizes = [2, 8, 128], strides = [1, 1, 1]} : vector<2x12x128xf32> to vector<2x8x128xf32>
    %c0_38 = arith.constant 0 : index
    %c5 = arith.constant 5 : index
    %102 = memref.load %arg1[%c0_38, %c5] : memref<3x80xf32, #tpu.memory_space<smem>>
    %103 = vector.broadcast %102 : f32 to vector<2x8x128xf32>
    %104 = arith.mulf %103, %97 : vector<2x8x128xf32>
    %105 = arith.addf %34, %104 : vector<2x8x128xf32>
    %c0_39 = arith.constant 0 : index
    %c6 = arith.constant 6 : index
    %106 = memref.load %arg1[%c0_39, %c6] : memref<3x80xf32, #tpu.memory_space<smem>>
    %107 = vector.broadcast %106 : f32 to vector<2x8x128xf32>
    %108 = arith.mulf %107, %98 : vector<2x8x128xf32>
    %109 = arith.addf %105, %108 : vector<2x8x128xf32>
    %c0_40 = arith.constant 0 : index
    %c7 = arith.constant 7 : index
    %110 = memref.load %arg1[%c0_40, %c7] : memref<3x80xf32, #tpu.memory_space<smem>>
    %111 = vector.broadcast %110 : f32 to vector<2x8x128xf32>
    %112 = arith.mulf %111, %99 : vector<2x8x128xf32>
    %113 = arith.addf %109, %112 : vector<2x8x128xf32>
    %c0_41 = arith.constant 0 : index
    %c8 = arith.constant 8 : index
    %114 = memref.load %arg1[%c0_41, %c8] : memref<3x80xf32, #tpu.memory_space<smem>>
    %115 = vector.broadcast %114 : f32 to vector<2x8x128xf32>
    %116 = arith.mulf %115, %100 : vector<2x8x128xf32>
    %117 = arith.addf %113, %116 : vector<2x8x128xf32>
    %c0_42 = arith.constant 0 : index
    %c9 = arith.constant 9 : index
    %118 = memref.load %arg1[%c0_42, %c9] : memref<3x80xf32, #tpu.memory_space<smem>>
    %119 = vector.broadcast %118 : f32 to vector<2x8x128xf32>
    %120 = arith.mulf %119, %101 : vector<2x8x128xf32>
    %121 = arith.addf %117, %120 : vector<2x8x128xf32>
    %c0_43 = arith.constant 0 : index
    %c25 = arith.constant 25 : index
    %122 = memref.load %arg1[%c0_43, %c25] : memref<3x80xf32, #tpu.memory_space<smem>>
    %123 = vector.broadcast %122 : f32 to vector<2x8x128xf32>
    %124 = arith.mulf %123, %97 : vector<2x8x128xf32>
    %125 = arith.addf %54, %124 : vector<2x8x128xf32>
    %c0_44 = arith.constant 0 : index
    %c26 = arith.constant 26 : index
    %126 = memref.load %arg1[%c0_44, %c26] : memref<3x80xf32, #tpu.memory_space<smem>>
    %127 = vector.broadcast %126 : f32 to vector<2x8x128xf32>
    %128 = arith.mulf %127, %98 : vector<2x8x128xf32>
    %129 = arith.addf %125, %128 : vector<2x8x128xf32>
    %c0_45 = arith.constant 0 : index
    %c27 = arith.constant 27 : index
    %130 = memref.load %arg1[%c0_45, %c27] : memref<3x80xf32, #tpu.memory_space<smem>>
    %131 = vector.broadcast %130 : f32 to vector<2x8x128xf32>
    %132 = arith.mulf %131, %99 : vector<2x8x128xf32>
    %133 = arith.addf %129, %132 : vector<2x8x128xf32>
    %c0_46 = arith.constant 0 : index
    %c28 = arith.constant 28 : index
    %134 = memref.load %arg1[%c0_46, %c28] : memref<3x80xf32, #tpu.memory_space<smem>>
    %135 = vector.broadcast %134 : f32 to vector<2x8x128xf32>
    %136 = arith.mulf %135, %100 : vector<2x8x128xf32>
    %137 = arith.addf %133, %136 : vector<2x8x128xf32>
    %c0_47 = arith.constant 0 : index
    %c29 = arith.constant 29 : index
    %138 = memref.load %arg1[%c0_47, %c29] : memref<3x80xf32, #tpu.memory_space<smem>>
    %139 = vector.broadcast %138 : f32 to vector<2x8x128xf32>
    %140 = arith.mulf %139, %101 : vector<2x8x128xf32>
    %141 = arith.addf %137, %140 : vector<2x8x128xf32>
    %c0_48 = arith.constant 0 : index
    %c45 = arith.constant 45 : index
    %142 = memref.load %arg1[%c0_48, %c45] : memref<3x80xf32, #tpu.memory_space<smem>>
    %143 = vector.broadcast %142 : f32 to vector<2x8x128xf32>
    %144 = arith.mulf %143, %97 : vector<2x8x128xf32>
    %145 = arith.addf %74, %144 : vector<2x8x128xf32>
    %c0_49 = arith.constant 0 : index
    %c46 = arith.constant 46 : index
    %146 = memref.load %arg1[%c0_49, %c46] : memref<3x80xf32, #tpu.memory_space<smem>>
    %147 = vector.broadcast %146 : f32 to vector<2x8x128xf32>
    %148 = arith.mulf %147, %98 : vector<2x8x128xf32>
    %149 = arith.addf %145, %148 : vector<2x8x128xf32>
    %c0_50 = arith.constant 0 : index
    %c47 = arith.constant 47 : index
    %150 = memref.load %arg1[%c0_50, %c47] : memref<3x80xf32, #tpu.memory_space<smem>>
    %151 = vector.broadcast %150 : f32 to vector<2x8x128xf32>
    %152 = arith.mulf %151, %99 : vector<2x8x128xf32>
    %153 = arith.addf %149, %152 : vector<2x8x128xf32>
    %c0_51 = arith.constant 0 : index
    %c48 = arith.constant 48 : index
    %154 = memref.load %arg1[%c0_51, %c48] : memref<3x80xf32, #tpu.memory_space<smem>>
    %155 = vector.broadcast %154 : f32 to vector<2x8x128xf32>
    %156 = arith.mulf %155, %100 : vector<2x8x128xf32>
    %157 = arith.addf %153, %156 : vector<2x8x128xf32>
    %c0_52 = arith.constant 0 : index
    %c49 = arith.constant 49 : index
    %158 = memref.load %arg1[%c0_52, %c49] : memref<3x80xf32, #tpu.memory_space<smem>>
    %159 = vector.broadcast %158 : f32 to vector<2x8x128xf32>
    %160 = arith.mulf %159, %101 : vector<2x8x128xf32>
    %161 = arith.addf %157, %160 : vector<2x8x128xf32>
    %c0_53 = arith.constant 0 : index
    %c65 = arith.constant 65 : index
    %162 = memref.load %arg1[%c0_53, %c65] : memref<3x80xf32, #tpu.memory_space<smem>>
    %163 = vector.broadcast %162 : f32 to vector<2x8x128xf32>
    %164 = arith.mulf %163, %97 : vector<2x8x128xf32>
    %165 = arith.addf %94, %164 : vector<2x8x128xf32>
    %c0_54 = arith.constant 0 : index
    %c66 = arith.constant 66 : index
    %166 = memref.load %arg1[%c0_54, %c66] : memref<3x80xf32, #tpu.memory_space<smem>>
    %167 = vector.broadcast %166 : f32 to vector<2x8x128xf32>
    %168 = arith.mulf %167, %98 : vector<2x8x128xf32>
    %169 = arith.addf %165, %168 : vector<2x8x128xf32>
    %c0_55 = arith.constant 0 : index
    %c67 = arith.constant 67 : index
    %170 = memref.load %arg1[%c0_55, %c67] : memref<3x80xf32, #tpu.memory_space<smem>>
    %171 = vector.broadcast %170 : f32 to vector<2x8x128xf32>
    %172 = arith.mulf %171, %99 : vector<2x8x128xf32>
    %173 = arith.addf %169, %172 : vector<2x8x128xf32>
    %c0_56 = arith.constant 0 : index
    %c68 = arith.constant 68 : index
    %174 = memref.load %arg1[%c0_56, %c68] : memref<3x80xf32, #tpu.memory_space<smem>>
    %175 = vector.broadcast %174 : f32 to vector<2x8x128xf32>
    %176 = arith.mulf %175, %100 : vector<2x8x128xf32>
    %177 = arith.addf %173, %176 : vector<2x8x128xf32>
    %c0_57 = arith.constant 0 : index
    %c69 = arith.constant 69 : index
    %178 = memref.load %arg1[%c0_57, %c69] : memref<3x80xf32, #tpu.memory_space<smem>>
    %179 = vector.broadcast %178 : f32 to vector<2x8x128xf32>
    %180 = arith.mulf %179, %101 : vector<2x8x128xf32>
    %181 = arith.addf %177, %180 : vector<2x8x128xf32>
    %c0_58 = arith.constant 0 : index
    %c2_59 = arith.constant 2 : index
    %c0_60 = arith.constant 0 : index
    %c0_61 = arith.constant 0 : index
    %c0_62 = arith.constant 0 : index
    %182 = vector.load %arg3[%c0_58, %c2_59, %c0_60, %c0_61, %c0_62] : memref<2x4x3x12x128xf32, #tpu.memory_space<vmem>>, vector<2x1x1x12x128xf32>
    %183 = vector.shape_cast %182 : vector<2x1x1x12x128xf32> to vector<2x12x128xf32>
    %184 = vector.extract_strided_slice %183 {offsets = [0, 0, 0], sizes = [2, 8, 128], strides = [1, 1, 1]} : vector<2x12x128xf32> to vector<2x8x128xf32>
    %185 = vector.extract_strided_slice %183 {offsets = [0, 1, 0], sizes = [2, 8, 128], strides = [1, 1, 1]} : vector<2x12x128xf32> to vector<2x8x128xf32>
    %186 = vector.extract_strided_slice %183 {offsets = [0, 2, 0], sizes = [2, 8, 128], strides = [1, 1, 1]} : vector<2x12x128xf32> to vector<2x8x128xf32>
    %187 = vector.extract_strided_slice %183 {offsets = [0, 3, 0], sizes = [2, 8, 128], strides = [1, 1, 1]} : vector<2x12x128xf32> to vector<2x8x128xf32>
    %188 = vector.extract_strided_slice %183 {offsets = [0, 4, 0], sizes = [2, 8, 128], strides = [1, 1, 1]} : vector<2x12x128xf32> to vector<2x8x128xf32>
    %c0_63 = arith.constant 0 : index
    %c10 = arith.constant 10 : index
    %189 = memref.load %arg1[%c0_63, %c10] : memref<3x80xf32, #tpu.memory_space<smem>>
    %190 = vector.broadcast %189 : f32 to vector<2x8x128xf32>
    %191 = arith.mulf %190, %184 : vector<2x8x128xf32>
    %192 = arith.addf %121, %191 : vector<2x8x128xf32>
    %c0_64 = arith.constant 0 : index
    %c11 = arith.constant 11 : index
    %193 = memref.load %arg1[%c0_64, %c11] : memref<3x80xf32, #tpu.memory_space<smem>>
    %194 = vector.broadcast %193 : f32 to vector<2x8x128xf32>
    %195 = arith.mulf %194, %185 : vector<2x8x128xf32>
    %196 = arith.addf %192, %195 : vector<2x8x128xf32>
    %c0_65 = arith.constant 0 : index
    %c12 = arith.constant 12 : index
    %197 = memref.load %arg1[%c0_65, %c12] : memref<3x80xf32, #tpu.memory_space<smem>>
    %198 = vector.broadcast %197 : f32 to vector<2x8x128xf32>
    %199 = arith.mulf %198, %186 : vector<2x8x128xf32>
    %200 = arith.addf %196, %199 : vector<2x8x128xf32>
    %c0_66 = arith.constant 0 : index
    %c13 = arith.constant 13 : index
    %201 = memref.load %arg1[%c0_66, %c13] : memref<3x80xf32, #tpu.memory_space<smem>>
    %202 = vector.broadcast %201 : f32 to vector<2x8x128xf32>
    %203 = arith.mulf %202, %187 : vector<2x8x128xf32>
    %204 = arith.addf %200, %203 : vector<2x8x128xf32>
    %c0_67 = arith.constant 0 : index
    %c14 = arith.constant 14 : index
    %205 = memref.load %arg1[%c0_67, %c14] : memref<3x80xf32, #tpu.memory_space<smem>>
    %206 = vector.broadcast %205 : f32 to vector<2x8x128xf32>
    %207 = arith.mulf %206, %188 : vector<2x8x128xf32>
    %208 = arith.addf %204, %207 : vector<2x8x128xf32>
    %c0_68 = arith.constant 0 : index
    %c30 = arith.constant 30 : index
    %209 = memref.load %arg1[%c0_68, %c30] : memref<3x80xf32, #tpu.memory_space<smem>>
    %210 = vector.broadcast %209 : f32 to vector<2x8x128xf32>
    %211 = arith.mulf %210, %184 : vector<2x8x128xf32>
    %212 = arith.addf %141, %211 : vector<2x8x128xf32>
    %c0_69 = arith.constant 0 : index
    %c31 = arith.constant 31 : index
    %213 = memref.load %arg1[%c0_69, %c31] : memref<3x80xf32, #tpu.memory_space<smem>>
    %214 = vector.broadcast %213 : f32 to vector<2x8x128xf32>
    %215 = arith.mulf %214, %185 : vector<2x8x128xf32>
    %216 = arith.addf %212, %215 : vector<2x8x128xf32>
    %c0_70 = arith.constant 0 : index
    %c32 = arith.constant 32 : index
    %217 = memref.load %arg1[%c0_70, %c32] : memref<3x80xf32, #tpu.memory_space<smem>>
    %218 = vector.broadcast %217 : f32 to vector<2x8x128xf32>
    %219 = arith.mulf %218, %186 : vector<2x8x128xf32>
    %220 = arith.addf %216, %219 : vector<2x8x128xf32>
    %c0_71 = arith.constant 0 : index
    %c33 = arith.constant 33 : index
    %221 = memref.load %arg1[%c0_71, %c33] : memref<3x80xf32, #tpu.memory_space<smem>>
    %222 = vector.broadcast %221 : f32 to vector<2x8x128xf32>
    %223 = arith.mulf %222, %187 : vector<2x8x128xf32>
    %224 = arith.addf %220, %223 : vector<2x8x128xf32>
    %c0_72 = arith.constant 0 : index
    %c34 = arith.constant 34 : index
    %225 = memref.load %arg1[%c0_72, %c34] : memref<3x80xf32, #tpu.memory_space<smem>>
    %226 = vector.broadcast %225 : f32 to vector<2x8x128xf32>
    %227 = arith.mulf %226, %188 : vector<2x8x128xf32>
    %228 = arith.addf %224, %227 : vector<2x8x128xf32>
    %c0_73 = arith.constant 0 : index
    %c50 = arith.constant 50 : index
    %229 = memref.load %arg1[%c0_73, %c50] : memref<3x80xf32, #tpu.memory_space<smem>>
    %230 = vector.broadcast %229 : f32 to vector<2x8x128xf32>
    %231 = arith.mulf %230, %184 : vector<2x8x128xf32>
    %232 = arith.addf %161, %231 : vector<2x8x128xf32>
    %c0_74 = arith.constant 0 : index
    %c51 = arith.constant 51 : index
    %233 = memref.load %arg1[%c0_74, %c51] : memref<3x80xf32, #tpu.memory_space<smem>>
    %234 = vector.broadcast %233 : f32 to vector<2x8x128xf32>
    %235 = arith.mulf %234, %185 : vector<2x8x128xf32>
    %236 = arith.addf %232, %235 : vector<2x8x128xf32>
    %c0_75 = arith.constant 0 : index
    %c52 = arith.constant 52 : index
    %237 = memref.load %arg1[%c0_75, %c52] : memref<3x80xf32, #tpu.memory_space<smem>>
    %238 = vector.broadcast %237 : f32 to vector<2x8x128xf32>
    %239 = arith.mulf %238, %186 : vector<2x8x128xf32>
    %240 = arith.addf %236, %239 : vector<2x8x128xf32>
    %c0_76 = arith.constant 0 : index
    %c53 = arith.constant 53 : index
    %241 = memref.load %arg1[%c0_76, %c53] : memref<3x80xf32, #tpu.memory_space<smem>>
    %242 = vector.broadcast %241 : f32 to vector<2x8x128xf32>
    %243 = arith.mulf %242, %187 : vector<2x8x128xf32>
    %244 = arith.addf %240, %243 : vector<2x8x128xf32>
    %c0_77 = arith.constant 0 : index
    %c54 = arith.constant 54 : index
    %245 = memref.load %arg1[%c0_77, %c54] : memref<3x80xf32, #tpu.memory_space<smem>>
    %246 = vector.broadcast %245 : f32 to vector<2x8x128xf32>
    %247 = arith.mulf %246, %188 : vector<2x8x128xf32>
    %248 = arith.addf %244, %247 : vector<2x8x128xf32>
    %c0_78 = arith.constant 0 : index
    %c70 = arith.constant 70 : index
    %249 = memref.load %arg1[%c0_78, %c70] : memref<3x80xf32, #tpu.memory_space<smem>>
    %250 = vector.broadcast %249 : f32 to vector<2x8x128xf32>
    %251 = arith.mulf %250, %184 : vector<2x8x128xf32>
    %252 = arith.addf %181, %251 : vector<2x8x128xf32>
    %c0_79 = arith.constant 0 : index
    %c71 = arith.constant 71 : index
    %253 = memref.load %arg1[%c0_79, %c71] : memref<3x80xf32, #tpu.memory_space<smem>>
    %254 = vector.broadcast %253 : f32 to vector<2x8x128xf32>
    %255 = arith.mulf %254, %185 : vector<2x8x128xf32>
    %256 = arith.addf %252, %255 : vector<2x8x128xf32>
    %c0_80 = arith.constant 0 : index
    %c72 = arith.constant 72 : index
    %257 = memref.load %arg1[%c0_80, %c72] : memref<3x80xf32, #tpu.memory_space<smem>>
    %258 = vector.broadcast %257 : f32 to vector<2x8x128xf32>
    %259 = arith.mulf %258, %186 : vector<2x8x128xf32>
    %260 = arith.addf %256, %259 : vector<2x8x128xf32>
    %c0_81 = arith.constant 0 : index
    %c73 = arith.constant 73 : index
    %261 = memref.load %arg1[%c0_81, %c73] : memref<3x80xf32, #tpu.memory_space<smem>>
    %262 = vector.broadcast %261 : f32 to vector<2x8x128xf32>
    %263 = arith.mulf %262, %187 : vector<2x8x128xf32>
    %264 = arith.addf %260, %263 : vector<2x8x128xf32>
    %c0_82 = arith.constant 0 : index
    %c74 = arith.constant 74 : index
    %265 = memref.load %arg1[%c0_82, %c74] : memref<3x80xf32, #tpu.memory_space<smem>>
    %266 = vector.broadcast %265 : f32 to vector<2x8x128xf32>
    %267 = arith.mulf %266, %188 : vector<2x8x128xf32>
    %268 = arith.addf %264, %267 : vector<2x8x128xf32>
    %c0_83 = arith.constant 0 : index
    %c3_84 = arith.constant 3 : index
    %c0_85 = arith.constant 0 : index
    %c0_86 = arith.constant 0 : index
    %c0_87 = arith.constant 0 : index
    %269 = vector.load %arg3[%c0_83, %c3_84, %c0_85, %c0_86, %c0_87] : memref<2x4x3x12x128xf32, #tpu.memory_space<vmem>>, vector<2x1x1x12x128xf32>
    %270 = vector.shape_cast %269 : vector<2x1x1x12x128xf32> to vector<2x12x128xf32>
    %271 = vector.extract_strided_slice %270 {offsets = [0, 0, 0], sizes = [2, 8, 128], strides = [1, 1, 1]} : vector<2x12x128xf32> to vector<2x8x128xf32>
    %272 = vector.extract_strided_slice %270 {offsets = [0, 1, 0], sizes = [2, 8, 128], strides = [1, 1, 1]} : vector<2x12x128xf32> to vector<2x8x128xf32>
    %273 = vector.extract_strided_slice %270 {offsets = [0, 2, 0], sizes = [2, 8, 128], strides = [1, 1, 1]} : vector<2x12x128xf32> to vector<2x8x128xf32>
    %274 = vector.extract_strided_slice %270 {offsets = [0, 3, 0], sizes = [2, 8, 128], strides = [1, 1, 1]} : vector<2x12x128xf32> to vector<2x8x128xf32>
    %275 = vector.extract_strided_slice %270 {offsets = [0, 4, 0], sizes = [2, 8, 128], strides = [1, 1, 1]} : vector<2x12x128xf32> to vector<2x8x128xf32>
    %c0_88 = arith.constant 0 : index
    %c15 = arith.constant 15 : index
    %276 = memref.load %arg1[%c0_88, %c15] : memref<3x80xf32, #tpu.memory_space<smem>>
    %277 = vector.broadcast %276 : f32 to vector<2x8x128xf32>
    %278 = arith.mulf %277, %271 : vector<2x8x128xf32>
    %279 = arith.addf %208, %278 : vector<2x8x128xf32>
    %c0_89 = arith.constant 0 : index
    %c16 = arith.constant 16 : index
    %280 = memref.load %arg1[%c0_89, %c16] : memref<3x80xf32, #tpu.memory_space<smem>>
    %281 = vector.broadcast %280 : f32 to vector<2x8x128xf32>
    %282 = arith.mulf %281, %272 : vector<2x8x128xf32>
    %283 = arith.addf %279, %282 : vector<2x8x128xf32>
    %c0_90 = arith.constant 0 : index
    %c17 = arith.constant 17 : index
    %284 = memref.load %arg1[%c0_90, %c17] : memref<3x80xf32, #tpu.memory_space<smem>>
    %285 = vector.broadcast %284 : f32 to vector<2x8x128xf32>
    %286 = arith.mulf %285, %273 : vector<2x8x128xf32>
    %287 = arith.addf %283, %286 : vector<2x8x128xf32>
    %c0_91 = arith.constant 0 : index
    %c18 = arith.constant 18 : index
    %288 = memref.load %arg1[%c0_91, %c18] : memref<3x80xf32, #tpu.memory_space<smem>>
    %289 = vector.broadcast %288 : f32 to vector<2x8x128xf32>
    %290 = arith.mulf %289, %274 : vector<2x8x128xf32>
    %291 = arith.addf %287, %290 : vector<2x8x128xf32>
    %c0_92 = arith.constant 0 : index
    %c19 = arith.constant 19 : index
    %292 = memref.load %arg1[%c0_92, %c19] : memref<3x80xf32, #tpu.memory_space<smem>>
    %293 = vector.broadcast %292 : f32 to vector<2x8x128xf32>
    %294 = arith.mulf %293, %275 : vector<2x8x128xf32>
    %295 = arith.addf %291, %294 : vector<2x8x128xf32>
    %c0_93 = arith.constant 0 : index
    %c35 = arith.constant 35 : index
    %296 = memref.load %arg1[%c0_93, %c35] : memref<3x80xf32, #tpu.memory_space<smem>>
    %297 = vector.broadcast %296 : f32 to vector<2x8x128xf32>
    %298 = arith.mulf %297, %271 : vector<2x8x128xf32>
    %299 = arith.addf %228, %298 : vector<2x8x128xf32>
    %c0_94 = arith.constant 0 : index
    %c36 = arith.constant 36 : index
    %300 = memref.load %arg1[%c0_94, %c36] : memref<3x80xf32, #tpu.memory_space<smem>>
    %301 = vector.broadcast %300 : f32 to vector<2x8x128xf32>
    %302 = arith.mulf %301, %272 : vector<2x8x128xf32>
    %303 = arith.addf %299, %302 : vector<2x8x128xf32>
    %c0_95 = arith.constant 0 : index
    %c37 = arith.constant 37 : index
    %304 = memref.load %arg1[%c0_95, %c37] : memref<3x80xf32, #tpu.memory_space<smem>>
    %305 = vector.broadcast %304 : f32 to vector<2x8x128xf32>
    %306 = arith.mulf %305, %273 : vector<2x8x128xf32>
    %307 = arith.addf %303, %306 : vector<2x8x128xf32>
    %c0_96 = arith.constant 0 : index
    %c38 = arith.constant 38 : index
    %308 = memref.load %arg1[%c0_96, %c38] : memref<3x80xf32, #tpu.memory_space<smem>>
    %309 = vector.broadcast %308 : f32 to vector<2x8x128xf32>
    %310 = arith.mulf %309, %274 : vector<2x8x128xf32>
    %311 = arith.addf %307, %310 : vector<2x8x128xf32>
    %c0_97 = arith.constant 0 : index
    %c39 = arith.constant 39 : index
    %312 = memref.load %arg1[%c0_97, %c39] : memref<3x80xf32, #tpu.memory_space<smem>>
    %313 = vector.broadcast %312 : f32 to vector<2x8x128xf32>
    %314 = arith.mulf %313, %275 : vector<2x8x128xf32>
    %315 = arith.addf %311, %314 : vector<2x8x128xf32>
    %c0_98 = arith.constant 0 : index
    %c55 = arith.constant 55 : index
    %316 = memref.load %arg1[%c0_98, %c55] : memref<3x80xf32, #tpu.memory_space<smem>>
    %317 = vector.broadcast %316 : f32 to vector<2x8x128xf32>
    %318 = arith.mulf %317, %271 : vector<2x8x128xf32>
    %319 = arith.addf %248, %318 : vector<2x8x128xf32>
    %c0_99 = arith.constant 0 : index
    %c56 = arith.constant 56 : index
    %320 = memref.load %arg1[%c0_99, %c56] : memref<3x80xf32, #tpu.memory_space<smem>>
    %321 = vector.broadcast %320 : f32 to vector<2x8x128xf32>
    %322 = arith.mulf %321, %272 : vector<2x8x128xf32>
    %323 = arith.addf %319, %322 : vector<2x8x128xf32>
    %c0_100 = arith.constant 0 : index
    %c57 = arith.constant 57 : index
    %324 = memref.load %arg1[%c0_100, %c57] : memref<3x80xf32, #tpu.memory_space<smem>>
    %325 = vector.broadcast %324 : f32 to vector<2x8x128xf32>
    %326 = arith.mulf %325, %273 : vector<2x8x128xf32>
    %327 = arith.addf %323, %326 : vector<2x8x128xf32>
    %c0_101 = arith.constant 0 : index
    %c58 = arith.constant 58 : index
    %328 = memref.load %arg1[%c0_101, %c58] : memref<3x80xf32, #tpu.memory_space<smem>>
    %329 = vector.broadcast %328 : f32 to vector<2x8x128xf32>
    %330 = arith.mulf %329, %274 : vector<2x8x128xf32>
    %331 = arith.addf %327, %330 : vector<2x8x128xf32>
    %c0_102 = arith.constant 0 : index
    %c59 = arith.constant 59 : index
    %332 = memref.load %arg1[%c0_102, %c59] : memref<3x80xf32, #tpu.memory_space<smem>>
    %333 = vector.broadcast %332 : f32 to vector<2x8x128xf32>
    %334 = arith.mulf %333, %275 : vector<2x8x128xf32>
    %335 = arith.addf %331, %334 : vector<2x8x128xf32>
    %c0_103 = arith.constant 0 : index
    %c75 = arith.constant 75 : index
    %336 = memref.load %arg1[%c0_103, %c75] : memref<3x80xf32, #tpu.memory_space<smem>>
    %337 = vector.broadcast %336 : f32 to vector<2x8x128xf32>
    %338 = arith.mulf %337, %271 : vector<2x8x128xf32>
    %339 = arith.addf %268, %338 : vector<2x8x128xf32>
    %c0_104 = arith.constant 0 : index
    %c76 = arith.constant 76 : index
    %340 = memref.load %arg1[%c0_104, %c76] : memref<3x80xf32, #tpu.memory_space<smem>>
    %341 = vector.broadcast %340 : f32 to vector<2x8x128xf32>
    %342 = arith.mulf %341, %272 : vector<2x8x128xf32>
    %343 = arith.addf %339, %342 : vector<2x8x128xf32>
    %c0_105 = arith.constant 0 : index
    %c77 = arith.constant 77 : index
    %344 = memref.load %arg1[%c0_105, %c77] : memref<3x80xf32, #tpu.memory_space<smem>>
    %345 = vector.broadcast %344 : f32 to vector<2x8x128xf32>
    %346 = arith.mulf %345, %273 : vector<2x8x128xf32>
    %347 = arith.addf %343, %346 : vector<2x8x128xf32>
    %c0_106 = arith.constant 0 : index
    %c78 = arith.constant 78 : index
    %348 = memref.load %arg1[%c0_106, %c78] : memref<3x80xf32, #tpu.memory_space<smem>>
    %349 = vector.broadcast %348 : f32 to vector<2x8x128xf32>
    %350 = arith.mulf %349, %274 : vector<2x8x128xf32>
    %351 = arith.addf %347, %350 : vector<2x8x128xf32>
    %c0_107 = arith.constant 0 : index
    %c79 = arith.constant 79 : index
    %352 = memref.load %arg1[%c0_107, %c79] : memref<3x80xf32, #tpu.memory_space<smem>>
    %353 = vector.broadcast %352 : f32 to vector<2x8x128xf32>
    %354 = arith.mulf %353, %275 : vector<2x8x128xf32>
    %355 = arith.addf %351, %354 : vector<2x8x128xf32>
    %c0_108 = arith.constant 0 : index
    %c0_109 = arith.constant 0 : index
    %c0_110 = arith.constant 0 : index
    %c0_111 = arith.constant 0 : index
    %356 = vector.load %arg4[%c0_108, %c0_109, %c0_110, %c0_111] : memref<2x12x8x128xf32, #tpu.memory_space<vmem>>, vector<2x1x8x128xf32>
    %357 = vector.shape_cast %356 : vector<2x1x8x128xf32> to vector<2x8x128xf32>
    %358 = vector.shape_cast %295 : vector<2x8x128xf32> to vector<2x1x8x128xf32>
    tpu.vector_store %arg4[%c0_108, %c0_109, %c0_110, %c0_111], %358 {strides = array<i32>} : memref<2x12x8x128xf32, #tpu.memory_space<vmem>>, vector<2x1x8x128xf32>,
    %c0_112 = arith.constant 0 : index
    %c1_113 = arith.constant 1 : index
    %c0_114 = arith.constant 0 : index
    %c0_115 = arith.constant 0 : index
    %359 = vector.load %arg4[%c0_112, %c1_113, %c0_114, %c0_115] : memref<2x12x8x128xf32, #tpu.memory_space<vmem>>, vector<2x1x8x128xf32>
    %360 = vector.shape_cast %359 : vector<2x1x8x128xf32> to vector<2x8x128xf32>
    %361 = vector.shape_cast %315 : vector<2x8x128xf32> to vector<2x1x8x128xf32>
    tpu.vector_store %arg4[%c0_112, %c1_113, %c0_114, %c0_115], %361 {strides = array<i32>} : memref<2x12x8x128xf32, #tpu.memory_space<vmem>>, vector<2x1x8x128xf32>,
    %c0_116 = arith.constant 0 : index
    %c2_117 = arith.constant 2 : index
    %c0_118 = arith.constant 0 : index
    %c0_119 = arith.constant 0 : index
    %362 = vector.load %arg4[%c0_116, %c2_117, %c0_118, %c0_119] : memref<2x12x8x128xf32, #tpu.memory_space<vmem>>, vector<2x1x8x128xf32>
    %363 = vector.shape_cast %362 : vector<2x1x8x128xf32> to vector<2x8x128xf32>
    %364 = vector.shape_cast %335 : vector<2x8x128xf32> to vector<2x1x8x128xf32>
    tpu.vector_store %arg4[%c0_116, %c2_117, %c0_118, %c0_119], %364 {strides = array<i32>} : memref<2x12x8x128xf32, #tpu.memory_space<vmem>>, vector<2x1x8x128xf32>,
    %c0_120 = arith.constant 0 : index
    %c3_121 = arith.constant 3 : index
    %c0_122 = arith.constant 0 : index
    %c0_123 = arith.constant 0 : index
    %365 = vector.load %arg4[%c0_120, %c3_121, %c0_122, %c0_123] : memref<2x12x8x128xf32, #tpu.memory_space<vmem>>, vector<2x1x8x128xf32>
    %366 = vector.shape_cast %365 : vector<2x1x8x128xf32> to vector<2x8x128xf32>
    %367 = vector.shape_cast %355 : vector<2x8x128xf32> to vector<2x1x8x128xf32>
    tpu.vector_store %arg4[%c0_120, %c3_121, %c0_122, %c0_123], %367 {strides = array<i32>} : memref<2x12x8x128xf32, #tpu.memory_space<vmem>>, vector<2x1x8x128xf32>,
    %c1_124 = arith.constant 1 : index
    %c0_125 = arith.constant 0 : index
    %368 = memref.load %arg2[%c1_124, %c0_125] : memref<3x4xf32, #tpu.memory_space<smem>>
    %369 = vector.broadcast %368 : f32 to vector<2x8x128xf32>
    %c1_126 = arith.constant 1 : index
    %c1_127 = arith.constant 1 : index
    %370 = memref.load %arg2[%c1_126, %c1_127] : memref<3x4xf32, #tpu.memory_space<smem>>
    %371 = vector.broadcast %370 : f32 to vector<2x8x128xf32>
    %c1_128 = arith.constant 1 : index
    %c2_129 = arith.constant 2 : index
    %372 = memref.load %arg2[%c1_128, %c2_129] : memref<3x4xf32, #tpu.memory_space<smem>>
    %373 = vector.broadcast %372 : f32 to vector<2x8x128xf32>
    %c1_130 = arith.constant 1 : index
    %c3_131 = arith.constant 3 : index
    %374 = memref.load %arg2[%c1_130, %c3_131] : memref<3x4xf32, #tpu.memory_space<smem>>
    %375 = vector.broadcast %374 : f32 to vector<2x8x128xf32>
    %c0_132 = arith.constant 0 : index
    %c0_133 = arith.constant 0 : index
    %c1_134 = arith.constant 1 : index
    %c0_135 = arith.constant 0 : index
    %c0_136 = arith.constant 0 : index
    %376 = vector.load %arg3[%c0_132, %c0_133, %c1_134, %c0_135, %c0_136] : memref<2x4x3x12x128xf32, #tpu.memory_space<vmem>>, vector<2x1x1x12x128xf32>
    %377 = vector.shape_cast %376 : vector<2x1x1x12x128xf32> to vector<2x12x128xf32>
    %378 = vector.extract_strided_slice %377 {offsets = [0, 1, 0], sizes = [2, 8, 128], strides = [1, 1, 1]} : vector<2x12x128xf32> to vector<2x8x128xf32>
    %379 = vector.extract_strided_slice %377 {offsets = [0, 2, 0], sizes = [2, 8, 128], strides = [1, 1, 1]} : vector<2x12x128xf32> to vector<2x8x128xf32>
    %380 = vector.extract_strided_slice %377 {offsets = [0, 3, 0], sizes = [2, 8, 128], strides = [1, 1, 1]} : vector<2x12x128xf32> to vector<2x8x128xf32>
    %c1_137 = arith.constant 1 : index
    %c1_138 = arith.constant 1 : index
    %381 = memref.load %arg1[%c1_137, %c1_138] : memref<3x80xf32, #tpu.memory_space<smem>>
    %382 = vector.broadcast %381 : f32 to vector<2x8x128xf32>
    %383 = arith.mulf %382, %378 : vector<2x8x128xf32>
    %384 = arith.addf %369, %383 : vector<2x8x128xf32>
    %c1_139 = arith.constant 1 : index
    %c2_140 = arith.constant 2 : index
    %385 = memref.load %arg1[%c1_139, %c2_140] : memref<3x80xf32, #tpu.memory_space<smem>>
    %386 = vector.broadcast %385 : f32 to vector<2x8x128xf32>
    %387 = arith.mulf %386, %379 : vector<2x8x128xf32>
    %388 = arith.addf %384, %387 : vector<2x8x128xf32>
    %c1_141 = arith.constant 1 : index
    %c3_142 = arith.constant 3 : index
    %389 = memref.load %arg1[%c1_141, %c3_142] : memref<3x80xf32, #tpu.memory_space<smem>>
    %390 = vector.broadcast %389 : f32 to vector<2x8x128xf32>
    %391 = arith.mulf %390, %380 : vector<2x8x128xf32>
    %392 = arith.addf %388, %391 : vector<2x8x128xf32>
    %c1_143 = arith.constant 1 : index
    %c21_144 = arith.constant 21 : index
    %393 = memref.load %arg1[%c1_143, %c21_144] : memref<3x80xf32, #tpu.memory_space<smem>>
    %394 = vector.broadcast %393 : f32 to vector<2x8x128xf32>
    %395 = arith.mulf %394, %378 : vector<2x8x128xf32>
    %396 = arith.addf %371, %395 : vector<2x8x128xf32>
    %c1_145 = arith.constant 1 : index
    %c22_146 = arith.constant 22 : index
    %397 = memref.load %arg1[%c1_145, %c22_146] : memref<3x80xf32, #tpu.memory_space<smem>>
    %398 = vector.broadcast %397 : f32 to vector<2x8x128xf32>
    %399 = arith.mulf %398, %379 : vector<2x8x128xf32>
    %400 = arith.addf %396, %399 : vector<2x8x128xf32>
    %c1_147 = arith.constant 1 : index
    %c23_148 = arith.constant 23 : index
    %401 = memref.load %arg1[%c1_147, %c23_148] : memref<3x80xf32, #tpu.memory_space<smem>>
    %402 = vector.broadcast %401 : f32 to vector<2x8x128xf32>
    %403 = arith.mulf %402, %380 : vector<2x8x128xf32>
    %404 = arith.addf %400, %403 : vector<2x8x128xf32>
    %c1_149 = arith.constant 1 : index
    %c41_150 = arith.constant 41 : index
    %405 = memref.load %arg1[%c1_149, %c41_150] : memref<3x80xf32, #tpu.memory_space<smem>>
    %406 = vector.broadcast %405 : f32 to vector<2x8x128xf32>
    %407 = arith.mulf %406, %378 : vector<2x8x128xf32>
    %408 = arith.addf %373, %407 : vector<2x8x128xf32>
    %c1_151 = arith.constant 1 : index
    %c42_152 = arith.constant 42 : index
    %409 = memref.load %arg1[%c1_151, %c42_152] : memref<3x80xf32, #tpu.memory_space<smem>>
    %410 = vector.broadcast %409 : f32 to vector<2x8x128xf32>
    %411 = arith.mulf %410, %379 : vector<2x8x128xf32>
    %412 = arith.addf %408, %411 : vector<2x8x128xf32>
    %c1_153 = arith.constant 1 : index
    %c43_154 = arith.constant 43 : index
    %413 = memref.load %arg1[%c1_153, %c43_154] : memref<3x80xf32, #tpu.memory_space<smem>>
    %414 = vector.broadcast %413 : f32 to vector<2x8x128xf32>
    %415 = arith.mulf %414, %380 : vector<2x8x128xf32>
    %416 = arith.addf %412, %415 : vector<2x8x128xf32>
    %c1_155 = arith.constant 1 : index
    %c61_156 = arith.constant 61 : index
    %417 = memref.load %arg1[%c1_155, %c61_156] : memref<3x80xf32, #tpu.memory_space<smem>>
    %418 = vector.broadcast %417 : f32 to vector<2x8x128xf32>
    %419 = arith.mulf %418, %378 : vector<2x8x128xf32>
    %420 = arith.addf %375, %419 : vector<2x8x128xf32>
    %c1_157 = arith.constant 1 : index
    %c62_158 = arith.constant 62 : index
    %421 = memref.load %arg1[%c1_157, %c62_158] : memref<3x80xf32, #tpu.memory_space<smem>>
    %422 = vector.broadcast %421 : f32 to vector<2x8x128xf32>
    %423 = arith.mulf %422, %379 : vector<2x8x128xf32>
    %424 = arith.addf %420, %423 : vector<2x8x128xf32>
    %c1_159 = arith.constant 1 : index
    %c63_160 = arith.constant 63 : index
    %425 = memref.load %arg1[%c1_159, %c63_160] : memref<3x80xf32, #tpu.memory_space<smem>>
    %426 = vector.broadcast %425 : f32 to vector<2x8x128xf32>
    %427 = arith.mulf %426, %380 : vector<2x8x128xf32>
    %428 = arith.addf %424, %427 : vector<2x8x128xf32>
    %c0_161 = arith.constant 0 : index
    %c1_162 = arith.constant 1 : index
    %c1_163 = arith.constant 1 : index
    %c0_164 = arith.constant 0 : index
    %c0_165 = arith.constant 0 : index
    %429 = vector.load %arg3[%c0_161, %c1_162, %c1_163, %c0_164, %c0_165] : memref<2x4x3x12x128xf32, #tpu.memory_space<vmem>>, vector<2x1x1x12x128xf32>
    %430 = vector.shape_cast %429 : vector<2x1x1x12x128xf32> to vector<2x12x128xf32>
    %431 = vector.extract_strided_slice %430 {offsets = [0, 1, 0], sizes = [2, 8, 128], strides = [1, 1, 1]} : vector<2x12x128xf32> to vector<2x8x128xf32>
    %432 = vector.extract_strided_slice %430 {offsets = [0, 2, 0], sizes = [2, 8, 128], strides = [1, 1, 1]} : vector<2x12x128xf32> to vector<2x8x128xf32>
    %433 = vector.extract_strided_slice %430 {offsets = [0, 3, 0], sizes = [2, 8, 128], strides = [1, 1, 1]} : vector<2x12x128xf32> to vector<2x8x128xf32>
    %c1_166 = arith.constant 1 : index
    %c6_167 = arith.constant 6 : index
    %434 = memref.load %arg1[%c1_166, %c6_167] : memref<3x80xf32, #tpu.memory_space<smem>>
    %435 = vector.broadcast %434 : f32 to vector<2x8x128xf32>
    %436 = arith.mulf %435, %431 : vector<2x8x128xf32>
    %437 = arith.addf %392, %436 : vector<2x8x128xf32>
    %c1_168 = arith.constant 1 : index
    %c7_169 = arith.constant 7 : index
    %438 = memref.load %arg1[%c1_168, %c7_169] : memref<3x80xf32, #tpu.memory_space<smem>>
    %439 = vector.broadcast %438 : f32 to vector<2x8x128xf32>
    %440 = arith.mulf %439, %432 : vector<2x8x128xf32>
    %441 = arith.addf %437, %440 : vector<2x8x128xf32>
    %c1_170 = arith.constant 1 : index
    %c8_171 = arith.constant 8 : index
    %442 = memref.load %arg1[%c1_170, %c8_171] : memref<3x80xf32, #tpu.memory_space<smem>>
    %443 = vector.broadcast %442 : f32 to vector<2x8x128xf32>
    %444 = arith.mulf %443, %433 : vector<2x8x128xf32>
    %445 = arith.addf %441, %444 : vector<2x8x128xf32>
    %c1_172 = arith.constant 1 : index
    %c26_173 = arith.constant 26 : index
    %446 = memref.load %arg1[%c1_172, %c26_173] : memref<3x80xf32, #tpu.memory_space<smem>>
    %447 = vector.broadcast %446 : f32 to vector<2x8x128xf32>
    %448 = arith.mulf %447, %431 : vector<2x8x128xf32>
    %449 = arith.addf %404, %448 : vector<2x8x128xf32>
    %c1_174 = arith.constant 1 : index
    %c27_175 = arith.constant 27 : index
    %450 = memref.load %arg1[%c1_174, %c27_175] : memref<3x80xf32, #tpu.memory_space<smem>>
    %451 = vector.broadcast %450 : f32 to vector<2x8x128xf32>
    %452 = arith.mulf %451, %432 : vector<2x8x128xf32>
    %453 = arith.addf %449, %452 : vector<2x8x128xf32>
    %c1_176 = arith.constant 1 : index
    %c28_177 = arith.constant 28 : index
    %454 = memref.load %arg1[%c1_176, %c28_177] : memref<3x80xf32, #tpu.memory_space<smem>>
    %455 = vector.broadcast %454 : f32 to vector<2x8x128xf32>
    %456 = arith.mulf %455, %433 : vector<2x8x128xf32>
    %457 = arith.addf %453, %456 : vector<2x8x128xf32>
    %c1_178 = arith.constant 1 : index
    %c46_179 = arith.constant 46 : index
    %458 = memref.load %arg1[%c1_178, %c46_179] : memref<3x80xf32, #tpu.memory_space<smem>>
    %459 = vector.broadcast %458 : f32 to vector<2x8x128xf32>
    %460 = arith.mulf %459, %431 : vector<2x8x128xf32>
    %461 = arith.addf %416, %460 : vector<2x8x128xf32>
    %c1_180 = arith.constant 1 : index
    %c47_181 = arith.constant 47 : index
    %462 = memref.load %arg1[%c1_180, %c47_181] : memref<3x80xf32, #tpu.memory_space<smem>>
    %463 = vector.broadcast %462 : f32 to vector<2x8x128xf32>
    %464 = arith.mulf %463, %432 : vector<2x8x128xf32>
    %465 = arith.addf %461, %464 : vector<2x8x128xf32>
    %c1_182 = arith.constant 1 : index
    %c48_183 = arith.constant 48 : index
    %466 = memref.load %arg1[%c1_182, %c48_183] : memref<3x80xf32, #tpu.memory_space<smem>>
    %467 = vector.broadcast %466 : f32 to vector<2x8x128xf32>
    %468 = arith.mulf %467, %433 : vector<2x8x128xf32>
    %469 = arith.addf %465, %468 : vector<2x8x128xf32>
    %c1_184 = arith.constant 1 : index
    %c66_185 = arith.constant 66 : index
    %470 = memref.load %arg1[%c1_184, %c66_185] : memref<3x80xf32, #tpu.memory_space<smem>>
    %471 = vector.broadcast %470 : f32 to vector<2x8x128xf32>
    %472 = arith.mulf %471, %431 : vector<2x8x128xf32>
    %473 = arith.addf %428, %472 : vector<2x8x128xf32>
    %c1_186 = arith.constant 1 : index
    %c67_187 = arith.constant 67 : index
    %474 = memref.load %arg1[%c1_186, %c67_187] : memref<3x80xf32, #tpu.memory_space<smem>>
    %475 = vector.broadcast %474 : f32 to vector<2x8x128xf32>
    %476 = arith.mulf %475, %432 : vector<2x8x128xf32>
    %477 = arith.addf %473, %476 : vector<2x8x128xf32>
    %c1_188 = arith.constant 1 : index
    %c68_189 = arith.constant 68 : index
    %478 = memref.load %arg1[%c1_188, %c68_189] : memref<3x80xf32, #tpu.memory_space<smem>>
    %479 = vector.broadcast %478 : f32 to vector<2x8x128xf32>
    %480 = arith.mulf %479, %433 : vector<2x8x128xf32>
    %481 = arith.addf %477, %480 : vector<2x8x128xf32>
    %c0_190 = arith.constant 0 : index
    %c2_191 = arith.constant 2 : index
    %c1_192 = arith.constant 1 : index
    %c0_193 = arith.constant 0 : index
    %c0_194 = arith.constant 0 : index
    %482 = vector.load %arg3[%c0_190, %c2_191, %c1_192, %c0_193, %c0_194] : memref<2x4x3x12x128xf32, #tpu.memory_space<vmem>>, vector<2x1x1x12x128xf32>
    %483 = vector.shape_cast %482 : vector<2x1x1x12x128xf32> to vector<2x12x128xf32>
    %484 = vector.extract_strided_slice %483 {offsets = [0, 1, 0], sizes = [2, 8, 128], strides = [1, 1, 1]} : vector<2x12x128xf32> to vector<2x8x128xf32>
    %485 = vector.extract_strided_slice %483 {offsets = [0, 2, 0], sizes = [2, 8, 128], strides = [1, 1, 1]} : vector<2x12x128xf32> to vector<2x8x128xf32>
    %486 = vector.extract_strided_slice %483 {offsets = [0, 3, 0], sizes = [2, 8, 128], strides = [1, 1, 1]} : vector<2x12x128xf32> to vector<2x8x128xf32>
    %c1_195 = arith.constant 1 : index
    %c11_196 = arith.constant 11 : index
    %487 = memref.load %arg1[%c1_195, %c11_196] : memref<3x80xf32, #tpu.memory_space<smem>>
    %488 = vector.broadcast %487 : f32 to vector<2x8x128xf32>
    %489 = arith.mulf %488, %484 : vector<2x8x128xf32>
    %490 = arith.addf %445, %489 : vector<2x8x128xf32>
    %c1_197 = arith.constant 1 : index
    %c12_198 = arith.constant 12 : index
    %491 = memref.load %arg1[%c1_197, %c12_198] : memref<3x80xf32, #tpu.memory_space<smem>>
    %492 = vector.broadcast %491 : f32 to vector<2x8x128xf32>
    %493 = arith.mulf %492, %485 : vector<2x8x128xf32>
    %494 = arith.addf %490, %493 : vector<2x8x128xf32>
    %c1_199 = arith.constant 1 : index
    %c13_200 = arith.constant 13 : index
    %495 = memref.load %arg1[%c1_199, %c13_200] : memref<3x80xf32, #tpu.memory_space<smem>>
    %496 = vector.broadcast %495 : f32 to vector<2x8x128xf32>
    %497 = arith.mulf %496, %486 : vector<2x8x128xf32>
    %498 = arith.addf %494, %497 : vector<2x8x128xf32>
    %c1_201 = arith.constant 1 : index
    %c31_202 = arith.constant 31 : index
    %499 = memref.load %arg1[%c1_201, %c31_202] : memref<3x80xf32, #tpu.memory_space<smem>>
    %500 = vector.broadcast %499 : f32 to vector<2x8x128xf32>
    %501 = arith.mulf %500, %484 : vector<2x8x128xf32>
    %502 = arith.addf %457, %501 : vector<2x8x128xf32>
    %c1_203 = arith.constant 1 : index
    %c32_204 = arith.constant 32 : index
    %503 = memref.load %arg1[%c1_203, %c32_204] : memref<3x80xf32, #tpu.memory_space<smem>>
    %504 = vector.broadcast %503 : f32 to vector<2x8x128xf32>
    %505 = arith.mulf %504, %485 : vector<2x8x128xf32>
    %506 = arith.addf %502, %505 : vector<2x8x128xf32>
    %c1_205 = arith.constant 1 : index
    %c33_206 = arith.constant 33 : index
    %507 = memref.load %arg1[%c1_205, %c33_206] : memref<3x80xf32, #tpu.memory_space<smem>>
    %508 = vector.broadcast %507 : f32 to vector<2x8x128xf32>
    %509 = arith.mulf %508, %486 : vector<2x8x128xf32>
    %510 = arith.addf %506, %509 : vector<2x8x128xf32>
    %c1_207 = arith.constant 1 : index
    %c51_208 = arith.constant 51 : index
    %511 = memref.load %arg1[%c1_207, %c51_208] : memref<3x80xf32, #tpu.memory_space<smem>>
    %512 = vector.broadcast %511 : f32 to vector<2x8x128xf32>
    %513 = arith.mulf %512, %484 : vector<2x8x128xf32>
    %514 = arith.addf %469, %513 : vector<2x8x128xf32>
    %c1_209 = arith.constant 1 : index
    %c52_210 = arith.constant 52 : index
    %515 = memref.load %arg1[%c1_209, %c52_210] : memref<3x80xf32, #tpu.memory_space<smem>>
    %516 = vector.broadcast %515 : f32 to vector<2x8x128xf32>
    %517 = arith.mulf %516, %485 : vector<2x8x128xf32>
    %518 = arith.addf %514, %517 : vector<2x8x128xf32>
    %c1_211 = arith.constant 1 : index
    %c53_212 = arith.constant 53 : index
    %519 = memref.load %arg1[%c1_211, %c53_212] : memref<3x80xf32, #tpu.memory_space<smem>>
    %520 = vector.broadcast %519 : f32 to vector<2x8x128xf32>
    %521 = arith.mulf %520, %486 : vector<2x8x128xf32>
    %522 = arith.addf %518, %521 : vector<2x8x128xf32>
    %c1_213 = arith.constant 1 : index
    %c71_214 = arith.constant 71 : index
    %523 = memref.load %arg1[%c1_213, %c71_214] : memref<3x80xf32, #tpu.memory_space<smem>>
    %524 = vector.broadcast %523 : f32 to vector<2x8x128xf32>
    %525 = arith.mulf %524, %484 : vector<2x8x128xf32>
    %526 = arith.addf %481, %525 : vector<2x8x128xf32>
    %c1_215 = arith.constant 1 : index
    %c72_216 = arith.constant 72 : index
    %527 = memref.load %arg1[%c1_215, %c72_216] : memref<3x80xf32, #tpu.memory_space<smem>>
    %528 = vector.broadcast %527 : f32 to vector<2x8x128xf32>
    %529 = arith.mulf %528, %485 : vector<2x8x128xf32>
    %530 = arith.addf %526, %529 : vector<2x8x128xf32>
    %c1_217 = arith.constant 1 : index
    %c73_218 = arith.constant 73 : index
    %531 = memref.load %arg1[%c1_217, %c73_218] : memref<3x80xf32, #tpu.memory_space<smem>>
    %532 = vector.broadcast %531 : f32 to vector<2x8x128xf32>
    %533 = arith.mulf %532, %486 : vector<2x8x128xf32>
    %534 = arith.addf %530, %533 : vector<2x8x128xf32>
    %c0_219 = arith.constant 0 : index
    %c3_220 = arith.constant 3 : index
    %c1_221 = arith.constant 1 : index
    %c0_222 = arith.constant 0 : index
    %c0_223 = arith.constant 0 : index
    %535 = vector.load %arg3[%c0_219, %c3_220, %c1_221, %c0_222, %c0_223] : memref<2x4x3x12x128xf32, #tpu.memory_space<vmem>>, vector<2x1x1x12x128xf32>
    %536 = vector.shape_cast %535 : vector<2x1x1x12x128xf32> to vector<2x12x128xf32>
    %537 = vector.extract_strided_slice %536 {offsets = [0, 1, 0], sizes = [2, 8, 128], strides = [1, 1, 1]} : vector<2x12x128xf32> to vector<2x8x128xf32>
    %538 = vector.extract_strided_slice %536 {offsets = [0, 2, 0], sizes = [2, 8, 128], strides = [1, 1, 1]} : vector<2x12x128xf32> to vector<2x8x128xf32>
    %539 = vector.extract_strided_slice %536 {offsets = [0, 3, 0], sizes = [2, 8, 128], strides = [1, 1, 1]} : vector<2x12x128xf32> to vector<2x8x128xf32>
    %c1_224 = arith.constant 1 : index
    %c16_225 = arith.constant 16 : index
    %540 = memref.load %arg1[%c1_224, %c16_225] : memref<3x80xf32, #tpu.memory_space<smem>>
    %541 = vector.broadcast %540 : f32 to vector<2x8x128xf32>
    %542 = arith.mulf %541, %537 : vector<2x8x128xf32>
    %543 = arith.addf %498, %542 : vector<2x8x128xf32>
    %c1_226 = arith.constant 1 : index
    %c17_227 = arith.constant 17 : index
    %544 = memref.load %arg1[%c1_226, %c17_227] : memref<3x80xf32, #tpu.memory_space<smem>>
    %545 = vector.broadcast %544 : f32 to vector<2x8x128xf32>
    %546 = arith.mulf %545, %538 : vector<2x8x128xf32>
    %547 = arith.addf %543, %546 : vector<2x8x128xf32>
    %c1_228 = arith.constant 1 : index
    %c18_229 = arith.constant 18 : index
    %548 = memref.load %arg1[%c1_228, %c18_229] : memref<3x80xf32, #tpu.memory_space<smem>>
    %549 = vector.broadcast %548 : f32 to vector<2x8x128xf32>
    %550 = arith.mulf %549, %539 : vector<2x8x128xf32>
    %551 = arith.addf %547, %550 : vector<2x8x128xf32>
    %c1_230 = arith.constant 1 : index
    %c36_231 = arith.constant 36 : index
    %552 = memref.load %arg1[%c1_230, %c36_231] : memref<3x80xf32, #tpu.memory_space<smem>>
    %553 = vector.broadcast %552 : f32 to vector<2x8x128xf32>
    %554 = arith.mulf %553, %537 : vector<2x8x128xf32>
    %555 = arith.addf %510, %554 : vector<2x8x128xf32>
    %c1_232 = arith.constant 1 : index
    %c37_233 = arith.constant 37 : index
    %556 = memref.load %arg1[%c1_232, %c37_233] : memref<3x80xf32, #tpu.memory_space<smem>>
    %557 = vector.broadcast %556 : f32 to vector<2x8x128xf32>
    %558 = arith.mulf %557, %538 : vector<2x8x128xf32>
    %559 = arith.addf %555, %558 : vector<2x8x128xf32>
    %c1_234 = arith.constant 1 : index
    %c38_235 = arith.constant 38 : index
    %560 = memref.load %arg1[%c1_234, %c38_235] : memref<3x80xf32, #tpu.memory_space<smem>>
    %561 = vector.broadcast %560 : f32 to vector<2x8x128xf32>
    %562 = arith.mulf %561, %539 : vector<2x8x128xf32>
    %563 = arith.addf %559, %562 : vector<2x8x128xf32>
    %c1_236 = arith.constant 1 : index
    %c56_237 = arith.constant 56 : index
    %564 = memref.load %arg1[%c1_236, %c56_237] : memref<3x80xf32, #tpu.memory_space<smem>>
    %565 = vector.broadcast %564 : f32 to vector<2x8x128xf32>
    %566 = arith.mulf %565, %537 : vector<2x8x128xf32>
    %567 = arith.addf %522, %566 : vector<2x8x128xf32>
    %c1_238 = arith.constant 1 : index
    %c57_239 = arith.constant 57 : index
    %568 = memref.load %arg1[%c1_238, %c57_239] : memref<3x80xf32, #tpu.memory_space<smem>>
    %569 = vector.broadcast %568 : f32 to vector<2x8x128xf32>
    %570 = arith.mulf %569, %538 : vector<2x8x128xf32>
    %571 = arith.addf %567, %570 : vector<2x8x128xf32>
    %c1_240 = arith.constant 1 : index
    %c58_241 = arith.constant 58 : index
    %572 = memref.load %arg1[%c1_240, %c58_241] : memref<3x80xf32, #tpu.memory_space<smem>>
    %573 = vector.broadcast %572 : f32 to vector<2x8x128xf32>
    %574 = arith.mulf %573, %539 : vector<2x8x128xf32>
    %575 = arith.addf %571, %574 : vector<2x8x128xf32>
    %c1_242 = arith.constant 1 : index
    %c76_243 = arith.constant 76 : index
    %576 = memref.load %arg1[%c1_242, %c76_243] : memref<3x80xf32, #tpu.memory_space<smem>>
    %577 = vector.broadcast %576 : f32 to vector<2x8x128xf32>
    %578 = arith.mulf %577, %537 : vector<2x8x128xf32>
    %579 = arith.addf %534, %578 : vector<2x8x128xf32>
    %c1_244 = arith.constant 1 : index
    %c77_245 = arith.constant 77 : index
    %580 = memref.load %arg1[%c1_244, %c77_245] : memref<3x80xf32, #tpu.memory_space<smem>>
    %581 = vector.broadcast %580 : f32 to vector<2x8x128xf32>
    %582 = arith.mulf %581, %538 : vector<2x8x128xf32>
    %583 = arith.addf %579, %582 : vector<2x8x128xf32>
    %c1_246 = arith.constant 1 : index
    %c78_247 = arith.constant 78 : index
    %584 = memref.load %arg1[%c1_246, %c78_247] : memref<3x80xf32, #tpu.memory_space<smem>>
    %585 = vector.broadcast %584 : f32 to vector<2x8x128xf32>
    %586 = arith.mulf %585, %539 : vector<2x8x128xf32>
    %587 = arith.addf %583, %586 : vector<2x8x128xf32>
    %c0_248 = arith.constant 0 : index
    %c4_249 = arith.constant 4 : index
    %c0_250 = arith.constant 0 : index
    %c0_251 = arith.constant 0 : index
    %588 = vector.load %arg4[%c0_248, %c4_249, %c0_250, %c0_251] : memref<2x12x8x128xf32, #tpu.memory_space<vmem>>, vector<2x1x8x128xf32>
    %589 = vector.shape_cast %588 : vector<2x1x8x128xf32> to vector<2x8x128xf32>
    %590 = vector.shape_cast %551 : vector<2x8x128xf32> to vector<2x1x8x128xf32>
    tpu.vector_store %arg4[%c0_248, %c4_249, %c0_250, %c0_251], %590 {strides = array<i32>} : memref<2x12x8x128xf32, #tpu.memory_space<vmem>>, vector<2x1x8x128xf32>,
    %c0_252 = arith.constant 0 : index
    %c5_253 = arith.constant 5 : index
    %c0_254 = arith.constant 0 : index
    %c0_255 = arith.constant 0 : index
    %591 = vector.load %arg4[%c0_252, %c5_253, %c0_254, %c0_255] : memref<2x12x8x128xf32, #tpu.memory_space<vmem>>, vector<2x1x8x128xf32>
    %592 = vector.shape_cast %591 : vector<2x1x8x128xf32> to vector<2x8x128xf32>
    %593 = vector.shape_cast %563 : vector<2x8x128xf32> to vector<2x1x8x128xf32>
    tpu.vector_store %arg4[%c0_252, %c5_253, %c0_254, %c0_255], %593 {strides = array<i32>} : memref<2x12x8x128xf32, #tpu.memory_space<vmem>>, vector<2x1x8x128xf32>,
    %c0_256 = arith.constant 0 : index
    %c6_257 = arith.constant 6 : index
    %c0_258 = arith.constant 0 : index
    %c0_259 = arith.constant 0 : index
    %594 = vector.load %arg4[%c0_256, %c6_257, %c0_258, %c0_259] : memref<2x12x8x128xf32, #tpu.memory_space<vmem>>, vector<2x1x8x128xf32>
    %595 = vector.shape_cast %594 : vector<2x1x8x128xf32> to vector<2x8x128xf32>
    %596 = vector.shape_cast %575 : vector<2x8x128xf32> to vector<2x1x8x128xf32>
    tpu.vector_store %arg4[%c0_256, %c6_257, %c0_258, %c0_259], %596 {strides = array<i32>} : memref<2x12x8x128xf32, #tpu.memory_space<vmem>>, vector<2x1x8x128xf32>,
    %c0_260 = arith.constant 0 : index
    %c7_261 = arith.constant 7 : index
    %c0_262 = arith.constant 0 : index
    %c0_263 = arith.constant 0 : index
    %597 = vector.load %arg4[%c0_260, %c7_261, %c0_262, %c0_263] : memref<2x12x8x128xf32, #tpu.memory_space<vmem>>, vector<2x1x8x128xf32>
    %598 = vector.shape_cast %597 : vector<2x1x8x128xf32> to vector<2x8x128xf32>
    %599 = vector.shape_cast %587 : vector<2x8x128xf32> to vector<2x1x8x128xf32>
    tpu.vector_store %arg4[%c0_260, %c7_261, %c0_262, %c0_263], %599 {strides = array<i32>} : memref<2x12x8x128xf32, #tpu.memory_space<vmem>>, vector<2x1x8x128xf32>,
    %c2_264 = arith.constant 2 : index
    %c0_265 = arith.constant 0 : index
    %600 = memref.load %arg2[%c2_264, %c0_265] : memref<3x4xf32, #tpu.memory_space<smem>>
    %601 = vector.broadcast %600 : f32 to vector<2x8x128xf32>
    %c2_266 = arith.constant 2 : index
    %c1_267 = arith.constant 1 : index
    %602 = memref.load %arg2[%c2_266, %c1_267] : memref<3x4xf32, #tpu.memory_space<smem>>
    %603 = vector.broadcast %602 : f32 to vector<2x8x128xf32>
    %c2_268 = arith.constant 2 : index
    %c2_269 = arith.constant 2 : index
    %604 = memref.load %arg2[%c2_268, %c2_269] : memref<3x4xf32, #tpu.memory_space<smem>>
    %605 = vector.broadcast %604 : f32 to vector<2x8x128xf32>
    %c2_270 = arith.constant 2 : index
    %c3_271 = arith.constant 3 : index
    %606 = memref.load %arg2[%c2_270, %c3_271] : memref<3x4xf32, #tpu.memory_space<smem>>
    %607 = vector.broadcast %606 : f32 to vector<2x8x128xf32>
    %c0_272 = arith.constant 0 : index
    %c0_273 = arith.constant 0 : index
    %c2_274 = arith.constant 2 : index
    %c0_275 = arith.constant 0 : index
    %c0_276 = arith.constant 0 : index
    %608 = vector.load %arg3[%c0_272, %c0_273, %c2_274, %c0_275, %c0_276] : memref<2x4x3x12x128xf32, #tpu.memory_space<vmem>>, vector<2x1x1x12x128xf32>
    %609 = vector.shape_cast %608 : vector<2x1x1x12x128xf32> to vector<2x12x128xf32>
    %610 = vector.extract_strided_slice %609 {offsets = [0, 2, 0], sizes = [2, 8, 128], strides = [1, 1, 1]} : vector<2x12x128xf32> to vector<2x8x128xf32>
    %c2_277 = arith.constant 2 : index
    %c2_278 = arith.constant 2 : index
    %611 = memref.load %arg1[%c2_277, %c2_278] : memref<3x80xf32, #tpu.memory_space<smem>>
    %612 = vector.broadcast %611 : f32 to vector<2x8x128xf32>
    %613 = arith.mulf %612, %610 : vector<2x8x128xf32>
    %614 = arith.addf %601, %613 : vector<2x8x128xf32>
    %c2_279 = arith.constant 2 : index
    %c22_280 = arith.constant 22 : index
    %615 = memref.load %arg1[%c2_279, %c22_280] : memref<3x80xf32, #tpu.memory_space<smem>>
    %616 = vector.broadcast %615 : f32 to vector<2x8x128xf32>
    %617 = arith.mulf %616, %610 : vector<2x8x128xf32>
    %618 = arith.addf %603, %617 : vector<2x8x128xf32>
    %c2_281 = arith.constant 2 : index
    %c42_282 = arith.constant 42 : index
    %619 = memref.load %arg1[%c2_281, %c42_282] : memref<3x80xf32, #tpu.memory_space<smem>>
    %620 = vector.broadcast %619 : f32 to vector<2x8x128xf32>
    %621 = arith.mulf %620, %610 : vector<2x8x128xf32>
    %622 = arith.addf %605, %621 : vector<2x8x128xf32>
    %c2_283 = arith.constant 2 : index
    %c62_284 = arith.constant 62 : index
    %623 = memref.load %arg1[%c2_283, %c62_284] : memref<3x80xf32, #tpu.memory_space<smem>>
    %624 = vector.broadcast %623 : f32 to vector<2x8x128xf32>
    %625 = arith.mulf %624, %610 : vector<2x8x128xf32>
    %626 = arith.addf %607, %625 : vector<2x8x128xf32>
    %c0_285 = arith.constant 0 : index
    %c1_286 = arith.constant 1 : index
    %c2_287 = arith.constant 2 : index
    %c0_288 = arith.constant 0 : index
    %c0_289 = arith.constant 0 : index
    %627 = vector.load %arg3[%c0_285, %c1_286, %c2_287, %c0_288, %c0_289] : memref<2x4x3x12x128xf32, #tpu.memory_space<vmem>>, vector<2x1x1x12x128xf32>
    %628 = vector.shape_cast %627 : vector<2x1x1x12x128xf32> to vector<2x12x128xf32>
    %629 = vector.extract_strided_slice %628 {offsets = [0, 2, 0], sizes = [2, 8, 128], strides = [1, 1, 1]} : vector<2x12x128xf32> to vector<2x8x128xf32>
    %c2_290 = arith.constant 2 : index
    %c7_291 = arith.constant 7 : index
    %630 = memref.load %arg1[%c2_290, %c7_291] : memref<3x80xf32, #tpu.memory_space<smem>>
    %631 = vector.broadcast %630 : f32 to vector<2x8x128xf32>
    %632 = arith.mulf %631, %629 : vector<2x8x128xf32>
    %633 = arith.addf %614, %632 : vector<2x8x128xf32>
    %c2_292 = arith.constant 2 : index
    %c27_293 = arith.constant 27 : index
    %634 = memref.load %arg1[%c2_292, %c27_293] : memref<3x80xf32, #tpu.memory_space<smem>>
    %635 = vector.broadcast %634 : f32 to vector<2x8x128xf32>
    %636 = arith.mulf %635, %629 : vector<2x8x128xf32>
    %637 = arith.addf %618, %636 : vector<2x8x128xf32>
    %c2_294 = arith.constant 2 : index
    %c47_295 = arith.constant 47 : index
    %638 = memref.load %arg1[%c2_294, %c47_295] : memref<3x80xf32, #tpu.memory_space<smem>>
    %639 = vector.broadcast %638 : f32 to vector<2x8x128xf32>
    %640 = arith.mulf %639, %629 : vector<2x8x128xf32>
    %641 = arith.addf %622, %640 : vector<2x8x128xf32>
    %c2_296 = arith.constant 2 : index
    %c67_297 = arith.constant 67 : index
    %642 = memref.load %arg1[%c2_296, %c67_297] : memref<3x80xf32, #tpu.memory_space<smem>>
    %643 = vector.broadcast %642 : f32 to vector<2x8x128xf32>
    %644 = arith.mulf %643, %629 : vector<2x8x128xf32>
    %645 = arith.addf %626, %644 : vector<2x8x128xf32>
    %c0_298 = arith.constant 0 : index
    %c2_299 = arith.constant 2 : index
    %c2_300 = arith.constant 2 : index
    %c0_301 = arith.constant 0 : index
    %c0_302 = arith.constant 0 : index
    %646 = vector.load %arg3[%c0_298, %c2_299, %c2_300, %c0_301, %c0_302] : memref<2x4x3x12x128xf32, #tpu.memory_space<vmem>>, vector<2x1x1x12x128xf32>
    %647 = vector.shape_cast %646 : vector<2x1x1x12x128xf32> to vector<2x12x128xf32>
    %648 = vector.extract_strided_slice %647 {offsets = [0, 2, 0], sizes = [2, 8, 128], strides = [1, 1, 1]} : vector<2x12x128xf32> to vector<2x8x128xf32>
    %c2_303 = arith.constant 2 : index
    %c12_304 = arith.constant 12 : index
    %649 = memref.load %arg1[%c2_303, %c12_304] : memref<3x80xf32, #tpu.memory_space<smem>>
    %650 = vector.broadcast %649 : f32 to vector<2x8x128xf32>
    %651 = arith.mulf %650, %648 : vector<2x8x128xf32>
    %652 = arith.addf %633, %651 : vector<2x8x128xf32>
    %c2_305 = arith.constant 2 : index
    %c32_306 = arith.constant 32 : index
    %653 = memref.load %arg1[%c2_305, %c32_306] : memref<3x80xf32, #tpu.memory_space<smem>>
    %654 = vector.broadcast %653 : f32 to vector<2x8x128xf32>
    %655 = arith.mulf %654, %648 : vector<2x8x128xf32>
    %656 = arith.addf %637, %655 : vector<2x8x128xf32>
    %c2_307 = arith.constant 2 : index
    %c52_308 = arith.constant 52 : index
    %657 = memref.load %arg1[%c2_307, %c52_308] : memref<3x80xf32, #tpu.memory_space<smem>>
    %658 = vector.broadcast %657 : f32 to vector<2x8x128xf32>
    %659 = arith.mulf %658, %648 : vector<2x8x128xf32>
    %660 = arith.addf %641, %659 : vector<2x8x128xf32>
    %c2_309 = arith.constant 2 : index
    %c72_310 = arith.constant 72 : index
    %661 = memref.load %arg1[%c2_309, %c72_310] : memref<3x80xf32, #tpu.memory_space<smem>>
    %662 = vector.broadcast %661 : f32 to vector<2x8x128xf32>
    %663 = arith.mulf %662, %648 : vector<2x8x128xf32>
    %664 = arith.addf %645, %663 : vector<2x8x128xf32>
    %c0_311 = arith.constant 0 : index
    %c3_312 = arith.constant 3 : index
    %c2_313 = arith.constant 2 : index
    %c0_314 = arith.constant 0 : index
    %c0_315 = arith.constant 0 : index
    %665 = vector.load %arg3[%c0_311, %c3_312, %c2_313, %c0_314, %c0_315] : memref<2x4x3x12x128xf32, #tpu.memory_space<vmem>>, vector<2x1x1x12x128xf32>
    %666 = vector.shape_cast %665 : vector<2x1x1x12x128xf32> to vector<2x12x128xf32>
    %667 = vector.extract_strided_slice %666 {offsets = [0, 2, 0], sizes = [2, 8, 128], strides = [1, 1, 1]} : vector<2x12x128xf32> to vector<2x8x128xf32>
    %c2_316 = arith.constant 2 : index
    %c17_317 = arith.constant 17 : index
    %668 = memref.load %arg1[%c2_316, %c17_317] : memref<3x80xf32, #tpu.memory_space<smem>>
    %669 = vector.broadcast %668 : f32 to vector<2x8x128xf32>
    %670 = arith.mulf %669, %667 : vector<2x8x128xf32>
    %671 = arith.addf %652, %670 : vector<2x8x128xf32>
    %c2_318 = arith.constant 2 : index
    %c37_319 = arith.constant 37 : index
    %672 = memref.load %arg1[%c2_318, %c37_319] : memref<3x80xf32, #tpu.memory_space<smem>>
    %673 = vector.broadcast %672 : f32 to vector<2x8x128xf32>
    %674 = arith.mulf %673, %667 : vector<2x8x128xf32>
    %675 = arith.addf %656, %674 : vector<2x8x128xf32>
    %c2_320 = arith.constant 2 : index
    %c57_321 = arith.constant 57 : index
    %676 = memref.load %arg1[%c2_320, %c57_321] : memref<3x80xf32, #tpu.memory_space<smem>>
    %677 = vector.broadcast %676 : f32 to vector<2x8x128xf32>
    %678 = arith.mulf %677, %667 : vector<2x8x128xf32>
    %679 = arith.addf %660, %678 : vector<2x8x128xf32>
    %c2_322 = arith.constant 2 : index
    %c77_323 = arith.constant 77 : index
    %680 = memref.load %arg1[%c2_322, %c77_323] : memref<3x80xf32, #tpu.memory_space<smem>>
    %681 = vector.broadcast %680 : f32 to vector<2x8x128xf32>
    %682 = arith.mulf %681, %667 : vector<2x8x128xf32>
    %683 = arith.addf %664, %682 : vector<2x8x128xf32>
    %c0_324 = arith.constant 0 : index
    %c8_325 = arith.constant 8 : index
    %c0_326 = arith.constant 0 : index
    %c0_327 = arith.constant 0 : index
    %684 = vector.load %arg4[%c0_324, %c8_325, %c0_326, %c0_327] : memref<2x12x8x128xf32, #tpu.memory_space<vmem>>, vector<2x1x8x128xf32>
    %685 = vector.shape_cast %684 : vector<2x1x8x128xf32> to vector<2x8x128xf32>
    %686 = vector.shape_cast %671 : vector<2x8x128xf32> to vector<2x1x8x128xf32>
    tpu.vector_store %arg4[%c0_324, %c8_325, %c0_326, %c0_327], %686 {strides = array<i32>} : memref<2x12x8x128xf32, #tpu.memory_space<vmem>>, vector<2x1x8x128xf32>,
    %c0_328 = arith.constant 0 : index
    %c9_329 = arith.constant 9 : index
    %c0_330 = arith.constant 0 : index
    %c0_331 = arith.constant 0 : index
    %687 = vector.load %arg4[%c0_328, %c9_329, %c0_330, %c0_331] : memref<2x12x8x128xf32, #tpu.memory_space<vmem>>, vector<2x1x8x128xf32>
    %688 = vector.shape_cast %687 : vector<2x1x8x128xf32> to vector<2x8x128xf32>
    %689 = vector.shape_cast %675 : vector<2x8x128xf32> to vector<2x1x8x128xf32>
    tpu.vector_store %arg4[%c0_328, %c9_329, %c0_330, %c0_331], %689 {strides = array<i32>} : memref<2x12x8x128xf32, #tpu.memory_space<vmem>>, vector<2x1x8x128xf32>,
    %c0_332 = arith.constant 0 : index
    %c10_333 = arith.constant 10 : index
    %c0_334 = arith.constant 0 : index
    %c0_335 = arith.constant 0 : index
    %690 = vector.load %arg4[%c0_332, %c10_333, %c0_334, %c0_335] : memref<2x12x8x128xf32, #tpu.memory_space<vmem>>, vector<2x1x8x128xf32>
    %691 = vector.shape_cast %690 : vector<2x1x8x128xf32> to vector<2x8x128xf32>
    %692 = vector.shape_cast %679 : vector<2x8x128xf32> to vector<2x1x8x128xf32>
    tpu.vector_store %arg4[%c0_332, %c10_333, %c0_334, %c0_335], %692 {strides = array<i32>} : memref<2x12x8x128xf32, #tpu.memory_space<vmem>>, vector<2x1x8x128xf32>,
    %c0_336 = arith.constant 0 : index
    %c11_337 = arith.constant 11 : index
    %c0_338 = arith.constant 0 : index
    %c0_339 = arith.constant 0 : index
    %693 = vector.load %arg4[%c0_336, %c11_337, %c0_338, %c0_339] : memref<2x12x8x128xf32, #tpu.memory_space<vmem>>, vector<2x1x8x128xf32>
    %694 = vector.shape_cast %693 : vector<2x1x8x128xf32> to vector<2x8x128xf32>
    %695 = vector.shape_cast %683 : vector<2x8x128xf32> to vector<2x1x8x128xf32>
    tpu.vector_store %arg4[%c0_336, %c11_337, %c0_338, %c0_339], %695 {strides = array<i32>} : memref<2x12x8x128xf32, #tpu.memory_space<vmem>>, vector<2x1x8x128xf32>,
    return
  }
  func.func @transform_0(%arg0: i32, %arg1: memref<3x80xf32, #tpu.memory_space<smem>>, %arg2: memref<3x4xf32, #tpu.memory_space<smem>>) -> (i32, i32, i32, i32, i32) {
    %c0_i32 = arith.constant 0 : i32
    %c0_i32_0 = arith.constant 0 : i32
    %c0_i32_1 = arith.constant 0 : i32
    %c0_i32_2 = arith.constant 0 : i32
    %c0_i32_3 = arith.constant 0 : i32
    return %c0_i32, %c0_i32_0, %c0_i32_1, %c0_i32_2, %arg0 : i32, i32, i32, i32, i32
  }
  func.func @transform_1(%arg0: i32, %arg1: memref<3x80xf32, #tpu.memory_space<smem>>, %arg2: memref<3x4xf32, #tpu.memory_space<smem>>) -> (i32, i32, i32, i32) {
    %c0_i32 = arith.constant 0 : i32
    %c0_i32_0 = arith.constant 0 : i32
    %c0_i32_1 = arith.constant 0 : i32
    %c0_i32_2 = arith.constant 0 : i32
    return %c0_i32, %c0_i32_0, %c0_i32_1, %arg0 : i32, i32, i32, i32
  }
}

</mosaic_0001>

<llo_original>
// kernel: tpu_custom_call.1
$region0: #{tpu_custom_call.1}
  #allocation0 [shape = 'u32[]', space=smem, size = 0x4, offset = 0x4, fixed_abs, tag = 'smem constant byte address 0x4 - core index']
  #allocation1 [shape = 'u32[144,128]{1,0:T(1,128)}', space=vmem, size = 0x12000, scoped, tag = 'internal scratch']
  #allocation2 [shape = 's32[1]{0}', space=sflag, size = 0x4, scoped, tag = 'scoped memory for tpu_custom_call.1']
  #allocation3 [shape = 'u8[2048]{0}', space=smem, size = 0x800, scoped, tag = 'prefetched SMEM operand 0']
  #allocation4 [shape = 'u8[2048]{0}', space=smem, size = 0x800, scoped, tag = 'prefetched SMEM operand 1']
  %s0 = inlined_call_operand.vmem [shape: f32[3,80], index: 0, kind: input, shape index: {}]
  %s1 = inlined_call_operand.vmem [shape: f32[3,4], index: 1, kind: input, shape index: {}]
  %s2 = inlined_call_operand.vmem [shape: f32[2,4,3,12,128], index: 2, kind: input, shape index: {}]
  %s3 = inlined_call_operand.hbm [shape: f32[2,12,8,128], index: 3, kind: output, shape index: {}]
  %s4 = sld [smem:[#allocation0]]
  $region14: #{tpu_custom_call.1} parent=0
    _
  %s6 = ssub.s32 1, %s4
  %s7 = scalar_select 0, %s6, %s4
  %s8 = sshll.u32 %s0, 4
  %s9 = int_to_ptr.vmem [resolvable:$true] %s8
  %11 = dma.vmem_to_smem %s9, 64, [#allocation3], [#allocation2]
  %s12 = sshll.u32 %s1, 4
  %s13 = int_to_ptr.vmem [resolvable:$true] %s12
  %15 = dma.vmem_to_smem %s13, 64, [#allocation4], [#allocation2]
  %16 = dma.done [#allocation2], 128
  %17 = sfence
  $region1: #{tpu_custom_call.1} parent=0
    #allocation5 [shape = 'u8[98304]{0}', space=vmem, size = 0x18000, scoped, tag = 'output window, operand 0, single buffered']
    #allocation6 [shape = 's32[1]{0}', space=sflag, size = 0x4, scoped, tag = 'scoped memory for tpu_custom_call.1']
    %18 = vsyncpa [#allocation6], 0
    // Predicated region
    $region2: #{tpu_custom_call.1} parent=1 // pred_check
      _
    $region3: #{tpu_custom_call.1} parent=1 // pred_check_branch
      %20 = sbr.rel (0) target = $region5
    $region4: #{tpu_custom_call.1} parent=1 // pred_region
      _
    $region5: #{tpu_custom_call.1} parent=1 // pred_fallthru
      _
    %s21 = sld [smem:[#allocation4]]
    %v22 = vstv %s21
    %s23 = sld [smem:[#allocation4 + $0x1]]
    %v24 = vstv %s23
    %s25 = sld [smem:[#allocation4 + $0x2]]
    %v26 = vstv %s25
    %s27 = sld [smem:[#allocation4 + $0x3]]
    %v28 = vstv %s27
    %v29 = vld [vmem:[%s2] sm:$0xff]
    %v30 = vld [vmem:[%s2 + $0x8] sm:$0xf]
    %v31 = vld [vmem:[%s2 + $0xc0] sm:$0xff]
    %v32 = vld [vmem:[%s2 + $0xc8] sm:$0xf]
    %s33 = sld [smem:[#allocation3]]
    %v34 = vstv %s33
    %v35 = vmul.f32 %v34, %v29
    %v36 = vmul.f32 %v34, %v31
    %v37 = vadd.f32 %v22, %v35
    %v38 = vadd.f32 %v22, %v36
    %s39 = sld [smem:[#allocation3 + $0x1]]
    %v40 = vstv %s39
    %v41 = vmul.f32 %v40, %v29
    %v42 = vmul.f32 %v40, %v30
    %v43 = vmul.f32 %v40, %v31
    %v44 = vmul.f32 %v40, %v32
    %vm49 = vcmask 1046528
    %v50 = vrot.slane %v41, 1
    %v51 = vrot.slane %v42, 1
    %v52 = vsel %vm49, %v50, %v51
    %v53 = vrot.slane %v43, 1
    %v54 = vrot.slane %v44, 1
    %v55 = vsel %vm49, %v53, %v54
    %v58 = vadd.f32 %v37, %v52
    %v59 = vadd.f32 %v38, %v55
    %s60 = sld [smem:[#allocation3 + $0x2]]
    %v61 = vstv %s60
    %v62 = vmul.f32 %v61, %v29
    %v63 = vmul.f32 %v61, %v30
    %v64 = vmul.f32 %v61, %v31
    %v65 = vmul.f32 %v61, %v32
    %vm70 = vcmask 1045504
    %v71 = vrot.slane %v62, 2
    %v72 = vrot.slane %v63, 2
    %v73 = vsel %vm70, %v71, %v72
    %v74 = vrot.slane %v64, 2
    %v75 = vrot.slane %v65, 2
    %v76 = vsel %vm70, %v74, %v75
    %v79 = vadd.f32 %v58, %v73
    %v80 = vadd.f32 %v59, %v76
    %s81 = sld [smem:[#allocation3 + $0x3]]
    %v82 = vstv %s81
    %v83 = vmul.f32 %v82, %v29
    %v84 = vmul.f32 %v82, %v30
    %v85 = vmul.f32 %v82, %v31
    %v86 = vmul.f32 %v82, %v32
    %vm91 = vcmask 1044480
    %v92 = vrot.slane %v83, 3
    %v93 = vrot.slane %v84, 3
    %v94 = vsel %vm91, %v92, %v93
    %v95 = vrot.slane %v85, 3
    %v96 = vrot.slane %v86, 3
    %v97 = vsel %vm91, %v95, %v96
    %v100 = vadd.f32 %v79, %v94
    %v101 = vadd.f32 %v80, %v97
    %s102 = sld [smem:[#allocation3 + $0x4]]
    %v103 = vstv %s102
    %v104 = vmul.f32 %v103, %v29
    %v105 = vmul.f32 %v103, %v30
    %v106 = vmul.f32 %v103, %v31
    %v107 = vmul.f32 %v103, %v32
    %vm112 = vcmask 1043456
    %v113 = vrot.slane %v104, 4
    %v114 = vrot.slane %v105, 4
    %v115 = vsel %vm112, %v113, %v114
    %v116 = vrot.slane %v106, 4
    %v117 = vrot.slane %v107, 4
    %v118 = vsel %vm112, %v116, %v117
    %v121 = vadd.f32 %v100, %v115
    %v122 = vadd.f32 %v101, %v118
    %s123 = sld [smem:[#allocation3 + $0x14]]
    %v124 = vstv %s123
    %v125 = vmul.f32 %v124, %v29
    %v126 = vmul.f32 %v124, %v31
    %v127 = vadd.f32 %v24, %v125
    %v128 = vadd.f32 %v24, %v126
    %s129 = sld [smem:[#allocation3 + $0x15]]
    %v130 = vstv %s129
    %v131 = vmul.f32 %v130, %v29
    %v132 = vmul.f32 %v130, %v30
    %v133 = vmul.f32 %v130, %v31
    %v134 = vmul.f32 %v130, %v32
    %v139 = vrot.slane %v131, 1
    %v140 = vrot.slane %v132, 1
    %v141 = vsel %vm49, %v139, %v140
    %v142 = vrot.slane %v133, 1
    %v143 = vrot.slane %v134, 1
    %v144 = vsel %vm49, %v142, %v143
    %v147 = vadd.f32 %v127, %v141
    %v148 = vadd.f32 %v128, %v144
    %s149 = sld [smem:[#allocation3 + $0x16]]
    %v150 = vstv %s149
    %v151 = vmul.f32 %v150, %v29
    %v152 = vmul.f32 %v150, %v30
    %v153 = vmul.f32 %v150, %v31
    %v154 = vmul.f32 %v150, %v32
    %v159 = vrot.slane %v151, 2
    %v160 = vrot.slane %v152, 2
    %v161 = vsel %vm70, %v159, %v160
    %v162 = vrot.slane %v153, 2
    %v163 = vrot.slane %v154, 2
    %v164 = vsel %vm70, %v162, %v163
    %v167 = vadd.f32 %v147, %v161
    %v168 = vadd.f32 %v148, %v164
    %s169 = sld [smem:[#allocation3 + $0x17]]
    %v170 = vstv %s169
    %v171 = vmul.f32 %v170, %v29
    %v172 = vmul.f32 %v170, %v30
    %v173 = vmul.f32 %v170, %v31
    %v174 = vmul.f32 %v170, %v32
    %v179 = vrot.slane %v171, 3
    %v180 = vrot.slane %v172, 3
    %v181 = vsel %vm91, %v179, %v180
    %v182 = vrot.slane %v173, 3
    %v183 = vrot.slane %v174, 3
    %v184 = vsel %vm91, %v182, %v183
    %v187 = vadd.f32 %v167, %v181
    %v188 = vadd.f32 %v168, %v184
    %s189 = sld [smem:[#allocation3 + $0x18]]
    %v190 = vstv %s189
    %v191 = vmul.f32 %v190, %v29
    %v192 = vmul.f32 %v190, %v30
    %v193 = vmul.f32 %v190, %v31
    %v194 = vmul.f32 %v190, %v32
    %v199 = vrot.slane %v191, 4
    %v200 = vrot.slane %v192, 4
    %v201 = vsel %vm112, %v199, %v200
    %v202 = vrot.slane %v193, 4
    %v203 = vrot.slane %v194, 4
    %v204 = vsel %vm112, %v202, %v203
    %v207 = vadd.f32 %v187, %v201
    %v208 = vadd.f32 %v188, %v204
    %s209 = sld [smem:[#allocation3 + $0x28]]
    %v210 = vstv %s209
    %v211 = vmul.f32 %v210, %v29
    %v212 = vmul.f32 %v210, %v31
    %v213 = vadd.f32 %v26, %v211
    %v214 = vadd.f32 %v26, %v212
    %s215 = sld [smem:[#allocation3 + $0x29]]
    %v216 = vstv %s215
    %v217 = vmul.f32 %v216, %v29
    %v218 = vmul.f32 %v216, %v30
    %v219 = vmul.f32 %v216, %v31
    %v220 = vmul.f32 %v216, %v32
    %v225 = vrot.slane %v217, 1
    %v226 = vrot.slane %v218, 1
    %v227 = vsel %vm49, %v225, %v226
    %v228 = vrot.slane %v219, 1
    %v229 = vrot.slane %v220, 1
    %v230 = vsel %vm49, %v228, %v229
    %v233 = vadd.f32 %v213, %v227
    %v234 = vadd.f32 %v214, %v230
    %s235 = sld [smem:[#allocation3 + $0x2a]]
    %v236 = vstv %s235
    %v237 = vmul.f32 %v236, %v29
    %v238 = vmul.f32 %v236, %v30
    %v239 = vmul.f32 %v236, %v31
    %v240 = vmul.f32 %v236, %v32
    %v245 = vrot.slane %v237, 2
    %v246 = vrot.slane %v238, 2
    %v247 = vsel %vm70, %v245, %v246
    %v248 = vrot.slane %v239, 2
    %v249 = vrot.slane %v240, 2
    %v250 = vsel %vm70, %v248, %v249
    %v253 = vadd.f32 %v233, %v247
    %v254 = vadd.f32 %v234, %v250
    %s255 = sld [smem:[#allocation3 + $0x2b]]
    %v256 = vstv %s255
    %v257 = vmul.f32 %v256, %v29
    %v258 = vmul.f32 %v256, %v30
    %v259 = vmul.f32 %v256, %v31
    %v260 = vmul.f32 %v256, %v32
    %v265 = vrot.slane %v257, 3
    %v266 = vrot.slane %v258, 3
    %v267 = vsel %vm91, %v265, %v266
    %v268 = vrot.slane %v259, 3
    %v269 = vrot.slane %v260, 3
    %v270 = vsel %vm91, %v268, %v269
    %v273 = vadd.f32 %v253, %v267
    %v274 = vadd.f32 %v254, %v270
    %s275 = sld [smem:[#allocation3 + $0x2c]]
    %v276 = vstv %s275
    %v277 = vmul.f32 %v276, %v29
    %v278 = vmul.f32 %v276, %v30
    %v279 = vmul.f32 %v276, %v31
    %v280 = vmul.f32 %v276, %v32
    %v285 = vrot.slane %v277, 4
    %v286 = vrot.slane %v278, 4
    %v287 = vsel %vm112, %v285, %v286
    %v288 = vrot.slane %v279, 4
    %v289 = vrot.slane %v280, 4
    %v290 = vsel %vm112, %v288, %v289
    %v293 = vadd.f32 %v273, %v287
    %v294 = vadd.f32 %v274, %v290
    %s295 = sld [smem:[#allocation3 + $0x3c]]
    %v296 = vstv %s295
    %v297 = vmul.f32 %v296, %v29
    %v298 = vmul.f32 %v296, %v31
    %v299 = vadd.f32 %v28, %v297
    %v300 = vadd.f32 %v28, %v298
    %s301 = sld [smem:[#allocation3 + $0x3d]]
    %v302 = vstv %s301
    %v303 = vmul.f32 %v302, %v29
    %v304 = vmul.f32 %v302, %v30
    %v305 = vmul.f32 %v302, %v31
    %v306 = vmul.f32 %v302, %v32
    %v311 = vrot.slane %v303, 1
    %v312 = vrot.slane %v304, 1
    %v313 = vsel %vm49, %v311, %v312
    %v314 = vrot.slane %v305, 1
    %v315 = vrot.slane %v306, 1
    %v316 = vsel %vm49, %v314, %v315
    %v319 = vadd.f32 %v299, %v313
    %v320 = vadd.f32 %v300, %v316
    %s321 = sld [smem:[#allocation3 + $0x3e]]
    %v322 = vstv %s321
    %v323 = vmul.f32 %v322, %v29
    %v324 = vmul.f32 %v322, %v30
    %v325 = vmul.f32 %v322, %v31
    %v326 = vmul.f32 %v322, %v32
    %v331 = vrot.slane %v323, 2
    %v332 = vrot.slane %v324, 2
    %v333 = vsel %vm70, %v331, %v332
    %v334 = vrot.slane %v325, 2
    %v335 = vrot.slane %v326, 2
    %v336 = vsel %vm70, %v334, %v335
    %v339 = vadd.f32 %v319, %v333
    %v340 = vadd.f32 %v320, %v336
    %s341 = sld [smem:[#allocation3 + $0x3f]]
    %v342 = vstv %s341
    %v343 = vmul.f32 %v342, %v29
    %v344 = vmul.f32 %v342, %v30
    %v345 = vmul.f32 %v342, %v31
    %v346 = vmul.f32 %v342, %v32
    %v351 = vrot.slane %v343, 3
    %v352 = vrot.slane %v344, 3
    %v353 = vsel %vm91, %v351, %v352
    %v354 = vrot.slane %v345, 3
    %v355 = vrot.slane %v346, 3
    %v356 = vsel %vm91, %v354, %v355
    %v359 = vadd.f32 %v339, %v353
    %v360 = vadd.f32 %v340, %v356
    %s361 = sld [smem:[#allocation3 + $0x40]]
    %v362 = vstv %s361
    %v363 = vmul.f32 %v362, %v29
    %v364 = vmul.f32 %v362, %v30
    %v365 = vmul.f32 %v362, %v31
    %v366 = vmul.f32 %v362, %v32
    %v371 = vrot.slane %v363, 4
    %v372 = vrot.slane %v364, 4
    %v373 = vsel %vm112, %v371, %v372
    %v374 = vrot.slane %v365, 4
    %v375 = vrot.slane %v366, 4
    %v376 = vsel %vm112, %v374, %v375
    %v379 = vadd.f32 %v359, %v373
    %v380 = vadd.f32 %v360, %v376
    %s381 = scalar_lea.vmem %s2, 48
    %v382 = vld [vmem:[%s381] sm:$0xff]
    %v383 = vld [vmem:[%s381 + $0x8] sm:$0xf]
    %v384 = vld [vmem:[%s381 + $0xc0] sm:$0xff]
    %v385 = vld [vmem:[%s381 + $0xc8] sm:$0xf]
    %s386 = sld [smem:[#allocation3 + $0x5]]
    %v387 = vstv %s386
    %v388 = vmul.f32 %v387, %v382
    %v389 = vmul.f32 %v387, %v384
    %v390 = vadd.f32 %v121, %v388
    %v391 = vadd.f32 %v122, %v389
    %s392 = sld [smem:[#allocation3 + $0x6]]
    %v393 = vstv %s392
    %v394 = vmul.f32 %v393, %v382
    %v395 = vmul.f32 %v393, %v383
    %v396 = vmul.f32 %v393, %v384
    %v397 = vmul.f32 %v393, %v385
    %v402 = vrot.slane %v394, 1
    %v403 = vrot.slane %v395, 1
    %v404 = vsel %vm49, %v402, %v403
    %v405 = vrot.slane %v396, 1
    %v406 = vrot.slane %v397, 1
    %v407 = vsel %vm49, %v405, %v406
    %v410 = vadd.f32 %v390, %v404
    %v411 = vadd.f32 %v391, %v407
    %s412 = sld [smem:[#allocation3 + $0x7]]
    %v413 = vstv %s412
    %v414 = vmul.f32 %v413, %v382
    %v415 = vmul.f32 %v413, %v383
    %v416 = vmul.f32 %v413, %v384
    %v417 = vmul.f32 %v413, %v385
    %v422 = vrot.slane %v414, 2
    %v423 = vrot.slane %v415, 2
    %v424 = vsel %vm70, %v422, %v423
    %v425 = vrot.slane %v416, 2
    %v426 = vrot.slane %v417, 2
    %v427 = vsel %vm70, %v425, %v426
    %v430 = vadd.f32 %v410, %v424
    %v431 = vadd.f32 %v411, %v427
    %s432 = sld [smem:[#allocation3 + $0x8]]
    %v433 = vstv %s432
    %v434 = vmul.f32 %v433, %v382
    %v435 = vmul.f32 %v433, %v383
    %v436 = vmul.f32 %v433, %v384
    %v437 = vmul.f32 %v433, %v385
    %v442 = vrot.slane %v434, 3
    %v443 = vrot.slane %v435, 3
    %v444 = vsel %vm91, %v442, %v443
    %v445 = vrot.slane %v436, 3
    %v446 = vrot.slane %v437, 3
    %v447 = vsel %vm91, %v445, %v446
    %v450 = vadd.f32 %v430, %v444
    %v451 = vadd.f32 %v431, %v447
    %s452 = sld [smem:[#allocation3 + $0x9]]
    %v453 = vstv %s452
    %v454 = vmul.f32 %v453, %v382
    %v455 = vmul.f32 %v453, %v383
    %v456 = vmul.f32 %v453, %v384
    %v457 = vmul.f32 %v453, %v385
    %v462 = vrot.slane %v454, 4
    %v463 = vrot.slane %v455, 4
    %v464 = vsel %vm112, %v462, %v463
    %v465 = vrot.slane %v456, 4
    %v466 = vrot.slane %v457, 4
    %v467 = vsel %vm112, %v465, %v466
    %v470 = vadd.f32 %v450, %v464
    %v471 = vadd.f32 %v451, %v467
    %s472 = sld [smem:[#allocation3 + $0x19]]
    %v473 = vstv %s472
    %v474 = vmul.f32 %v473, %v382
    %v475 = vmul.f32 %v473, %v384
    %v476 = vadd.f32 %v207, %v474
    %v477 = vadd.f32 %v208, %v475
    %s478 = sld [smem:[#allocation3 + $0x1a]]
    %v479 = vstv %s478
    %v480 = vmul.f32 %v479, %v382
    %v481 = vmul.f32 %v479, %v383
    %v482 = vmul.f32 %v479, %v384
    %v483 = vmul.f32 %v479, %v385
    %v488 = vrot.slane %v480, 1
    %v489 = vrot.slane %v481, 1
    %v490 = vsel %vm49, %v488, %v489
    %v491 = vrot.slane %v482, 1
    %v492 = vrot.slane %v483, 1
    %v493 = vsel %vm49, %v491, %v492
    %v496 = vadd.f32 %v476, %v490
    %v497 = vadd.f32 %v477, %v493
    %s498 = sld [smem:[#allocation3 + $0x1b]]
    %v499 = vstv %s498
    %v500 = vmul.f32 %v499, %v382
    %v501 = vmul.f32 %v499, %v383
    %v502 = vmul.f32 %v499, %v384
    %v503 = vmul.f32 %v499, %v385
    %v508 = vrot.slane %v500, 2
    %v509 = vrot.slane %v501, 2
    %v510 = vsel %vm70, %v508, %v509
    %v511 = vrot.slane %v502, 2
    %v512 = vrot.slane %v503, 2
    %v513 = vsel %vm70, %v511, %v512
    %v516 = vadd.f32 %v496, %v510
    %v517 = vadd.f32 %v497, %v513
    %s518 = sld [smem:[#allocation3 + $0x1c]]
    %v519 = vstv %s518
    %v520 = vmul.f32 %v519, %v382
    %v521 = vmul.f32 %v519, %v383
    %v522 = vmul.f32 %v519, %v384
    %v523 = vmul.f32 %v519, %v385
    %v528 = vrot.slane %v520, 3
    %v529 = vrot.slane %v521, 3
    %v530 = vsel %vm91, %v528, %v529
    %v531 = vrot.slane %v522, 3
    %v532 = vrot.slane %v523, 3
    %v533 = vsel %vm91, %v531, %v532
    %v536 = vadd.f32 %v516, %v530
    %v537 = vadd.f32 %v517, %v533
    %s538 = sld [smem:[#allocation3 + $0x1d]]
    %v539 = vstv %s538
    %v540 = vmul.f32 %v539, %v382
    %v541 = vmul.f32 %v539, %v383
    %v542 = vmul.f32 %v539, %v384
    %v543 = vmul.f32 %v539, %v385
    %v548 = vrot.slane %v540, 4
    %v549 = vrot.slane %v541, 4
    %v550 = vsel %vm112, %v548, %v549
    %v551 = vrot.slane %v542, 4
    %v552 = vrot.slane %v543, 4
    %v553 = vsel %vm112, %v551, %v552
    %v556 = vadd.f32 %v536, %v550
    %v557 = vadd.f32 %v537, %v553
    %s558 = sld [smem:[#allocation3 + $0x2d]]
    %v559 = vstv %s558
    %v560 = vmul.f32 %v559, %v382
    %v561 = vmul.f32 %v559, %v384
    %v562 = vadd.f32 %v293, %v560
    %v563 = vadd.f32 %v294, %v561
    %s564 = sld [smem:[#allocation3 + $0x2e]]
    %v565 = vstv %s564
    %v566 = vmul.f32 %v565, %v382
    %v567 = vmul.f32 %v565, %v383
    %v568 = vmul.f32 %v565, %v384
    %v569 = vmul.f32 %v565, %v385
    %v574 = vrot.slane %v566, 1
    %v575 = vrot.slane %v567, 1
    %v576 = vsel %vm49, %v574, %v575
    %v577 = vrot.slane %v568, 1
    %v578 = vrot.slane %v569, 1
    %v579 = vsel %vm49, %v577, %v578
    %v582 = vadd.f32 %v562, %v576
    %v583 = vadd.f32 %v563, %v579
    %s584 = sld [smem:[#allocation3 + $0x2f]]
    %v585 = vstv %s584
    %v586 = vmul.f32 %v585, %v382
    %v587 = vmul.f32 %v585, %v383
    %v588 = vmul.f32 %v585, %v384
    %v589 = vmul.f32 %v585, %v385
    %v594 = vrot.slane %v586, 2
    %v595 = vrot.slane %v587, 2
    %v596 = vsel %vm70, %v594, %v595
    %v597 = vrot.slane %v588, 2
    %v598 = vrot.slane %v589, 2
    %v599 = vsel %vm70, %v597, %v598
    %v602 = vadd.f32 %v582, %v596
    %v603 = vadd.f32 %v583, %v599
    %s604 = sld [smem:[#allocation3 + $0x30]]
    %v605 = vstv %s604
    %v606 = vmul.f32 %v605, %v382
    %v607 = vmul.f32 %v605, %v383
    %v608 = vmul.f32 %v605, %v384
    %v609 = vmul.f32 %v605, %v385
    %v614 = vrot.slane %v606, 3
    %v615 = vrot.slane %v607, 3
    %v616 = vsel %vm91, %v614, %v615
    %v617 = vrot.slane %v608, 3
    %v618 = vrot.slane %v609, 3
    %v619 = vsel %vm91, %v617, %v618
    %v622 = vadd.f32 %v602, %v616
    %v623 = vadd.f32 %v603, %v619
    %s624 = sld [smem:[#allocation3 + $0x31]]
    %v625 = vstv %s624
    %v626 = vmul.f32 %v625, %v382
    %v627 = vmul.f32 %v625, %v383
    %v628 = vmul.f32 %v625, %v384
    %v629 = vmul.f32 %v625, %v385
    %v634 = vrot.slane %v626, 4
    %v635 = vrot.slane %v627, 4
    %v636 = vsel %vm112, %v634, %v635
    %v637 = vrot.slane %v628, 4
    %v638 = vrot.slane %v629, 4
    %v639 = vsel %vm112, %v637, %v638
    %v642 = vadd.f32 %v622, %v636
    %v643 = vadd.f32 %v623, %v639
    %s644 = sld [smem:[#allocation3 + $0x41]]
    %v645 = vstv %s644
    %v646 = vmul.f32 %v645, %v382
    %v647 = vmul.f32 %v645, %v384
    %v648 = vadd.f32 %v379, %v646
    %v649 = vadd.f32 %v380, %v647
    %s650 = sld [smem:[#allocation3 + $0x42]]
    %v651 = vstv %s650
    %v652 = vmul.f32 %v651, %v382
    %v653 = vmul.f32 %v651, %v383
    %v654 = vmul.f32 %v651, %v384
    %v655 = vmul.f32 %v651, %v385
    %v660 = vrot.slane %v652, 1
    %v661 = vrot.slane %v653, 1
    %v662 = vsel %vm49, %v660, %v661
    %v663 = vrot.slane %v654, 1
    %v664 = vrot.slane %v655, 1
    %v665 = vsel %vm49, %v663, %v664
    %v668 = vadd.f32 %v648, %v662
    %v669 = vadd.f32 %v649, %v665
    %s670 = sld [smem:[#allocation3 + $0x43]]
    %v671 = vstv %s670
    %v672 = vmul.f32 %v671, %v382
    %v673 = vmul.f32 %v671, %v383
    %v674 = vmul.f32 %v671, %v384
    %v675 = vmul.f32 %v671, %v385
    %v680 = vrot.slane %v672, 2
    %v681 = vrot.slane %v673, 2
    %v682 = vsel %vm70, %v680, %v681
    %v683 = vrot.slane %v674, 2
    %v684 = vrot.slane %v675, 2
    %v685 = vsel %vm70, %v683, %v684
    %v688 = vadd.f32 %v668, %v682
    %v689 = vadd.f32 %v669, %v685
    %s690 = sld [smem:[#allocation3 + $0x44]]
    %v691 = vstv %s690
    %v692 = vmul.f32 %v691, %v382
    %v693 = vmul.f32 %v691, %v383
    %v694 = vmul.f32 %v691, %v384
    %v695 = vmul.f32 %v691, %v385
    %v700 = vrot.slane %v692, 3
    %v701 = vrot.slane %v693, 3
    %v702 = vsel %vm91, %v700, %v701
    %v703 = vrot.slane %v694, 3
    %v704 = vrot.slane %v695, 3
    %v705 = vsel %vm91, %v703, %v704
    %v708 = vadd.f32 %v688, %v702
    %v709 = vadd.f32 %v689, %v705
    %s710 = sld [smem:[#allocation3 + $0x45]]
    %v711 = vstv %s710
    %v712 = vmul.f32 %v711, %v382
    %v713 = vmul.f32 %v711, %v383
    %v714 = vmul.f32 %v711, %v384
    %v715 = vmul.f32 %v711, %v385
    %v720 = vrot.slane %v712, 4
    %v721 = vrot.slane %v713, 4
    %v722 = vsel %vm112, %v720, %v721
    %v723 = vrot.slane %v714, 4
    %v724 = vrot.slane %v715, 4
    %v725 = vsel %vm112, %v723, %v724
    %v728 = vadd.f32 %v708, %v722
    %v729 = vadd.f32 %v709, %v725
    %s730 = scalar_lea.vmem %s2, 96
    %v731 = vld [vmem:[%s730] sm:$0xff]
    %v732 = vld [vmem:[%s730 + $0x8] sm:$0xf]
    %v733 = vld [vmem:[%s730 + $0xc0] sm:$0xff]
    %v734 = vld [vmem:[%s730 + $0xc8] sm:$0xf]
    %s735 = sld [smem:[#allocation3 + $0xa]]
    %v736 = vstv %s735
    %v737 = vmul.f32 %v736, %v731
    %v738 = vmul.f32 %v736, %v733
    %v739 = vadd.f32 %v470, %v737
    %v740 = vadd.f32 %v471, %v738
    %s741 = sld [smem:[#allocation3 + $0xb]]
    %v742 = vstv %s741
    %v743 = vmul.f32 %v742, %v731
    %v744 = vmul.f32 %v742, %v732
    %v745 = vmul.f32 %v742, %v733
    %v746 = vmul.f32 %v742, %v734
    %v751 = vrot.slane %v743, 1
    %v752 = vrot.slane %v744, 1
    %v753 = vsel %vm49, %v751, %v752
    %v754 = vrot.slane %v745, 1
    %v755 = vrot.slane %v746, 1
    %v756 = vsel %vm49, %v754, %v755
    %v759 = vadd.f32 %v739, %v753
    %v760 = vadd.f32 %v740, %v756
    %s761 = sld [smem:[#allocation3 + $0xc]]
    %v762 = vstv %s761
    %v763 = vmul.f32 %v762, %v731
    %v764 = vmul.f32 %v762, %v732
    %v765 = vmul.f32 %v762, %v733
    %v766 = vmul.f32 %v762, %v734
    %v771 = vrot.slane %v763, 2
    %v772 = vrot.slane %v764, 2
    %v773 = vsel %vm70, %v771, %v772
    %v774 = vrot.slane %v765, 2
    %v775 = vrot.slane %v766, 2
    %v776 = vsel %vm70, %v774, %v775
    %v779 = vadd.f32 %v759, %v773
    %v780 = vadd.f32 %v760, %v776
    %s781 = sld [smem:[#allocation3 + $0xd]]
    %v782 = vstv %s781
    %v783 = vmul.f32 %v782, %v731
    %v784 = vmul.f32 %v782, %v732
    %v785 = vmul.f32 %v782, %v733
    %v786 = vmul.f32 %v782, %v734
    %v791 = vrot.slane %v783, 3
    %v792 = vrot.slane %v784, 3
    %v793 = vsel %vm91, %v791, %v792
    %v794 = vrot.slane %v785, 3
    %v795 = vrot.slane %v786, 3
    %v796 = vsel %vm91, %v794, %v795
    %v799 = vadd.f32 %v779, %v793
    %v800 = vadd.f32 %v780, %v796
    %s801 = sld [smem:[#allocation3 + $0xe]]
    %v802 = vstv %s801
    %v803 = vmul.f32 %v802, %v731
    %v804 = vmul.f32 %v802, %v732
    %v805 = vmul.f32 %v802, %v733
    %v806 = vmul.f32 %v802, %v734
    %v811 = vrot.slane %v803, 4
    %v812 = vrot.slane %v804, 4
    %v813 = vsel %vm112, %v811, %v812
    %v814 = vrot.slane %v805, 4
    %v815 = vrot.slane %v806, 4
    %v816 = vsel %vm112, %v814, %v815
    %v819 = vadd.f32 %v799, %v813
    %v820 = vadd.f32 %v800, %v816
    %s821 = sld [smem:[#allocation3 + $0x1e]]
    %v822 = vstv %s821
    %v823 = vmul.f32 %v822, %v731
    %v824 = vmul.f32 %v822, %v733
    %v825 = vadd.f32 %v556, %v823
    %v826 = vadd.f32 %v557, %v824
    %s827 = sld [smem:[#allocation3 + $0x1f]]
    %v828 = vstv %s827
    %v829 = vmul.f32 %v828, %v731
    %v830 = vmul.f32 %v828, %v732
    %v831 = vmul.f32 %v828, %v733
    %v832 = vmul.f32 %v828, %v734
    %v837 = vrot.slane %v829, 1
    %v838 = vrot.slane %v830, 1
    %v839 = vsel %vm49, %v837, %v838
    %v840 = vrot.slane %v831, 1
    %v841 = vrot.slane %v832, 1
    %v842 = vsel %vm49, %v840, %v841
    %v845 = vadd.f32 %v825, %v839
    %v846 = vadd.f32 %v826, %v842
    %s847 = sld [smem:[#allocation3 + $0x20]]
    %v848 = vstv %s847
    %v849 = vmul.f32 %v848, %v731
    %v850 = vmul.f32 %v848, %v732
    %v851 = vmul.f32 %v848, %v733
    %v852 = vmul.f32 %v848, %v734
    %v857 = vrot.slane %v849, 2
    %v858 = vrot.slane %v850, 2
    %v859 = vsel %vm70, %v857, %v858
    %v860 = vrot.slane %v851, 2
    %v861 = vrot.slane %v852, 2
    %v862 = vsel %vm70, %v860, %v861
    %v865 = vadd.f32 %v845, %v859
    %v866 = vadd.f32 %v846, %v862
    %s867 = sld [smem:[#allocation3 + $0x21]]
    %v868 = vstv %s867
    %v869 = vmul.f32 %v868, %v731
    %v870 = vmul.f32 %v868, %v732
    %v871 = vmul.f32 %v868, %v733
    %v872 = vmul.f32 %v868, %v734
    %v877 = vrot.slane %v869, 3
    %v878 = vrot.slane %v870, 3
    %v879 = vsel %vm91, %v877, %v878
    %v880 = vrot.slane %v871, 3
    %v881 = vrot.slane %v872, 3
    %v882 = vsel %vm91, %v880, %v881
    %v885 = vadd.f32 %v865, %v879
    %v886 = vadd.f32 %v866, %v882
    %s887 = sld [smem:[#allocation3 + $0x22]]
    %v888 = vstv %s887
    %v889 = vmul.f32 %v888, %v731
    %v890 = vmul.f32 %v888, %v732
    %v891 = vmul.f32 %v888, %v733
    %v892 = vmul.f32 %v888, %v734
    %v897 = vrot.slane %v889, 4
    %v898 = vrot.slane %v890, 4
    %v899 = vsel %vm112, %v897, %v898
    %v900 = vrot.slane %v891, 4
    %v901 = vrot.slane %v892, 4
    %v902 = vsel %vm112, %v900, %v901
    %v905 = vadd.f32 %v885, %v899
    %v906 = vadd.f32 %v886, %v902
    %s907 = sld [smem:[#allocation3 + $0x32]]
    %v908 = vstv %s907
    %v909 = vmul.f32 %v908, %v731
    %v910 = vmul.f32 %v908, %v733
    %v911 = vadd.f32 %v642, %v909
    %v912 = vadd.f32 %v643, %v910
    %s913 = sld [smem:[#allocation3 + $0x33]]
    %v914 = vstv %s913
    %v915 = vmul.f32 %v914, %v731
    %v916 = vmul.f32 %v914, %v732
    %v917 = vmul.f32 %v914, %v733
    %v918 = vmul.f32 %v914, %v734
    %v923 = vrot.slane %v915, 1
    %v924 = vrot.slane %v916, 1
    %v925 = vsel %vm49, %v923, %v924
    %v926 = vrot.slane %v917, 1
    %v927 = vrot.slane %v918, 1
    %v928 = vsel %vm49, %v926, %v927
    %v931 = vadd.f32 %v911, %v925
    %v932 = vadd.f32 %v912, %v928
    %s933 = sld [smem:[#allocation3 + $0x34]]
    %v934 = vstv %s933
    %v935 = vmul.f32 %v934, %v731
    %v936 = vmul.f32 %v934, %v732
    %v937 = vmul.f32 %v934, %v733
    %v938 = vmul.f32 %v934, %v734
    %v943 = vrot.slane %v935, 2
    %v944 = vrot.slane %v936, 2
    %v945 = vsel %vm70, %v943, %v944
    %v946 = vrot.slane %v937, 2
    %v947 = vrot.slane %v938, 2
    %v948 = vsel %vm70, %v946, %v947
    %v951 = vadd.f32 %v931, %v945
    %v952 = vadd.f32 %v932, %v948
    %s953 = sld [smem:[#allocation3 + $0x35]]
    %v954 = vstv %s953
    %v955 = vmul.f32 %v954, %v731
    %v956 = vmul.f32 %v954, %v732
    %v957 = vmul.f32 %v954, %v733
    %v958 = vmul.f32 %v954, %v734
    %v963 = vrot.slane %v955, 3
    %v964 = vrot.slane %v956, 3
    %v965 = vsel %vm91, %v963, %v964
    %v966 = vrot.slane %v957, 3
    %v967 = vrot.slane %v958, 3
    %v968 = vsel %vm91, %v966, %v967
    %v971 = vadd.f32 %v951, %v965
    %v972 = vadd.f32 %v952, %v968
    %s973 = sld [smem:[#allocation3 + $0x36]]
    %v974 = vstv %s973
    %v975 = vmul.f32 %v974, %v731
    %v976 = vmul.f32 %v974, %v732
    %v977 = vmul.f32 %v974, %v733
    %v978 = vmul.f32 %v974, %v734
    %v983 = vrot.slane %v975, 4
    %v984 = vrot.slane %v976, 4
    %v985 = vsel %vm112, %v983, %v984
    %v986 = vrot.slane %v977, 4
    %v987 = vrot.slane %v978, 4
    %v988 = vsel %vm112, %v986, %v987
    %v991 = vadd.f32 %v971, %v985
    %v992 = vadd.f32 %v972, %v988
    %s993 = sld [smem:[#allocation3 + $0x46]]
    %v994 = vstv %s993
    %v995 = vmul.f32 %v994, %v731
    %v996 = vmul.f32 %v994, %v733
    %v997 = vadd.f32 %v728, %v995
    %v998 = vadd.f32 %v729, %v996
    %s999 = sld [smem:[#allocation3 + $0x47]]
    %v1000 = vstv %s999
    %v1001 = vmul.f32 %v1000, %v731
    %v1002 = vmul.f32 %v1000, %v732
    %v1003 = vmul.f32 %v1000, %v733
    %v1004 = vmul.f32 %v1000, %v734
    %v1009 = vrot.slane %v1001, 1
    %v1010 = vrot.slane %v1002, 1
    %v1011 = vsel %vm49, %v1009, %v1010
    %v1012 = vrot.slane %v1003, 1
    %v1013 = vrot.slane %v1004, 1
    %v1014 = vsel %vm49, %v1012, %v1013
    %v1017 = vadd.f32 %v997, %v1011
    %v1018 = vadd.f32 %v998, %v1014
    %s1019 = sld [smem:[#allocation3 + $0x48]]
    %v1020 = vstv %s1019
    %v1021 = vmul.f32 %v1020, %v731
    %v1022 = vmul.f32 %v1020, %v732
    %v1023 = vmul.f32 %v1020, %v733
    %v1024 = vmul.f32 %v1020, %v734
    %v1029 = vrot.slane %v1021, 2
    %v1030 = vrot.slane %v1022, 2
    %v1031 = vsel %vm70, %v1029, %v1030
    %v1032 = vrot.slane %v1023, 2
    %v1033 = vrot.slane %v1024, 2
    %v1034 = vsel %vm70, %v1032, %v1033
    %v1037 = vadd.f32 %v1017, %v1031
    %v1038 = vadd.f32 %v1018, %v1034
    %s1039 = sld [smem:[#allocation3 + $0x49]]
    %v1040 = vstv %s1039
    %v1041 = vmul.f32 %v1040, %v731
    %v1042 = vmul.f32 %v1040, %v732
    %v1043 = vmul.f32 %v1040, %v733
    %v1044 = vmul.f32 %v1040, %v734
    %v1049 = vrot.slane %v1041, 3
    %v1050 = vrot.slane %v1042, 3
    %v1051 = vsel %vm91, %v1049, %v1050
    %v1052 = vrot.slane %v1043, 3
    %v1053 = vrot.slane %v1044, 3
    %v1054 = vsel %vm91, %v1052, %v1053
    %v1057 = vadd.f32 %v1037, %v1051
    %v1058 = vadd.f32 %v1038, %v1054
    %s1059 = sld [smem:[#allocation3 + $0x4a]]
    %v1060 = vstv %s1059
    %v1061 = vmul.f32 %v1060, %v731
    %v1062 = vmul.f32 %v1060, %v732
    %v1063 = vmul.f32 %v1060, %v733
    %v1064 = vmul.f32 %v1060, %v734
    %v1069 = vrot.slane %v1061, 4
    %v1070 = vrot.slane %v1062, 4
    %v1071 = vsel %vm112, %v1069, %v1070
    %v1072 = vrot.slane %v1063, 4
    %v1073 = vrot.slane %v1064, 4
    %v1074 = vsel %vm112, %v1072, %v1073
    %v1077 = vadd.f32 %v1057, %v1071
    %v1078 = vadd.f32 %v1058, %v1074
    %s1079 = scalar_lea.vmem %s2, 144
    %v1080 = vld [vmem:[%s1079] sm:$0xff]
    %v1081 = vld [vmem:[%s1079 + $0x8] sm:$0xf]
    %v1082 = vld [vmem:[%s1079 + $0xc0] sm:$0xff]
    %v1083 = vld [vmem:[%s1079 + $0xc8] sm:$0xf]
    %s1084 = sld [smem:[#allocation3 + $0xf]]
    %v1085 = vstv %s1084
    %v1086 = vmul.f32 %v1085, %v1080
    %v1087 = vmul.f32 %v1085, %v1082
    %v1088 = vadd.f32 %v819, %v1086
    %v1089 = vadd.f32 %v820, %v1087
    %s1090 = sld [smem:[#allocation3 + $0x10]]
    %v1091 = vstv %s1090
    %v1092 = vmul.f32 %v1091, %v1080
    %v1093 = vmul.f32 %v1091, %v1081
    %v1094 = vmul.f32 %v1091, %v1082
    %v1095 = vmul.f32 %v1091, %v1083
    %v1100 = vrot.slane %v1092, 1
    %v1101 = vrot.slane %v1093, 1
    %v1102 = vsel %vm49, %v1100, %v1101
    %v1103 = vrot.slane %v1094, 1
    %v1104 = vrot.slane %v1095, 1
    %v1105 = vsel %vm49, %v1103, %v1104
    %v1108 = vadd.f32 %v1088, %v1102
    %v1109 = vadd.f32 %v1089, %v1105
    %s1110 = sld [smem:[#allocation3 + $0x11]]
    %v1111 = vstv %s1110
    %v1112 = vmul.f32 %v1111, %v1080
    %v1113 = vmul.f32 %v1111, %v1081
    %v1114 = vmul.f32 %v1111, %v1082
    %v1115 = vmul.f32 %v1111, %v1083
    %v1120 = vrot.slane %v1112, 2
    %v1121 = vrot.slane %v1113, 2
    %v1122 = vsel %vm70, %v1120, %v1121
    %v1123 = vrot.slane %v1114, 2
    %v1124 = vrot.slane %v1115, 2
    %v1125 = vsel %vm70, %v1123, %v1124
    %v1128 = vadd.f32 %v1108, %v1122
    %v1129 = vadd.f32 %v1109, %v1125
    %s1130 = sld [smem:[#allocation3 + $0x12]]
    %v1131 = vstv %s1130
    %v1132 = vmul.f32 %v1131, %v1080
    %v1133 = vmul.f32 %v1131, %v1081
    %v1134 = vmul.f32 %v1131, %v1082
    %v1135 = vmul.f32 %v1131, %v1083
    %v1140 = vrot.slane %v1132, 3
    %v1141 = vrot.slane %v1133, 3
    %v1142 = vsel %vm91, %v1140, %v1141
    %v1143 = vrot.slane %v1134, 3
    %v1144 = vrot.slane %v1135, 3
    %v1145 = vsel %vm91, %v1143, %v1144
    %v1148 = vadd.f32 %v1128, %v1142
    %v1149 = vadd.f32 %v1129, %v1145
    %s1150 = sld [smem:[#allocation3 + $0x13]]
    %v1151 = vstv %s1150
    %v1152 = vmul.f32 %v1151, %v1080
    %v1153 = vmul.f32 %v1151, %v1081
    %v1154 = vmul.f32 %v1151, %v1082
    %v1155 = vmul.f32 %v1151, %v1083
    %v1160 = vrot.slane %v1152, 4
    %v1161 = vrot.slane %v1153, 4
    %v1162 = vsel %vm112, %v1160, %v1161
    %v1163 = vrot.slane %v1154, 4
    %v1164 = vrot.slane %v1155, 4
    %v1165 = vsel %vm112, %v1163, %v1164
    %v1168 = vadd.f32 %v1148, %v1162
    %v1169 = vadd.f32 %v1149, %v1165
    %s1170 = sld [smem:[#allocation3 + $0x23]]
    %v1171 = vstv %s1170
    %v1172 = vmul.f32 %v1171, %v1080
    %v1173 = vmul.f32 %v1171, %v1082
    %v1174 = vadd.f32 %v905, %v1172
    %v1175 = vadd.f32 %v906, %v1173
    %s1176 = sld [smem:[#allocation3 + $0x24]]
    %v1177 = vstv %s1176
    %v1178 = vmul.f32 %v1177, %v1080
    %v1179 = vmul.f32 %v1177, %v1081
    %v1180 = vmul.f32 %v1177, %v1082
    %v1181 = vmul.f32 %v1177, %v1083
    %v1186 = vrot.slane %v1178, 1
    %v1187 = vrot.slane %v1179, 1
    %v1188 = vsel %vm49, %v1186, %v1187
    %v1189 = vrot.slane %v1180, 1
    %v1190 = vrot.slane %v1181, 1
    %v1191 = vsel %vm49, %v1189, %v1190
    %v1194 = vadd.f32 %v1174, %v1188
    %v1195 = vadd.f32 %v1175, %v1191
    %s1196 = sld [smem:[#allocation3 + $0x25]]
    %v1197 = vstv %s1196
    %v1198 = vmul.f32 %v1197, %v1080
    %v1199 = vmul.f32 %v1197, %v1081
    %v1200 = vmul.f32 %v1197, %v1082
    %v1201 = vmul.f32 %v1197, %v1083
    %v1206 = vrot.slane %v1198, 2
    %v1207 = vrot.slane %v1199, 2
    %v1208 = vsel %vm70, %v1206, %v1207
    %v1209 = vrot.slane %v1200, 2
    %v1210 = vrot.slane %v1201, 2
    %v1211 = vsel %vm70, %v1209, %v1210
    %v1214 = vadd.f32 %v1194, %v1208
    %v1215 = vadd.f32 %v1195, %v1211
    %s1216 = sld [smem:[#allocation3 + $0x26]]
    %v1217 = vstv %s1216
    %v1218 = vmul.f32 %v1217, %v1080
    %v1219 = vmul.f32 %v1217, %v1081
    %v1220 = vmul.f32 %v1217, %v1082
    %v1221 = vmul.f32 %v1217, %v1083
    %v1226 = vrot.slane %v1218, 3
    %v1227 = vrot.slane %v1219, 3
    %v1228 = vsel %vm91, %v1226, %v1227
    %v1229 = vrot.slane %v1220, 3
    %v1230 = vrot.slane %v1221, 3
    %v1231 = vsel %vm91, %v1229, %v1230
    %v1234 = vadd.f32 %v1214, %v1228
    %v1235 = vadd.f32 %v1215, %v1231
    %s1236 = sld [smem:[#allocation3 + $0x27]]
    %v1237 = vstv %s1236
    %v1238 = vmul.f32 %v1237, %v1080
    %v1239 = vmul.f32 %v1237, %v1081
    %v1240 = vmul.f32 %v1237, %v1082
    %v1241 = vmul.f32 %v1237, %v1083
    %v1246 = vrot.slane %v1238, 4
    %v1247 = vrot.slane %v1239, 4
    %v1248 = vsel %vm112, %v1246, %v1247
    %v1249 = vrot.slane %v1240, 4
    %v1250 = vrot.slane %v1241, 4
    %v1251 = vsel %vm112, %v1249, %v1250
    %v1254 = vadd.f32 %v1234, %v1248
    %v1255 = vadd.f32 %v1235, %v1251
    %s1256 = sld [smem:[#allocation3 + $0x37]]
    %v1257 = vstv %s1256
    %v1258 = vmul.f32 %v1257, %v1080
    %v1259 = vmul.f32 %v1257, %v1082
    %v1260 = vadd.f32 %v991, %v1258
    %v1261 = vadd.f32 %v992, %v1259
    %s1262 = sld [smem:[#allocation3 + $0x38]]
    %v1263 = vstv %s1262
    %v1264 = vmul.f32 %v1263, %v1080
    %v1265 = vmul.f32 %v1263, %v1081
    %v1266 = vmul.f32 %v1263, %v1082
    %v1267 = vmul.f32 %v1263, %v1083
    %v1272 = vrot.slane %v1264, 1
    %v1273 = vrot.slane %v1265, 1
    %v1274 = vsel %vm49, %v1272, %v1273
    %v1275 = vrot.slane %v1266, 1
    %v1276 = vrot.slane %v1267, 1
    %v1277 = vsel %vm49, %v1275, %v1276
    %v1280 = vadd.f32 %v1260, %v1274
    %v1281 = vadd.f32 %v1261, %v1277
    %s1282 = sld [smem:[#allocation3 + $0x39]]
    %v1283 = vstv %s1282
    %v1284 = vmul.f32 %v1283, %v1080
    %v1285 = vmul.f32 %v1283, %v1081
    %v1286 = vmul.f32 %v1283, %v1082
    %v1287 = vmul.f32 %v1283, %v1083
    %v1292 = vrot.slane %v1284, 2
    %v1293 = vrot.slane %v1285, 2
    %v1294 = vsel %vm70, %v1292, %v1293
    %v1295 = vrot.slane %v1286, 2
    %v1296 = vrot.slane %v1287, 2
    %v1297 = vsel %vm70, %v1295, %v1296
    %v1300 = vadd.f32 %v1280, %v1294
    %v1301 = vadd.f32 %v1281, %v1297
    %s1302 = sld [smem:[#allocation3 + $0x3a]]
    %v1303 = vstv %s1302
    %v1304 = vmul.f32 %v1303, %v1080
    %v1305 = vmul.f32 %v1303, %v1081
    %v1306 = vmul.f32 %v1303, %v1082
    %v1307 = vmul.f32 %v1303, %v1083
    %v1312 = vrot.slane %v1304, 3
    %v1313 = vrot.slane %v1305, 3
    %v1314 = vsel %vm91, %v1312, %v1313
    %v1315 = vrot.slane %v1306, 3
    %v1316 = vrot.slane %v1307, 3
    %v1317 = vsel %vm91, %v1315, %v1316
    %v1320 = vadd.f32 %v1300, %v1314
    %v1321 = vadd.f32 %v1301, %v1317
    %s1322 = sld [smem:[#allocation3 + $0x3b]]
    %v1323 = vstv %s1322
    %v1324 = vmul.f32 %v1323, %v1080
    %v1325 = vmul.f32 %v1323, %v1081
    %v1326 = vmul.f32 %v1323, %v1082
    %v1327 = vmul.f32 %v1323, %v1083
    %v1332 = vrot.slane %v1324, 4
    %v1333 = vrot.slane %v1325, 4
    %v1334 = vsel %vm112, %v1332, %v1333
    %v1335 = vrot.slane %v1326, 4
    %v1336 = vrot.slane %v1327, 4
    %v1337 = vsel %vm112, %v1335, %v1336
    %v1340 = vadd.f32 %v1320, %v1334
    %v1341 = vadd.f32 %v1321, %v1337
    %s1342 = sld [smem:[#allocation3 + $0x4b]]
    %v1343 = vstv %s1342
    %v1344 = vmul.f32 %v1343, %v1080
    %v1345 = vmul.f32 %v1343, %v1082
    %v1346 = vadd.f32 %v1077, %v1344
    %v1347 = vadd.f32 %v1078, %v1345
    %s1348 = sld [smem:[#allocation3 + $0x4c]]
    %v1349 = vstv %s1348
    %v1350 = vmul.f32 %v1349, %v1080
    %v1351 = vmul.f32 %v1349, %v1081
    %v1352 = vmul.f32 %v1349, %v1082
    %v1353 = vmul.f32 %v1349, %v1083
    %v1358 = vrot.slane %v1350, 1
    %v1359 = vrot.slane %v1351, 1
    %v1360 = vsel %vm49, %v1358, %v1359
    %v1361 = vrot.slane %v1352, 1
    %v1362 = vrot.slane %v1353, 1
    %v1363 = vsel %vm49, %v1361, %v1362
    %v1366 = vadd.f32 %v1346, %v1360
    %v1367 = vadd.f32 %v1347, %v1363
    %s1368 = sld [smem:[#allocation3 + $0x4d]]
    %v1369 = vstv %s1368
    %v1370 = vmul.f32 %v1369, %v1080
    %v1371 = vmul.f32 %v1369, %v1081
    %v1372 = vmul.f32 %v1369, %v1082
    %v1373 = vmul.f32 %v1369, %v1083
    %v1378 = vrot.slane %v1370, 2
    %v1379 = vrot.slane %v1371, 2
    %v1380 = vsel %vm70, %v1378, %v1379
    %v1381 = vrot.slane %v1372, 2
    %v1382 = vrot.slane %v1373, 2
    %v1383 = vsel %vm70, %v1381, %v1382
    %v1386 = vadd.f32 %v1366, %v1380
    %v1387 = vadd.f32 %v1367, %v1383
    %s1388 = sld [smem:[#allocation3 + $0x4e]]
    %v1389 = vstv %s1388
    %v1390 = vmul.f32 %v1389, %v1080
    %v1391 = vmul.f32 %v1389, %v1081
    %v1392 = vmul.f32 %v1389, %v1082
    %v1393 = vmul.f32 %v1389, %v1083
    %v1398 = vrot.slane %v1390, 3
    %v1399 = vrot.slane %v1391, 3
    %v1400 = vsel %vm91, %v1398, %v1399
    %v1401 = vrot.slane %v1392, 3
    %v1402 = vrot.slane %v1393, 3
    %v1403 = vsel %vm91, %v1401, %v1402
    %v1406 = vadd.f32 %v1386, %v1400
    %v1407 = vadd.f32 %v1387, %v1403
    %s1408 = sld [smem:[#allocation3 + $0x4f]]
    %v1409 = vstv %s1408
    %v1410 = vmul.f32 %v1409, %v1080
    %v1411 = vmul.f32 %v1409, %v1081
    %v1412 = vmul.f32 %v1409, %v1082
    %v1413 = vmul.f32 %v1409, %v1083
    %v1418 = vrot.slane %v1410, 4
    %v1419 = vrot.slane %v1411, 4
    %v1420 = vsel %vm112, %v1418, %v1419
    %v1421 = vrot.slane %v1412, 4
    %v1422 = vrot.slane %v1413, 4
    %v1423 = vsel %vm112, %v1421, %v1422
    %v1426 = vadd.f32 %v1406, %v1420
    %v1427 = vadd.f32 %v1407, %v1423
    %1428 = vst [vmem:[#allocation5] sm:$0xff] %v1168
    %1429 = vst [vmem:[#allocation5 + $0x60] sm:$0xff] %v1169
    %s1430 = scalar_lea.vmem [#allocation5], 8
    %1431 = vst [vmem:[%s1430] sm:$0xff] %v1254
    %1432 = vst [vmem:[%s1430 + $0x60] sm:$0xff] %v1255
    %s1433 = scalar_lea.vmem [#allocation5], 16
    %1434 = vst [vmem:[%s1433] sm:$0xff] %v1340
    %1435 = vst [vmem:[%s1433 + $0x60] sm:$0xff] %v1341
    %s1436 = scalar_lea.vmem [#allocation5], 24
    %1437 = vst [vmem:[%s1436] sm:$0xff] %v1426
    %1438 = vst [vmem:[%s1436 + $0x60] sm:$0xff] %v1427
    %s1439 = sld [smem:[#allocation4 + $0x80]]
    %v1440 = vstv %s1439
    %s1441 = sld [smem:[#allocation4 + $0x81]]
    %v1442 = vstv %s1441
    %s1443 = sld [smem:[#allocation4 + $0x82]]
    %v1444 = vstv %s1443
    %s1445 = sld [smem:[#allocation4 + $0x83]]
    %v1446 = vstv %s1445
    %s1447 = scalar_lea.vmem %s2, 16
    %v1448 = vld [vmem:[%s1447] sm:$0xff]
    %v1449 = vld [vmem:[%s1447 + $0x8] sm:$0xf]
    %v1450 = vld [vmem:[%s1447 + $0xc0] sm:$0xff]
    %v1451 = vld [vmem:[%s1447 + $0xc8] sm:$0xf]
    %s1452 = sld [smem:[#allocation3 + $0x81]]
    %v1453 = vstv %s1452
    %v1454 = vmul.f32 %v1453, %v1448
    %v1455 = vmul.f32 %v1453, %v1449
    %v1456 = vmul.f32 %v1453, %v1450
    %v1457 = vmul.f32 %v1453, %v1451
    %v1458 = vadd.f32 %v1440, %v1454
    %v1459 = vadd.f32 %v1440, %v1455
    %v1460 = vadd.f32 %v1440, %v1456
    %v1461 = vadd.f32 %v1440, %v1457
    %s1462 = sld [smem:[#allocation3 + $0x82]]
    %v1463 = vstv %s1462
    %v1464 = vmul.f32 %v1463, %v1448
    %v1465 = vmul.f32 %v1463, %v1449
    %v1466 = vmul.f32 %v1463, %v1450
    %v1467 = vmul.f32 %v1463, %v1451
    %v1472 = vrot.slane %v1464, 1
    %v1473 = vrot.slane %v1465, 1
    %v1474 = vsel %vm49, %v1472, %v1473
    %v1475 = vrot.slane %v1466, 1
    %v1476 = vrot.slane %v1467, 1
    %v1477 = vsel %vm49, %v1475, %v1476
    %v1482 = vadd.f32 %v1458, %v1474
    %v1483 = vadd.f32 %v1459, %v1473
    %v1484 = vadd.f32 %v1460, %v1477
    %v1485 = vadd.f32 %v1461, %v1476
    %s1486 = sld [smem:[#allocation3 + $0x83]]
    %v1487 = vstv %s1486
    %v1488 = vmul.f32 %v1487, %v1448
    %v1489 = vmul.f32 %v1487, %v1449
    %v1490 = vmul.f32 %v1487, %v1450
    %v1491 = vmul.f32 %v1487, %v1451
    %v1496 = vrot.slane %v1488, 2
    %v1497 = vrot.slane %v1489, 2
    %v1498 = vsel %vm70, %v1496, %v1497
    %v1499 = vrot.slane %v1490, 2
    %v1500 = vrot.slane %v1491, 2
    %v1501 = vsel %vm70, %v1499, %v1500
    %v1506 = vadd.f32 %v1482, %v1498
    %v1507 = vadd.f32 %v1483, %v1497
    %v1508 = vadd.f32 %v1484, %v1501
    %v1509 = vadd.f32 %v1485, %v1500
    %s1510 = sld [smem:[#allocation3 + $0x95]]
    %v1511 = vstv %s1510
    %v1512 = vmul.f32 %v1511, %v1448
    %v1513 = vmul.f32 %v1511, %v1449
    %v1514 = vmul.f32 %v1511, %v1450
    %v1515 = vmul.f32 %v1511, %v1451
    %v1516 = vadd.f32 %v1442, %v1512
    %v1517 = vadd.f32 %v1442, %v1513
    %v1518 = vadd.f32 %v1442, %v1514
    %v1519 = vadd.f32 %v1442, %v1515
    %s1520 = sld [smem:[#allocation3 + $0x96]]
    %v1521 = vstv %s1520
    %v1522 = vmul.f32 %v1521, %v1448
    %v1523 = vmul.f32 %v1521, %v1449
    %v1524 = vmul.f32 %v1521, %v1450
    %v1525 = vmul.f32 %v1521, %v1451
    %v1530 = vrot.slane %v1522, 1
    %v1531 = vrot.slane %v1523, 1
    %v1532 = vsel %vm49, %v1530, %v1531
    %v1533 = vrot.slane %v1524, 1
    %v1534 = vrot.slane %v1525, 1
    %v1535 = vsel %vm49, %v1533, %v1534
    %v1540 = vadd.f32 %v1516, %v1532
    %v1541 = vadd.f32 %v1517, %v1531
    %v1542 = vadd.f32 %v1518, %v1535
    %v1543 = vadd.f32 %v1519, %v1534
    %s1544 = sld [smem:[#allocation3 + $0x97]]
    %v1545 = vstv %s1544
    %v1546 = vmul.f32 %v1545, %v1448
    %v1547 = vmul.f32 %v1545, %v1449
    %v1548 = vmul.f32 %v1545, %v1450
    %v1549 = vmul.f32 %v1545, %v1451
    %v1554 = vrot.slane %v1546, 2
    %v1555 = vrot.slane %v1547, 2
    %v1556 = vsel %vm70, %v1554, %v1555
    %v1557 = vrot.slane %v1548, 2
    %v1558 = vrot.slane %v1549, 2
    %v1559 = vsel %vm70, %v1557, %v1558
    %v1564 = vadd.f32 %v1540, %v1556
    %v1565 = vadd.f32 %v1541, %v1555
    %v1566 = vadd.f32 %v1542, %v1559
    %v1567 = vadd.f32 %v1543, %v1558
    %s1568 = sld [smem:[#allocation3 + $0xa9]]
    %v1569 = vstv %s1568
    %v1570 = vmul.f32 %v1569, %v1448
    %v1571 = vmul.f32 %v1569, %v1449
    %v1572 = vmul.f32 %v1569, %v1450
    %v1573 = vmul.f32 %v1569, %v1451
    %v1574 = vadd.f32 %v1444, %v1570
    %v1575 = vadd.f32 %v1444, %v1571
    %v1576 = vadd.f32 %v1444, %v1572
    %v1577 = vadd.f32 %v1444, %v1573
    %s1578 = sld [smem:[#allocation3 + $0xaa]]
    %v1579 = vstv %s1578
    %v1580 = vmul.f32 %v1579, %v1448
    %v1581 = vmul.f32 %v1579, %v1449
    %v1582 = vmul.f32 %v1579, %v1450
    %v1583 = vmul.f32 %v1579, %v1451
    %v1588 = vrot.slane %v1580, 1
    %v1589 = vrot.slane %v1581, 1
    %v1590 = vsel %vm49, %v1588, %v1589
    %v1591 = vrot.slane %v1582, 1
    %v1592 = vrot.slane %v1583, 1
    %v1593 = vsel %vm49, %v1591, %v1592
    %v1598 = vadd.f32 %v1574, %v1590
    %v1599 = vadd.f32 %v1575, %v1589
    %v1600 = vadd.f32 %v1576, %v1593
    %v1601 = vadd.f32 %v1577, %v1592
    %s1602 = sld [smem:[#allocation3 + $0xab]]
    %v1603 = vstv %s1602
    %v1604 = vmul.f32 %v1603, %v1448
    %v1605 = vmul.f32 %v1603, %v1449
    %v1606 = vmul.f32 %v1603, %v1450
    %v1607 = vmul.f32 %v1603, %v1451
    %v1612 = vrot.slane %v1604, 2
    %v1613 = vrot.slane %v1605, 2
    %v1614 = vsel %vm70, %v1612, %v1613
    %v1615 = vrot.slane %v1606, 2
    %v1616 = vrot.slane %v1607, 2
    %v1617 = vsel %vm70, %v1615, %v1616
    %v1622 = vadd.f32 %v1598, %v1614
    %v1623 = vadd.f32 %v1599, %v1613
    %v1624 = vadd.f32 %v1600, %v1617
    %v1625 = vadd.f32 %v1601, %v1616
    %s1626 = sld [smem:[#allocation3 + $0xbd]]
    %v1627 = vstv %s1626
    %v1628 = vmul.f32 %v1627, %v1448
    %v1629 = vmul.f32 %v1627, %v1449
    %v1630 = vmul.f32 %v1627, %v1450
    %v1631 = vmul.f32 %v1627, %v1451
    %v1632 = vadd.f32 %v1446, %v1628
    %v1633 = vadd.f32 %v1446, %v1629
    %v1634 = vadd.f32 %v1446, %v1630
    %v1635 = vadd.f32 %v1446, %v1631
    %s1636 = sld [smem:[#allocation3 + $0xbe]]
    %v1637 = vstv %s1636
    %v1638 = vmul.f32 %v1637, %v1448
    %v1639 = vmul.f32 %v1637, %v1449
    %v1640 = vmul.f32 %v1637, %v1450
    %v1641 = vmul.f32 %v1637, %v1451
    %v1646 = vrot.slane %v1638, 1
    %v1647 = vrot.slane %v1639, 1
    %v1648 = vsel %vm49, %v1646, %v1647
    %v1649 = vrot.slane %v1640, 1
    %v1650 = vrot.slane %v1641, 1
    %v1651 = vsel %vm49, %v1649, %v1650
    %v1656 = vadd.f32 %v1632, %v1648
    %v1657 = vadd.f32 %v1633, %v1647
    %v1658 = vadd.f32 %v1634, %v1651
    %v1659 = vadd.f32 %v1635, %v1650
    %s1660 = sld [smem:[#allocation3 + $0xbf]]
    %v1661 = vstv %s1660
    %v1662 = vmul.f32 %v1661, %v1448
    %v1663 = vmul.f32 %v1661, %v1449
    %v1664 = vmul.f32 %v1661, %v1450
    %v1665 = vmul.f32 %v1661, %v1451
    %v1670 = vrot.slane %v1662, 2
    %v1671 = vrot.slane %v1663, 2
    %v1672 = vsel %vm70, %v1670, %v1671
    %v1673 = vrot.slane %v1664, 2
    %v1674 = vrot.slane %v1665, 2
    %v1675 = vsel %vm70, %v1673, %v1674
    %v1680 = vadd.f32 %v1656, %v1672
    %v1681 = vadd.f32 %v1657, %v1671
    %v1682 = vadd.f32 %v1658, %v1675
    %v1683 = vadd.f32 %v1659, %v1674
    %s1684 = scalar_lea.vmem %s2, 64
    %v1685 = vld [vmem:[%s1684] sm:$0xff]
    %v1686 = vld [vmem:[%s1684 + $0x8] sm:$0xf]
    %v1687 = vld [vmem:[%s1684 + $0xc0] sm:$0xff]
    %v1688 = vld [vmem:[%s1684 + $0xc8] sm:$0xf]
    %s1689 = sld [smem:[#allocation3 + $0x86]]
    %v1690 = vstv %s1689
    %v1691 = vmul.f32 %v1690, %v1685
    %v1692 = vmul.f32 %v1690, %v1686
    %v1693 = vmul.f32 %v1690, %v1687
    %v1694 = vmul.f32 %v1690, %v1688
    %v1695 = vadd.f32 %v1506, %v1691
    %v1696 = vadd.f32 %v1507, %v1692
    %v1697 = vadd.f32 %v1508, %v1693
    %v1698 = vadd.f32 %v1509, %v1694
    %s1699 = sld [smem:[#allocation3 + $0x87]]
    %v1700 = vstv %s1699
    %v1701 = vmul.f32 %v1700, %v1685
    %v1702 = vmul.f32 %v1700, %v1686
    %v1703 = vmul.f32 %v1700, %v1687
    %v1704 = vmul.f32 %v1700, %v1688
    %v1709 = vrot.slane %v1701, 1
    %v1710 = vrot.slane %v1702, 1
    %v1711 = vsel %vm49, %v1709, %v1710
    %v1712 = vrot.slane %v1703, 1
    %v1713 = vrot.slane %v1704, 1
    %v1714 = vsel %vm49, %v1712, %v1713
    %v1719 = vadd.f32 %v1695, %v1711
    %v1720 = vadd.f32 %v1696, %v1710
    %v1721 = vadd.f32 %v1697, %v1714
    %v1722 = vadd.f32 %v1698, %v1713
    %s1723 = sld [smem:[#allocation3 + $0x88]]
    %v1724 = vstv %s1723
    %v1725 = vmul.f32 %v1724, %v1685
    %v1726 = vmul.f32 %v1724, %v1686
    %v1727 = vmul.f32 %v1724, %v1687
    %v1728 = vmul.f32 %v1724, %v1688
    %v1733 = vrot.slane %v1725, 2
    %v1734 = vrot.slane %v1726, 2
    %v1735 = vsel %vm70, %v1733, %v1734
    %v1736 = vrot.slane %v1727, 2
    %v1737 = vrot.slane %v1728, 2
    %v1738 = vsel %vm70, %v1736, %v1737
    %v1743 = vadd.f32 %v1719, %v1735
    %v1744 = vadd.f32 %v1720, %v1734
    %v1745 = vadd.f32 %v1721, %v1738
    %v1746 = vadd.f32 %v1722, %v1737
    %s1747 = sld [smem:[#allocation3 + $0x9a]]
    %v1748 = vstv %s1747
    %v1749 = vmul.f32 %v1748, %v1685
    %v1750 = vmul.f32 %v1748, %v1686
    %v1751 = vmul.f32 %v1748, %v1687
    %v1752 = vmul.f32 %v1748, %v1688
    %v1753 = vadd.f32 %v1564, %v1749
    %v1754 = vadd.f32 %v1565, %v1750
    %v1755 = vadd.f32 %v1566, %v1751
    %v1756 = vadd.f32 %v1567, %v1752
    %s1757 = sld [smem:[#allocation3 + $0x9b]]
    %v1758 = vstv %s1757
    %v1759 = vmul.f32 %v1758, %v1685
    %v1760 = vmul.f32 %v1758, %v1686
    %v1761 = vmul.f32 %v1758, %v1687
    %v1762 = vmul.f32 %v1758, %v1688
    %v1767 = vrot.slane %v1759, 1
    %v1768 = vrot.slane %v1760, 1
    %v1769 = vsel %vm49, %v1767, %v1768
    %v1770 = vrot.slane %v1761, 1
    %v1771 = vrot.slane %v1762, 1
    %v1772 = vsel %vm49, %v1770, %v1771
    %v1777 = vadd.f32 %v1753, %v1769
    %v1778 = vadd.f32 %v1754, %v1768
    %v1779 = vadd.f32 %v1755, %v1772
    %v1780 = vadd.f32 %v1756, %v1771
    %s1781 = sld [smem:[#allocation3 + $0x9c]]
    %v1782 = vstv %s1781
    %v1783 = vmul.f32 %v1782, %v1685
    %v1784 = vmul.f32 %v1782, %v1686
    %v1785 = vmul.f32 %v1782, %v1687
    %v1786 = vmul.f32 %v1782, %v1688
    %v1791 = vrot.slane %v1783, 2
    %v1792 = vrot.slane %v1784, 2
    %v1793 = vsel %vm70, %v1791, %v1792
    %v1794 = vrot.slane %v1785, 2
    %v1795 = vrot.slane %v1786, 2
    %v1796 = vsel %vm70, %v1794, %v1795
    %v1801 = vadd.f32 %v1777, %v1793
    %v1802 = vadd.f32 %v1778, %v1792
    %v1803 = vadd.f32 %v1779, %v1796
    %v1804 = vadd.f32 %v1780, %v1795
    %s1805 = sld [smem:[#allocation3 + $0xae]]
    %v1806 = vstv %s1805
    %v1807 = vmul.f32 %v1806, %v1685
    %v1808 = vmul.f32 %v1806, %v1686
    %v1809 = vmul.f32 %v1806, %v1687
    %v1810 = vmul.f32 %v1806, %v1688
    %v1811 = vadd.f32 %v1622, %v1807
    %v1812 = vadd.f32 %v1623, %v1808
    %v1813 = vadd.f32 %v1624, %v1809
    %v1814 = vadd.f32 %v1625, %v1810
    %s1815 = sld [smem:[#allocation3 + $0xaf]]
    %v1816 = vstv %s1815
    %v1817 = vmul.f32 %v1816, %v1685
    %v1818 = vmul.f32 %v1816, %v1686
    %v1819 = vmul.f32 %v1816, %v1687
    %v1820 = vmul.f32 %v1816, %v1688
    %v1825 = vrot.slane %v1817, 1
    %v1826 = vrot.slane %v1818, 1
    %v1827 = vsel %vm49, %v1825, %v1826
    %v1828 = vrot.slane %v1819, 1
    %v1829 = vrot.slane %v1820, 1
    %v1830 = vsel %vm49, %v1828, %v1829
    %v1835 = vadd.f32 %v1811, %v1827
    %v1836 = vadd.f32 %v1812, %v1826
    %v1837 = vadd.f32 %v1813, %v1830
    %v1838 = vadd.f32 %v1814, %v1829
    %s1839 = sld [smem:[#allocation3 + $0xb0]]
    %v1840 = vstv %s1839
    %v1841 = vmul.f32 %v1840, %v1685
    %v1842 = vmul.f32 %v1840, %v1686
    %v1843 = vmul.f32 %v1840, %v1687
    %v1844 = vmul.f32 %v1840, %v1688
    %v1849 = vrot.slane %v1841, 2
    %v1850 = vrot.slane %v1842, 2
    %v1851 = vsel %vm70, %v1849, %v1850
    %v1852 = vrot.slane %v1843, 2
    %v1853 = vrot.slane %v1844, 2
    %v1854 = vsel %vm70, %v1852, %v1853
    %v1859 = vadd.f32 %v1835, %v1851
    %v1860 = vadd.f32 %v1836, %v1850
    %v1861 = vadd.f32 %v1837, %v1854
    %v1862 = vadd.f32 %v1838, %v1853
    %s1863 = sld [smem:[#allocation3 + $0xc2]]
    %v1864 = vstv %s1863
    %v1865 = vmul.f32 %v1864, %v1685
    %v1866 = vmul.f32 %v1864, %v1686
    %v1867 = vmul.f32 %v1864, %v1687
    %v1868 = vmul.f32 %v1864, %v1688
    %v1869 = vadd.f32 %v1680, %v1865
    %v1870 = vadd.f32 %v1681, %v1866
    %v1871 = vadd.f32 %v1682, %v1867
    %v1872 = vadd.f32 %v1683, %v1868
    %s1873 = sld [smem:[#allocation3 + $0xc3]]
    %v1874 = vstv %s1873
    %v1875 = vmul.f32 %v1874, %v1685
    %v1876 = vmul.f32 %v1874, %v1686
    %v1877 = vmul.f32 %v1874, %v1687
    %v1878 = vmul.f32 %v1874, %v1688
    %v1883 = vrot.slane %v1875, 1
    %v1884 = vrot.slane %v1876, 1
    %v1885 = vsel %vm49, %v1883, %v1884
    %v1886 = vrot.slane %v1877, 1
    %v1887 = vrot.slane %v1878, 1
    %v1888 = vsel %vm49, %v1886, %v1887
    %v1893 = vadd.f32 %v1869, %v1885
    %v1894 = vadd.f32 %v1870, %v1884
    %v1895 = vadd.f32 %v1871, %v1888
    %v1896 = vadd.f32 %v1872, %v1887
    %s1897 = sld [smem:[#allocation3 + $0xc4]]
    %v1898 = vstv %s1897
    %v1899 = vmul.f32 %v1898, %v1685
    %v1900 = vmul.f32 %v1898, %v1686
    %v1901 = vmul.f32 %v1898, %v1687
    %v1902 = vmul.f32 %v1898, %v1688
    %v1907 = vrot.slane %v1899, 2
    %v1908 = vrot.slane %v1900, 2
    %v1909 = vsel %vm70, %v1907, %v1908
    %v1910 = vrot.slane %v1901, 2
    %v1911 = vrot.slane %v1902, 2
    %v1912 = vsel %vm70, %v1910, %v1911
    %v1917 = vadd.f32 %v1893, %v1909
    %v1918 = vadd.f32 %v1894, %v1908
    %v1919 = vadd.f32 %v1895, %v1912
    %v1920 = vadd.f32 %v1896, %v1911
    %s1921 = scalar_lea.vmem %s2, 112
    %v1922 = vld [vmem:[%s1921] sm:$0xff]
    %v1923 = vld [vmem:[%s1921 + $0x8] sm:$0xf]
    %v1924 = vld [vmem:[%s1921 + $0xc0] sm:$0xff]
    %v1925 = vld [vmem:[%s1921 + $0xc8] sm:$0xf]
    %s1926 = sld [smem:[#allocation3 + $0x8b]]
    %v1927 = vstv %s1926
    %v1928 = vmul.f32 %v1927, %v1922
    %v1929 = vmul.f32 %v1927, %v1923
    %v1930 = vmul.f32 %v1927, %v1924
    %v1931 = vmul.f32 %v1927, %v1925
    %v1932 = vadd.f32 %v1743, %v1928
    %v1933 = vadd.f32 %v1744, %v1929
    %v1934 = vadd.f32 %v1745, %v1930
    %v1935 = vadd.f32 %v1746, %v1931
    %s1936 = sld [smem:[#allocation3 + $0x8c]]
    %v1937 = vstv %s1936
    %v1938 = vmul.f32 %v1937, %v1922
    %v1939 = vmul.f32 %v1937, %v1923
    %v1940 = vmul.f32 %v1937, %v1924
    %v1941 = vmul.f32 %v1937, %v1925
    %v1946 = vrot.slane %v1938, 1
    %v1947 = vrot.slane %v1939, 1
    %v1948 = vsel %vm49, %v1946, %v1947
    %v1949 = vrot.slane %v1940, 1
    %v1950 = vrot.slane %v1941, 1
    %v1951 = vsel %vm49, %v1949, %v1950
    %v1956 = vadd.f32 %v1932, %v1948
    %v1957 = vadd.f32 %v1933, %v1947
    %v1958 = vadd.f32 %v1934, %v1951
    %v1959 = vadd.f32 %v1935, %v1950
    %s1960 = sld [smem:[#allocation3 + $0x8d]]
    %v1961 = vstv %s1960
    %v1962 = vmul.f32 %v1961, %v1922
    %v1963 = vmul.f32 %v1961, %v1923
    %v1964 = vmul.f32 %v1961, %v1924
    %v1965 = vmul.f32 %v1961, %v1925
    %v1970 = vrot.slane %v1962, 2
    %v1971 = vrot.slane %v1963, 2
    %v1972 = vsel %vm70, %v1970, %v1971
    %v1973 = vrot.slane %v1964, 2
    %v1974 = vrot.slane %v1965, 2
    %v1975 = vsel %vm70, %v1973, %v1974
    %v1980 = vadd.f32 %v1956, %v1972
    %v1981 = vadd.f32 %v1957, %v1971
    %v1982 = vadd.f32 %v1958, %v1975
    %v1983 = vadd.f32 %v1959, %v1974
    %s1984 = sld [smem:[#allocation3 + $0x9f]]
    %v1985 = vstv %s1984
    %v1986 = vmul.f32 %v1985, %v1922
    %v1987 = vmul.f32 %v1985, %v1923
    %v1988 = vmul.f32 %v1985, %v1924
    %v1989 = vmul.f32 %v1985, %v1925
    %v1990 = vadd.f32 %v1801, %v1986
    %v1991 = vadd.f32 %v1802, %v1987
    %v1992 = vadd.f32 %v1803, %v1988
    %v1993 = vadd.f32 %v1804, %v1989
    %s1994 = sld [smem:[#allocation3 + $0xa0]]
    %v1995 = vstv %s1994
    %v1996 = vmul.f32 %v1995, %v1922
    %v1997 = vmul.f32 %v1995, %v1923
    %v1998 = vmul.f32 %v1995, %v1924
    %v1999 = vmul.f32 %v1995, %v1925
    %v2004 = vrot.slane %v1996, 1
    %v2005 = vrot.slane %v1997, 1
    %v2006 = vsel %vm49, %v2004, %v2005
    %v2007 = vrot.slane %v1998, 1
    %v2008 = vrot.slane %v1999, 1
    %v2009 = vsel %vm49, %v2007, %v2008
    %v2014 = vadd.f32 %v1990, %v2006
    %v2015 = vadd.f32 %v1991, %v2005
    %v2016 = vadd.f32 %v1992, %v2009
    %v2017 = vadd.f32 %v1993, %v2008
    %s2018 = sld [smem:[#allocation3 + $0xa1]]
    %v2019 = vstv %s2018
    %v2020 = vmul.f32 %v2019, %v1922
    %v2021 = vmul.f32 %v2019, %v1923
    %v2022 = vmul.f32 %v2019, %v1924
    %v2023 = vmul.f32 %v2019, %v1925
    %v2028 = vrot.slane %v2020, 2
    %v2029 = vrot.slane %v2021, 2
    %v2030 = vsel %vm70, %v2028, %v2029
    %v2031 = vrot.slane %v2022, 2
    %v2032 = vrot.slane %v2023, 2
    %v2033 = vsel %vm70, %v2031, %v2032
    %v2038 = vadd.f32 %v2014, %v2030
    %v2039 = vadd.f32 %v2015, %v2029
    %v2040 = vadd.f32 %v2016, %v2033
    %v2041 = vadd.f32 %v2017, %v2032
    %s2042 = sld [smem:[#allocation3 + $0xb3]]
    %v2043 = vstv %s2042
    %v2044 = vmul.f32 %v2043, %v1922
    %v2045 = vmul.f32 %v2043, %v1923
    %v2046 = vmul.f32 %v2043, %v1924
    %v2047 = vmul.f32 %v2043, %v1925
    %v2048 = vadd.f32 %v1859, %v2044
    %v2049 = vadd.f32 %v1860, %v2045
    %v2050 = vadd.f32 %v1861, %v2046
    %v2051 = vadd.f32 %v1862, %v2047
    %s2052 = sld [smem:[#allocation3 + $0xb4]]
    %v2053 = vstv %s2052
    %v2054 = vmul.f32 %v2053, %v1922
    %v2055 = vmul.f32 %v2053, %v1923
    %v2056 = vmul.f32 %v2053, %v1924
    %v2057 = vmul.f32 %v2053, %v1925
    %v2062 = vrot.slane %v2054, 1
    %v2063 = vrot.slane %v2055, 1
    %v2064 = vsel %vm49, %v2062, %v2063
    %v2065 = vrot.slane %v2056, 1
    %v2066 = vrot.slane %v2057, 1
    %v2067 = vsel %vm49, %v2065, %v2066
    %v2072 = vadd.f32 %v2048, %v2064
    %v2073 = vadd.f32 %v2049, %v2063
    %v2074 = vadd.f32 %v2050, %v2067
    %v2075 = vadd.f32 %v2051, %v2066
    %s2076 = sld [smem:[#allocation3 + $0xb5]]
    %v2077 = vstv %s2076
    %v2078 = vmul.f32 %v2077, %v1922
    %v2079 = vmul.f32 %v2077, %v1923
    %v2080 = vmul.f32 %v2077, %v1924
    %v2081 = vmul.f32 %v2077, %v1925
    %v2086 = vrot.slane %v2078, 2
    %v2087 = vrot.slane %v2079, 2
    %v2088 = vsel %vm70, %v2086, %v2087
    %v2089 = vrot.slane %v2080, 2
    %v2090 = vrot.slane %v2081, 2
    %v2091 = vsel %vm70, %v2089, %v2090
    %v2096 = vadd.f32 %v2072, %v2088
    %v2097 = vadd.f32 %v2073, %v2087
    %v2098 = vadd.f32 %v2074, %v2091
    %v2099 = vadd.f32 %v2075, %v2090
    %s2100 = sld [smem:[#allocation3 + $0xc7]]
    %v2101 = vstv %s2100
    %v2102 = vmul.f32 %v2101, %v1922
    %v2103 = vmul.f32 %v2101, %v1923
    %v2104 = vmul.f32 %v2101, %v1924
    %v2105 = vmul.f32 %v2101, %v1925
    %v2106 = vadd.f32 %v1917, %v2102
    %v2107 = vadd.f32 %v1918, %v2103
    %v2108 = vadd.f32 %v1919, %v2104
    %v2109 = vadd.f32 %v1920, %v2105
    %s2110 = sld [smem:[#allocation3 + $0xc8]]
    %v2111 = vstv %s2110
    %v2112 = vmul.f32 %v2111, %v1922
    %v2113 = vmul.f32 %v2111, %v1923
    %v2114 = vmul.f32 %v2111, %v1924
    %v2115 = vmul.f32 %v2111, %v1925
    %v2120 = vrot.slane %v2112, 1
    %v2121 = vrot.slane %v2113, 1
    %v2122 = vsel %vm49, %v2120, %v2121
    %v2123 = vrot.slane %v2114, 1
    %v2124 = vrot.slane %v2115, 1
    %v2125 = vsel %vm49, %v2123, %v2124
    %v2130 = vadd.f32 %v2106, %v2122
    %v2131 = vadd.f32 %v2107, %v2121
    %v2132 = vadd.f32 %v2108, %v2125
    %v2133 = vadd.f32 %v2109, %v2124
    %s2134 = sld [smem:[#allocation3 + $0xc9]]
    %v2135 = vstv %s2134
    %v2136 = vmul.f32 %v2135, %v1922
    %v2137 = vmul.f32 %v2135, %v1923
    %v2138 = vmul.f32 %v2135, %v1924
    %v2139 = vmul.f32 %v2135, %v1925
    %v2144 = vrot.slane %v2136, 2
    %v2145 = vrot.slane %v2137, 2
    %v2146 = vsel %vm70, %v2144, %v2145
    %v2147 = vrot.slane %v2138, 2
    %v2148 = vrot.slane %v2139, 2
    %v2149 = vsel %vm70, %v2147, %v2148
    %v2154 = vadd.f32 %v2130, %v2146
    %v2155 = vadd.f32 %v2131, %v2145
    %v2156 = vadd.f32 %v2132, %v2149
    %v2157 = vadd.f32 %v2133, %v2148
    %s2158 = scalar_lea.vmem %s2, 160
    %v2159 = vld [vmem:[%s2158] sm:$0xff]
    %v2160 = vld [vmem:[%s2158 + $0x8] sm:$0xf]
    %v2161 = vld [vmem:[%s2158 + $0xc0] sm:$0xff]
    %v2162 = vld [vmem:[%s2158 + $0xc8] sm:$0xf]
    %s2163 = sld [smem:[#allocation3 + $0x90]]
    %v2164 = vstv %s2163
    %v2165 = vmul.f32 %v2164, %v2159
    %v2166 = vmul.f32 %v2164, %v2160
    %v2167 = vmul.f32 %v2164, %v2161
    %v2168 = vmul.f32 %v2164, %v2162
    %v2169 = vadd.f32 %v1980, %v2165
    %v2170 = vadd.f32 %v1981, %v2166
    %v2171 = vadd.f32 %v1982, %v2167
    %v2172 = vadd.f32 %v1983, %v2168
    %s2173 = sld [smem:[#allocation3 + $0x91]]
    %v2174 = vstv %s2173
    %v2175 = vmul.f32 %v2174, %v2159
    %v2176 = vmul.f32 %v2174, %v2160
    %v2177 = vmul.f32 %v2174, %v2161
    %v2178 = vmul.f32 %v2174, %v2162
    %v2183 = vrot.slane %v2175, 1
    %v2184 = vrot.slane %v2176, 1
    %v2185 = vsel %vm49, %v2183, %v2184
    %v2186 = vrot.slane %v2177, 1
    %v2187 = vrot.slane %v2178, 1
    %v2188 = vsel %vm49, %v2186, %v2187
    %v2193 = vadd.f32 %v2169, %v2185
    %v2194 = vadd.f32 %v2170, %v2184
    %v2195 = vadd.f32 %v2171, %v2188
    %v2196 = vadd.f32 %v2172, %v2187
    %s2197 = sld [smem:[#allocation3 + $0x92]]
    %v2198 = vstv %s2197
    %v2199 = vmul.f32 %v2198, %v2159
    %v2200 = vmul.f32 %v2198, %v2160
    %v2201 = vmul.f32 %v2198, %v2161
    %v2202 = vmul.f32 %v2198, %v2162
    %v2207 = vrot.slane %v2199, 2
    %v2208 = vrot.slane %v2200, 2
    %v2209 = vsel %vm70, %v2207, %v2208
    %v2210 = vrot.slane %v2201, 2
    %v2211 = vrot.slane %v2202, 2
    %v2212 = vsel %vm70, %v2210, %v2211
    %v2217 = vadd.f32 %v2193, %v2209
    %v2218 = vadd.f32 %v2194, %v2208
    %v2219 = vadd.f32 %v2195, %v2212
    %v2220 = vadd.f32 %v2196, %v2211
    %s2221 = sld [smem:[#allocation3 + $0xa4]]
    %v2222 = vstv %s2221
    %v2223 = vmul.f32 %v2222, %v2159
    %v2224 = vmul.f32 %v2222, %v2160
    %v2225 = vmul.f32 %v2222, %v2161
    %v2226 = vmul.f32 %v2222, %v2162
    %v2227 = vadd.f32 %v2038, %v2223
    %v2228 = vadd.f32 %v2039, %v2224
    %v2229 = vadd.f32 %v2040, %v2225
    %v2230 = vadd.f32 %v2041, %v2226
    %s2231 = sld [smem:[#allocation3 + $0xa5]]
    %v2232 = vstv %s2231
    %v2233 = vmul.f32 %v2232, %v2159
    %v2234 = vmul.f32 %v2232, %v2160
    %v2235 = vmul.f32 %v2232, %v2161
    %v2236 = vmul.f32 %v2232, %v2162
    %v2241 = vrot.slane %v2233, 1
    %v2242 = vrot.slane %v2234, 1
    %v2243 = vsel %vm49, %v2241, %v2242
    %v2244 = vrot.slane %v2235, 1
    %v2245 = vrot.slane %v2236, 1
    %v2246 = vsel %vm49, %v2244, %v2245
    %v2251 = vadd.f32 %v2227, %v2243
    %v2252 = vadd.f32 %v2228, %v2242
    %v2253 = vadd.f32 %v2229, %v2246
    %v2254 = vadd.f32 %v2230, %v2245
    %s2255 = sld [smem:[#allocation3 + $0xa6]]
    %v2256 = vstv %s2255
    %v2257 = vmul.f32 %v2256, %v2159
    %v2258 = vmul.f32 %v2256, %v2160
    %v2259 = vmul.f32 %v2256, %v2161
    %v2260 = vmul.f32 %v2256, %v2162
    %v2265 = vrot.slane %v2257, 2
    %v2266 = vrot.slane %v2258, 2
    %v2267 = vsel %vm70, %v2265, %v2266
    %v2268 = vrot.slane %v2259, 2
    %v2269 = vrot.slane %v2260, 2
    %v2270 = vsel %vm70, %v2268, %v2269
    %v2275 = vadd.f32 %v2251, %v2267
    %v2276 = vadd.f32 %v2252, %v2266
    %v2277 = vadd.f32 %v2253, %v2270
    %v2278 = vadd.f32 %v2254, %v2269
    %s2279 = sld [smem:[#allocation3 + $0xb8]]
    %v2280 = vstv %s2279
    %v2281 = vmul.f32 %v2280, %v2159
    %v2282 = vmul.f32 %v2280, %v2160
    %v2283 = vmul.f32 %v2280, %v2161
    %v2284 = vmul.f32 %v2280, %v2162
    %v2285 = vadd.f32 %v2096, %v2281
    %v2286 = vadd.f32 %v2097, %v2282
    %v2287 = vadd.f32 %v2098, %v2283
    %v2288 = vadd.f32 %v2099, %v2284
    %s2289 = sld [smem:[#allocation3 + $0xb9]]
    %v2290 = vstv %s2289
    %v2291 = vmul.f32 %v2290, %v2159
    %v2292 = vmul.f32 %v2290, %v2160
    %v2293 = vmul.f32 %v2290, %v2161
    %v2294 = vmul.f32 %v2290, %v2162
    %v2299 = vrot.slane %v2291, 1
    %v2300 = vrot.slane %v2292, 1
    %v2301 = vsel %vm49, %v2299, %v2300
    %v2302 = vrot.slane %v2293, 1
    %v2303 = vrot.slane %v2294, 1
    %v2304 = vsel %vm49, %v2302, %v2303
    %v2309 = vadd.f32 %v2285, %v2301
    %v2310 = vadd.f32 %v2286, %v2300
    %v2311 = vadd.f32 %v2287, %v2304
    %v2312 = vadd.f32 %v2288, %v2303
    %s2313 = sld [smem:[#allocation3 + $0xba]]
    %v2314 = vstv %s2313
    %v2315 = vmul.f32 %v2314, %v2159
    %v2316 = vmul.f32 %v2314, %v2160
    %v2317 = vmul.f32 %v2314, %v2161
    %v2318 = vmul.f32 %v2314, %v2162
    %v2323 = vrot.slane %v2315, 2
    %v2324 = vrot.slane %v2316, 2
    %v2325 = vsel %vm70, %v2323, %v2324
    %v2326 = vrot.slane %v2317, 2
    %v2327 = vrot.slane %v2318, 2
    %v2328 = vsel %vm70, %v2326, %v2327
    %v2333 = vadd.f32 %v2309, %v2325
    %v2334 = vadd.f32 %v2310, %v2324
    %v2335 = vadd.f32 %v2311, %v2328
    %v2336 = vadd.f32 %v2312, %v2327
    %s2337 = sld [smem:[#allocation3 + $0xcc]]
    %v2338 = vstv %s2337
    %v2339 = vmul.f32 %v2338, %v2159
    %v2340 = vmul.f32 %v2338, %v2160
    %v2341 = vmul.f32 %v2338, %v2161
    %v2342 = vmul.f32 %v2338, %v2162
    %v2343 = vadd.f32 %v2154, %v2339
    %v2344 = vadd.f32 %v2155, %v2340
    %v2345 = vadd.f32 %v2156, %v2341
    %v2346 = vadd.f32 %v2157, %v2342
    %s2347 = sld [smem:[#allocation3 + $0xcd]]
    %v2348 = vstv %s2347
    %v2349 = vmul.f32 %v2348, %v2159
    %v2350 = vmul.f32 %v2348, %v2160
    %v2351 = vmul.f32 %v2348, %v2161
    %v2352 = vmul.f32 %v2348, %v2162
    %v2357 = vrot.slane %v2349, 1
    %v2358 = vrot.slane %v2350, 1
    %v2359 = vsel %vm49, %v2357, %v2358
    %v2360 = vrot.slane %v2351, 1
    %v2361 = vrot.slane %v2352, 1
    %v2362 = vsel %vm49, %v2360, %v2361
    %v2367 = vadd.f32 %v2343, %v2359
    %v2368 = vadd.f32 %v2344, %v2358
    %v2369 = vadd.f32 %v2345, %v2362
    %v2370 = vadd.f32 %v2346, %v2361
    %s2371 = sld [smem:[#allocation3 + $0xce]]
    %v2372 = vstv %s2371
    %v2373 = vmul.f32 %v2372, %v2159
    %v2374 = vmul.f32 %v2372, %v2160
    %v2375 = vmul.f32 %v2372, %v2161
    %v2376 = vmul.f32 %v2372, %v2162
    %v2381 = vrot.slane %v2373, 2
    %v2382 = vrot.slane %v2374, 2
    %v2383 = vsel %vm70, %v2381, %v2382
    %v2384 = vrot.slane %v2375, 2
    %v2385 = vrot.slane %v2376, 2
    %v2386 = vsel %vm70, %v2384, %v2385
    %v2391 = vadd.f32 %v2367, %v2383
    %v2392 = vadd.f32 %v2368, %v2382
    %v2393 = vadd.f32 %v2369, %v2386
    %v2394 = vadd.f32 %v2370, %v2385
    %s2395 = scalar_lea.vmem [#allocation5], 32
    %2396 = vst [vmem:[%s2395 - $0x1] sm:$0xfe] %v2217
    %2397 = vst [vmem:[%s2395 + $0x7] sm:$0x1] %v2218
    %2398 = vst [vmem:[%s2395 + $0x5f] sm:$0xfe] %v2219
    %2399 = vst [vmem:[%s2395 + $0x67] sm:$0x1] %v2220
    %s2400 = scalar_lea.vmem [#allocation5], 40
    %2401 = vst [vmem:[%s2400 - $0x1] sm:$0xfe] %v2275
    %2402 = vst [vmem:[%s2400 + $0x7] sm:$0x1] %v2276
    %2403 = vst [vmem:[%s2400 + $0x5f] sm:$0xfe] %v2277
    %2404 = vst [vmem:[%s2400 + $0x67] sm:$0x1] %v2278
    %s2405 = scalar_lea.vmem [#allocation5], 48
    %2406 = vst [vmem:[%s2405 - $0x1] sm:$0xfe] %v2333
    %2407 = vst [vmem:[%s2405 + $0x7] sm:$0x1] %v2334
    %2408 = vst [vmem:[%s2405 + $0x5f] sm:$0xfe] %v2335
    %2409 = vst [vmem:[%s2405 + $0x67] sm:$0x1] %v2336
    %s2410 = scalar_lea.vmem [#allocation5], 56
    %2411 = vst [vmem:[%s2410 - $0x1] sm:$0xfe] %v2391
    %2412 = vst [vmem:[%s2410 + $0x7] sm:$0x1] %v2392
    %2413 = vst [vmem:[%s2410 + $0x5f] sm:$0xfe] %v2393
    %2414 = vst [vmem:[%s2410 + $0x67] sm:$0x1] %v2394
    %s2415 = sld [smem:[#allocation4 + $0x100]]
    %v2416 = vstv %s2415
    %s2417 = sld [smem:[#allocation4 + $0x101]]
    %v2418 = vstv %s2417
    %s2419 = sld [smem:[#allocation4 + $0x102]]
    %v2420 = vstv %s2419
    %s2421 = sld [smem:[#allocation4 + $0x103]]
    %v2422 = vstv %s2421
    %s2423 = scalar_lea.vmem %s2, 32
    %v2424 = vld [vmem:[%s2423] sm:$0xff]
    %v2425 = vld [vmem:[%s2423 + $0x8] sm:$0xf]
    %v2426 = vld [vmem:[%s2423 + $0xc0] sm:$0xff]
    %v2427 = vld [vmem:[%s2423 + $0xc8] sm:$0xf]
    %s2428 = sld [smem:[#allocation3 + $0x102]]
    %v2429 = vstv %s2428
    %v2430 = vmul.f32 %v2429, %v2424
    %v2431 = vmul.f32 %v2429, %v2425
    %v2432 = vmul.f32 %v2429, %v2426
    %v2433 = vmul.f32 %v2429, %v2427
    %v2434 = vadd.f32 %v2416, %v2430
    %v2435 = vadd.f32 %v2416, %v2431
    %v2436 = vadd.f32 %v2416, %v2432
    %v2437 = vadd.f32 %v2416, %v2433
    %s2438 = sld [smem:[#allocation3 + $0x116]]
    %v2439 = vstv %s2438
    %v2440 = vmul.f32 %v2439, %v2424
    %v2441 = vmul.f32 %v2439, %v2425
    %v2442 = vmul.f32 %v2439, %v2426
    %v2443 = vmul.f32 %v2439, %v2427
    %v2444 = vadd.f32 %v2418, %v2440
    %v2445 = vadd.f32 %v2418, %v2441
    %v2446 = vadd.f32 %v2418, %v2442
    %v2447 = vadd.f32 %v2418, %v2443
    %s2448 = sld [smem:[#allocation3 + $0x12a]]
    %v2449 = vstv %s2448
    %v2450 = vmul.f32 %v2449, %v2424
    %v2451 = vmul.f32 %v2449, %v2425
    %v2452 = vmul.f32 %v2449, %v2426
    %v2453 = vmul.f32 %v2449, %v2427
    %v2454 = vadd.f32 %v2420, %v2450
    %v2455 = vadd.f32 %v2420, %v2451
    %v2456 = vadd.f32 %v2420, %v2452
    %v2457 = vadd.f32 %v2420, %v2453
    %s2458 = sld [smem:[#allocation3 + $0x13e]]
    %v2459 = vstv %s2458
    %v2460 = vmul.f32 %v2459, %v2424
    %v2461 = vmul.f32 %v2459, %v2425
    %v2462 = vmul.f32 %v2459, %v2426
    %v2463 = vmul.f32 %v2459, %v2427
    %v2464 = vadd.f32 %v2422, %v2460
    %v2465 = vadd.f32 %v2422, %v2461
    %v2466 = vadd.f32 %v2422, %v2462
    %v2467 = vadd.f32 %v2422, %v2463
    %s2468 = scalar_lea.vmem %s2, 80
    %v2469 = vld [vmem:[%s2468] sm:$0xff]
    %v2470 = vld [vmem:[%s2468 + $0x8] sm:$0xf]
    %v2471 = vld [vmem:[%s2468 + $0xc0] sm:$0xff]
    %v2472 = vld [vmem:[%s2468 + $0xc8] sm:$0xf]
    %s2473 = sld [smem:[#allocation3 + $0x107]]
    %v2474 = vstv %s2473
    %v2475 = vmul.f32 %v2474, %v2469
    %v2476 = vmul.f32 %v2474, %v2470
    %v2477 = vmul.f32 %v2474, %v2471
    %v2478 = vmul.f32 %v2474, %v2472
    %v2479 = vadd.f32 %v2434, %v2475
    %v2480 = vadd.f32 %v2435, %v2476
    %v2481 = vadd.f32 %v2436, %v2477
    %v2482 = vadd.f32 %v2437, %v2478
    %s2483 = sld [smem:[#allocation3 + $0x11b]]
    %v2484 = vstv %s2483
    %v2485 = vmul.f32 %v2484, %v2469
    %v2486 = vmul.f32 %v2484, %v2470
    %v2487 = vmul.f32 %v2484, %v2471
    %v2488 = vmul.f32 %v2484, %v2472
    %v2489 = vadd.f32 %v2444, %v2485
    %v2490 = vadd.f32 %v2445, %v2486
    %v2491 = vadd.f32 %v2446, %v2487
    %v2492 = vadd.f32 %v2447, %v2488
    %s2493 = sld [smem:[#allocation3 + $0x12f]]
    %v2494 = vstv %s2493
    %v2495 = vmul.f32 %v2494, %v2469
    %v2496 = vmul.f32 %v2494, %v2470
    %v2497 = vmul.f32 %v2494, %v2471
    %v2498 = vmul.f32 %v2494, %v2472
    %v2499 = vadd.f32 %v2454, %v2495
    %v2500 = vadd.f32 %v2455, %v2496
    %v2501 = vadd.f32 %v2456, %v2497
    %v2502 = vadd.f32 %v2457, %v2498
    %s2503 = sld [smem:[#allocation3 + $0x143]]
    %v2504 = vstv %s2503
    %v2505 = vmul.f32 %v2504, %v2469
    %v2506 = vmul.f32 %v2504, %v2470
    %v2507 = vmul.f32 %v2504, %v2471
    %v2508 = vmul.f32 %v2504, %v2472
    %v2509 = vadd.f32 %v2464, %v2505
    %v2510 = vadd.f32 %v2465, %v2506
    %v2511 = vadd.f32 %v2466, %v2507
    %v2512 = vadd.f32 %v2467, %v2508
    %s2513 = scalar_lea.vmem %s2, 128
    %v2514 = vld [vmem:[%s2513] sm:$0xff]
    %v2515 = vld [vmem:[%s2513 + $0x8] sm:$0xf]
    %v2516 = vld [vmem:[%s2513 + $0xc0] sm:$0xff]
    %v2517 = vld [vmem:[%s2513 + $0xc8] sm:$0xf]
    %s2518 = sld [smem:[#allocation3 + $0x10c]]
    %v2519 = vstv %s2518
    %v2520 = vmul.f32 %v2519, %v2514
    %v2521 = vmul.f32 %v2519, %v2515
    %v2522 = vmul.f32 %v2519, %v2516
    %v2523 = vmul.f32 %v2519, %v2517
    %v2524 = vadd.f32 %v2479, %v2520
    %v2525 = vadd.f32 %v2480, %v2521
    %v2526 = vadd.f32 %v2481, %v2522
    %v2527 = vadd.f32 %v2482, %v2523
    %s2528 = sld [smem:[#allocation3 + $0x120]]
    %v2529 = vstv %s2528
    %v2530 = vmul.f32 %v2529, %v2514
    %v2531 = vmul.f32 %v2529, %v2515
    %v2532 = vmul.f32 %v2529, %v2516
    %v2533 = vmul.f32 %v2529, %v2517
    %v2534 = vadd.f32 %v2489, %v2530
    %v2535 = vadd.f32 %v2490, %v2531
    %v2536 = vadd.f32 %v2491, %v2532
    %v2537 = vadd.f32 %v2492, %v2533
    %s2538 = sld [smem:[#allocation3 + $0x134]]
    %v2539 = vstv %s2538
    %v2540 = vmul.f32 %v2539, %v2514
    %v2541 = vmul.f32 %v2539, %v2515
    %v2542 = vmul.f32 %v2539, %v2516
    %v2543 = vmul.f32 %v2539, %v2517
    %v2544 = vadd.f32 %v2499, %v2540
    %v2545 = vadd.f32 %v2500, %v2541
    %v2546 = vadd.f32 %v2501, %v2542
    %v2547 = vadd.f32 %v2502, %v2543
    %s2548 = sld [smem:[#allocation3 + $0x148]]
    %v2549 = vstv %s2548
    %v2550 = vmul.f32 %v2549, %v2514
    %v2551 = vmul.f32 %v2549, %v2515
    %v2552 = vmul.f32 %v2549, %v2516
    %v2553 = vmul.f32 %v2549, %v2517
    %v2554 = vadd.f32 %v2509, %v2550
    %v2555 = vadd.f32 %v2510, %v2551
    %v2556 = vadd.f32 %v2511, %v2552
    %v2557 = vadd.f32 %v2512, %v2553
    %s2558 = scalar_lea.vmem %s2, 176
    %v2559 = vld [vmem:[%s2558] sm:$0xff]
    %v2560 = vld [vmem:[%s2558 + $0x8] sm:$0xf]
    %v2561 = vld [vmem:[%s2558 + $0xc0] sm:$0xff]
    %v2562 = vld [vmem:[%s2558 + $0xc8] sm:$0xf]
    %s2563 = sld [smem:[#allocation3 + $0x111]]
    %v2564 = vstv %s2563
    %v2565 = vmul.f32 %v2564, %v2559
    %v2566 = vmul.f32 %v2564, %v2560
    %v2567 = vmul.f32 %v2564, %v2561
    %v2568 = vmul.f32 %v2564, %v2562
    %v2569 = vadd.f32 %v2524, %v2565
    %v2570 = vadd.f32 %v2525, %v2566
    %v2571 = vadd.f32 %v2526, %v2567
    %v2572 = vadd.f32 %v2527, %v2568
    %s2573 = sld [smem:[#allocation3 + $0x125]]
    %v2574 = vstv %s2573
    %v2575 = vmul.f32 %v2574, %v2559
    %v2576 = vmul.f32 %v2574, %v2560
    %v2577 = vmul.f32 %v2574, %v2561
    %v2578 = vmul.f32 %v2574, %v2562
    %v2579 = vadd.f32 %v2534, %v2575
    %v2580 = vadd.f32 %v2535, %v2576
    %v2581 = vadd.f32 %v2536, %v2577
    %v2582 = vadd.f32 %v2537, %v2578
    %s2583 = sld [smem:[#allocation3 + $0x139]]
    %v2584 = vstv %s2583
    %v2585 = vmul.f32 %v2584, %v2559
    %v2586 = vmul.f32 %v2584, %v2560
    %v2587 = vmul.f32 %v2584, %v2561
    %v2588 = vmul.f32 %v2584, %v2562
    %v2589 = vadd.f32 %v2544, %v2585
    %v2590 = vadd.f32 %v2545, %v2586
    %v2591 = vadd.f32 %v2546, %v2587
    %v2592 = vadd.f32 %v2547, %v2588
    %s2593 = sld [smem:[#allocation3 + $0x14d]]
    %v2594 = vstv %s2593
    %v2595 = vmul.f32 %v2594, %v2559
    %v2596 = vmul.f32 %v2594, %v2560
    %v2597 = vmul.f32 %v2594, %v2561
    %v2598 = vmul.f32 %v2594, %v2562
    %v2599 = vadd.f32 %v2554, %v2595
    %v2600 = vadd.f32 %v2555, %v2596
    %v2601 = vadd.f32 %v2556, %v2597
    %v2602 = vadd.f32 %v2557, %v2598
    %s2603 = scalar_lea.vmem [#allocation5], 64
    %2604 = vst [vmem:[%s2603 - $0x2] sm:$0xfc] %v2569
    %2605 = vst [vmem:[%s2603 + $0x6] sm:$0x3] %v2570
    %2606 = vst [vmem:[%s2603 + $0x5e] sm:$0xfc] %v2571
    %2607 = vst [vmem:[%s2603 + $0x66] sm:$0x3] %v2572
    %s2608 = scalar_lea.vmem [#allocation5], 72
    %2609 = vst [vmem:[%s2608 - $0x2] sm:$0xfc] %v2579
    %2610 = vst [vmem:[%s2608 + $0x6] sm:$0x3] %v2580
    %2611 = vst [vmem:[%s2608 + $0x5e] sm:$0xfc] %v2581
    %2612 = vst [vmem:[%s2608 + $0x66] sm:$0x3] %v2582
    %s2613 = scalar_lea.vmem [#allocation5], 80
    %2614 = vst [vmem:[%s2613 - $0x2] sm:$0xfc] %v2589
    %2615 = vst [vmem:[%s2613 + $0x6] sm:$0x3] %v2590
    %2616 = vst [vmem:[%s2613 + $0x5e] sm:$0xfc] %v2591
    %2617 = vst [vmem:[%s2613 + $0x66] sm:$0x3] %v2592
    %s2618 = scalar_lea.vmem [#allocation5], 88
    %2619 = vst [vmem:[%s2618 - $0x2] sm:$0xfc] %v2599
    %2620 = vst [vmem:[%s2618 + $0x6] sm:$0x3] %v2600
    %2621 = vst [vmem:[%s2618 + $0x5e] sm:$0xfc] %v2601
    %2622 = vst [vmem:[%s2618 + $0x66] sm:$0x3] %v2602
    // Predicated region
    $region6: #{tpu_custom_call.1} parent=1 // pred_check
      _
    $region7: #{tpu_custom_call.1} parent=1 // pred_check_branch
      %2624 = sbr.rel (0) target = $region9
    $region8: #{tpu_custom_call.1} parent=1 // pred_region
      %s2626 = ssub.s32 3072, 3072
      %2627 = vsyncadd [#allocation6], %s2626
      %s2628 = sshll.u32 [#allocation5], 4
      %s2629 = int_to_ptr.vmem [resolvable:$true] %s2628
      %2634 = dma.vmem_to_hbm [thread:$0]  %s2629, 3072, %s3, [#allocation6], 128, 128, 8
    $region9: #{tpu_custom_call.1} parent=1 // pred_fallthru
      _
    // Predicated region
    $region10: #{tpu_custom_call.1} parent=1 // pred_check
      _
    $region11: #{tpu_custom_call.1} parent=1 // pred_check_branch
      %2636 = sbr.rel (0) target = $region13
    $region12: #{tpu_custom_call.1} parent=1 // pred_region
      %2637 = dma.done [#allocation6], 3072
    $region13: #{tpu_custom_call.1} parent=1 // pred_fallthru
      _
    %2638 = vsyncpa [#allocation6], 1

</llo_original>
